<compile_context>
chip_gen: v7x
topology: tpu7x:2x2x1
jax: 0.10.0
libtpu: 0.0.40
codegen_flags: <defaults>
</compile_context>

<pallas_src>
import functools

import jax
import jax.numpy as jnp
from jax.experimental import pallas as pl
from jax.experimental.pallas import tpu as pltpu


def _bcast_spec(shape):
    nd = len(shape)
    return pl.BlockSpec(shape, lambda b, _nd=nd: (0,) * _nd)


def _vmem_limit_bytes():
    """Scoped-VMEM limit sized to the chip generation (64 MiB v7x, 128 MiB v5e/v6e)."""
    phys = 128 * 1024 * 1024
    try:
        phys = int(pltpu.get_tpu_info().vmem_capacity_bytes)
    except Exception:
        pass
    phys = max(phys, 64 * 1024 * 1024)
    return min((phys * 72) // 100, 100 * 1024 * 1024)


def _plan_block(B, N, k, dp, cin, cs, vmem_limit):
    """Pick (graphs per block Bt, rank chunk kc).

    Per-block VMEM peak is estimated generously: kNN temporaries (gram/d2/key +
    kc bf16 one-hots), f32+bf16 feature copies, the hoisted W0 projections, two
    simultaneously live chunked edge-MLP stages, skip/agg, and the double-buffered
    pipeline blocks.  Bt is the largest divisor of B fitting ~1/6 of the VMEM
    limit, capped at B//2 so the grid keeps >= 2 (ideally even) steps for v7x's
    two TensorCores.
    """
    c0, c1, c2 = cs
    cmax = max(cin, c0, c1, c2)
    budget = max(vmem_limit // 6, 2 * 1024 * 1024)

    def peak(bt, kc):
        rows = bt * N
        b = 12 * bt * N * N                                 # gram + d2 + int32 key
        b += bt * N * (6 * cin + 4 * dp)                    # fts (f32 + bf16), pts
        b += rows * 10 * c0                                 # y / zi / base (+ bf16)
        b += bt * N * 8 * c2                                # agg + skip + out
        b += kc * (2 * bt * N * N + 10 * rows * cmax)       # one-hots + MLP chunk
        b += 8 * bt * N * (cin + c2)                        # double-buffered blocks
        return b

    cap = B if B == 1 else max(1, B // 2)
    for want_even_grid in (True, False):
        for bt in range(cap, 0, -1):
            if B % bt:
                continue
            if want_even_grid and (B // bt) % 2:
                continue
            kc = k
            while kc > 1 and peak(bt, kc) > budget:
                kc -= 1
            if peak(bt, kc) > budget:
                continue
            if kc < k and kc * bt * N < 256 and bt > 1:
                continue                                    # prefer fuller rank chunks
            return bt, kc
    return 1, 1


def _edgeconv_cost(B, N, k, gram_d, cin, c0, c1, c2, pool, pts_is_fts, dp):
    flops = 2 * B * N * (N * gram_d              # kNN gram
                         + k * N * c0            # batched one-hot gather of y
                         + 2 * cin * c0          # x @ W0a, x @ W0b (once per node)
                         + k * c0 * c1 + k * c1 * c2
                         + cin * c2)             # skip
    w_bytes = 2 * (2 * cin * c0 + c0 * c1 + c1 * c2 + cin * c2) + 8 * (c0 + c1 + 2 * c2)
    in_bytes = 4 * B * N * (cin + (0 if pts_is_fts else dp))
    out_bytes = 4 * (B if pool else B * N * c2)
    return pl.CostEstimate(flops=flops, transcendentals=(B if pool else 0),
                           bytes_accessed=in_bytes + out_bytes + w_bytes)


# ------------- ParticleDynamicEdgeConv: kNN + EdgeConv(max) + skip (+pool+head) -------------
def edgeconv_kernel(*refs, k, kc, fuse_bn, pts_is_fts, pool, n_fc, flat_out):
    it = iter(refs)
    pts_ref = None if pts_is_fts else next(it)
    fts_ref = next(it)
    in_s_ref = in_b_ref = None
    if fuse_bn:
        in_s_ref = next(it)
        in_b_ref = next(it)
    w0a_ref, w0b_ref, s0_ref, b0_ref = next(it), next(it), next(it), next(it)
    w1_ref, s1_ref, b1_ref = next(it), next(it), next(it)
    w2_ref, s2_ref, b2_ref = next(it), next(it), next(it)
    wsk_ref, ssk_ref, bsk_ref = next(it), next(it), next(it)
    fc_refs = []
    ow_ref = ob_ref = None
    if pool:
        fc_refs = [(next(it), next(it)) for _ in range(n_fc)]
        ow_ref, ob_ref = next(it), next(it)
    out_ref = next(it)

    fts = fts_ref[...]                                       # [Bt, N, Cin] f32
    if fuse_bn:                                              # fused input BatchNorm
        fts = fts * in_s_ref[...] + in_b_ref[...]
    Bt, N, Cin = fts.shape
    rows = Bt * N
    C0 = w0a_ref.shape[-1]
    Cout = wsk_ref.shape[-1]
    fts_bf = fts.astype(jnp.bfloat16)

    # ---- kNN squared distances ----
    if pts_is_fts:
        # dynamic graph on previous-layer features: bf16 gram (MXU fast path).
        pts_f = fts
        gram = jnp.einsum("bnd,bmd->bnm", fts_bf, fts_bf,
                          preferred_element_type=jnp.float32)
    else:
        pts_f = pts_ref[...]                                 # [Bt, N, Dp] f32 (layer 0)
        gram = jnp.einsum("bnd,bmd->bnm", pts_f, pts_f,
                          preferred_element_type=jnp.float32)
    sq = jnp.sum(pts_f * pts_f, axis=-1)                     # [Bt, N]
    d2 = jnp.maximum(sq[:, :, None] + sq[:, None, :] - 2.0 * gram, 0.0)

    # ---- packed selection key: one cross-lane min per rank yields the one-hot.
    # Low `shift` mantissa bits of (non-negative) d2 are replaced by the column
    # index, so keys are unique per row; near-ties (< ~2^-16 relative) break to
    # the smaller column (tie-breaking already differs from torch_cluster).
    row = jax.lax.broadcasted_iota(jnp.int32, (Bt, N, N), 1)
    col = jax.lax.broadcasted_iota(jnp.int32, (Bt, N, N), 2)
    shift = max(1, (N - 1).bit_length())
    key = ((pltpu.bitcast(d2, jnp.int32) >> shift) << shift) | col
    int_big = jnp.int32(0x7F800000)                          # > any finite packed key
    key = jnp.where(row == col, int_big, key)                # loop=False (no self edges)

    # ---- W0 projections, computed ONCE per node (hoisted out of the rank loop).
    #   [x_i, x_j - x_i] @ W0 = x_i@W0a + x_j@W0b - x_i@W0b = y_j + (zi - y_i)
    fts2 = fts_bf.reshape(rows, Cin)
    zi = jnp.dot(fts2, w0a_ref[...], preferred_element_type=jnp.float32)
    y = jnp.dot(fts2, w0b_ref[...], preferred_element_type=jnp.float32)
    y_bf = y.astype(jnp.bfloat16)            # rounded once: used for BOTH y_j and y_i
    base = (zi - y_bf.astype(jnp.float32)).reshape(Bt, N, C0)
    y_g = y_bf.reshape(Bt, N, C0)

    s0, b0 = s0_ref[...], b0_ref[...]
    s1, b1 = s1_ref[...], b1_ref[...]
    s2, b2 = s2_ref[...], b2_ref[...]
    w1, w2 = w1_ref[...], w2_ref[...]

    # ---- edge MLP over rank chunks: one tall bf16 matmul chain per chunk,
    # running max so only `kc` ranks of activations are live at once.
    agg = None
    for start in range(0, k, kc):
        nranks = min(kc, k - start)
        sels = []
        for _ in range(nranks):
            kmin = jnp.min(key, axis=-1, keepdims=True)      # single reduce per rank
            sel = key == kmin                                # exactly one hit per row
            sels.append(sel.astype(jnp.bfloat16))
            key = jnp.where(sel, int_big, key)               # exclude for later ranks
        onehot = jnp.concatenate(sels, axis=1)               # [Bt, nranks*N, N] bf16
        yj = jnp.einsum("bij,bjc->bic", onehot, y_g,
                        preferred_element_type=jnp.float32)  # batched gather (exact)
        z = yj.reshape(Bt, nranks, N, C0) + base[:, None, :, :]
        z = jnp.maximum(z * s0 + b0, 0.0)
        z = jnp.dot(z.reshape(Bt * nranks * N, C0).astype(jnp.bfloat16), w1,
                    preferred_element_type=jnp.float32)
        z = jnp.maximum(z * s1 + b1, 0.0)
        z = jnp.dot(z.astype(jnp.bfloat16), w2, preferred_element_type=jnp.float32)
        z = jnp.maximum(z * s2 + b2, 0.0)                    # [Bt*nranks*N, Cout]
        zmax = jnp.max(z.reshape(Bt, nranks, N, Cout), axis=1)
        agg = zmax if agg is None else jnp.maximum(agg, zmax)   # aggr='max'

    skip = (jnp.dot(fts2, wsk_ref[...], preferred_element_type=jnp.float32)
            * ssk_ref[...] + bsk_ref[...]).reshape(Bt, N, Cout)
    out = jnp.maximum(agg + skip, 0.0)                       # [Bt, N, Cout]

    if pool:
        # fused global_mean_pool + FC head: only [Bt, 1] leaves the kernel.
        x = jnp.sum(out, axis=1) * jnp.float32(1.0 / N)      # [Bt, Cout]
        for wf_ref, bf_ref in fc_refs:                       # Dropout = identity (eval)
            x = jnp.maximum(
                jnp.dot(x.astype(jnp.bfloat16), wf_ref[...],
                        preferred_element_type=jnp.float32) + bf_ref[...], 0.0)
        logit = jnp.dot(x.astype(jnp.bfloat16), ow_ref[...],
                        preferred_element_type=jnp.float32) + ob_ref[...]
        out_ref[...] = jax.nn.sigmoid(logit).reshape(Bt, 1, 1)
    elif flat_out:
        out_ref[...] = out.reshape(Bt, N * Cout)             # lane-dense store
    else:
        out_ref[...] = out


def dynamic_edge_conv(pts, fts, p, k, *, in_bn=None, head=None):
    """One ParticleDynamicEdgeConv layer.

    pts=None means the kNN graph is built on `fts` itself (layers > 0) so the
    tensor is DMA'd only once.  head=(fcs, out_w, out_b) fuses global mean pool
    plus the FC head into this kernel (used for the last layer).
    """
    B, N, Cin = fts.shape
    pts_is_fts = pts is None or pts is fts
    dp = 0 if pts_is_fts else pts.shape[-1]
    c0 = p["w0a"].shape[1]
    c1 = p["w1"].shape[1]
    Cout = p["wsk"].shape[1]
    if k >= N:
        raise ValueError("k must be < nodes-per-graph (loop=False kNN)")
    pool = head is not None

    vmem_limit = _vmem_limit_bytes()
    Bt, kc = _plan_block(B, N, k, dp, Cin, (c0, c1, Cout), vmem_limit)

    names = ["w0a", "w0b", "s0", "b0", "w1", "s1", "b1",
             "w2", "s2", "b2", "wsk", "ssk", "bsk"]
    bf16_names = {"w0a", "w0b", "w1", "w2", "wsk"}
    weights = [p[n].astype(jnp.bfloat16) if n in bf16_names else p[n] for n in names]

    args, in_specs = [], []
    if not pts_is_fts:
        args.append(pts)
        in_specs.append(pl.BlockSpec((Bt, N, dp), lambda b: (b, 0, 0)))
    args.append(fts)
    in_specs.append(pl.BlockSpec((Bt, N, Cin), lambda b: (b, 0, 0)))
    if in_bn is not None:
        args += list(in_bn)
        in_specs += [_bcast_spec(a.shape) for a in in_bn]
    args += weights
    in_specs += [_bcast_spec(w.shape) for w in weights]

    n_fc = 0
    if pool:
        fcs, out_w, out_b = head
        n_fc = len(fcs)
        head_args = []
        for w, b in fcs:
            head_args += [w.astype(jnp.bfloat16), b]
        head_args += [out_w.astype(jnp.bfloat16), out_b]
        args += head_args
        in_specs += [_bcast_spec(a.shape) for a in head_args]

    flat_out = False
    if pool:
        out_shape = jax.ShapeDtypeStruct((B, 1, 1), jnp.float32)
        out_spec = pl.BlockSpec((Bt, 1, 1), lambda b: (b, 0, 0))
    else:
        flat_out = (N * Cout) % 128 == 0 and (Bt % 8 == 0 or Bt == B)
        if flat_out:
            out_shape = jax.ShapeDtypeStruct((B, N * Cout), jnp.float32)
            out_spec = pl.BlockSpec((Bt, N * Cout), lambda b: (b, 0))
        else:
            out_shape = jax.ShapeDtypeStruct((B, N, Cout), jnp.float32)
            out_spec = pl.BlockSpec((Bt, N, Cout), lambda b: (b, 0, 0))

    gram_d = Cin if pts_is_fts else dp
    res = pl.pallas_call(
        functools.partial(edgeconv_kernel, k=k, kc=kc, fuse_bn=in_bn is not None,
                          pts_is_fts=pts_is_fts, pool=pool, n_fc=n_fc,
                          flat_out=flat_out),
        out_shape=out_shape,
        grid=(B // Bt,),
        in_specs=in_specs,
        out_specs=out_spec,
        compiler_params=pltpu.CompilerParams(
            dimension_semantics=("parallel",),
            vmem_limit_bytes=vmem_limit),
        cost_estimate=_edgeconv_cost(B, N, k, gram_d, Cin, c0, c1, Cout,
                                     pool, pts_is_fts, dp),
    )(*args)

    if pool:
        return res.reshape(B, 1)
    if flat_out:
        return res.reshape(B, N, Cout)
    return res


# --------------------------- parameters (deterministic, synthetic) ---------------------------
def _bn_fold(key, c, eps=1e-5):
    k1, k2, k3, k4 = jax.random.split(key, 4)
    gamma = 1.0 + 0.1 * jax.random.normal(k1, (c,), jnp.float32)
    beta = 0.1 * jax.random.normal(k2, (c,), jnp.float32)
    mean = 0.1 * jax.random.normal(k3, (c,), jnp.float32)
    var = 1.0 + 0.1 * jnp.abs(jax.random.normal(k4, (c,), jnp.float32))
    scale = gamma / jnp.sqrt(var + eps)
    shift = beta - mean * scale
    return scale.reshape(1, c), shift.reshape(1, c)


def _linear_w(key, cin, cout):
    return jax.random.normal(key, (cin, cout), jnp.float32) / jnp.sqrt(jnp.float32(cin))


def init_params(key, settings):
    keys = iter(jax.random.split(key, 128))
    nk = lambda: next(keys)
    F = settings["input_features"]
    in_scale, in_shift = _bn_fold(nk(), F)
    params = {
        "in_scale": in_scale.reshape(1, 1, F),
        "in_shift": in_shift.reshape(1, 1, F),
        "convs": [],
    }
    cin = F
    for _, (c0, c1, c2) in settings["conv_params"]:
        w0 = _linear_w(nk(), 2 * cin, c0)                 # Linear(2*Cin, c0, bias=False)
        s0, b0 = _bn_fold(nk(), c0)
        w1 = _linear_w(nk(), c0, c1)
        s1, b1 = _bn_fold(nk(), c1)
        w2 = _linear_w(nk(), c1, c2)
        s2, b2 = _bn_fold(nk(), c2)
        wsk = _linear_w(nk(), cin, c2)                    # skip_mlp Linear(bias=False)+BN
        ssk, bsk = _bn_fold(nk(), c2)
        params["convs"].append(dict(
            w0a=w0[:cin], w0b=w0[cin:], s0=s0, b0=b0,
            w1=w1, s1=s1, b1=b1, w2=w2, s2=s2, b2=b2,
            wsk=wsk, ssk=ssk, bsk=bsk))
        cin = c2
    fcs = []
    for _, units in settings["fc_params"]:
        w = _linear_w(nk(), cin, units)
        b = 0.1 * jax.random.normal(nk(), (1, units), jnp.float32)
        fcs.append((w, b))
        cin = units
    params["fcs"] = fcs
    params["out_w"] = _linear_w(nk(), cin, 1)
    params["out_b"] = 0.1 * jax.random.normal(nk(), (1, 1), jnp.float32)
    return params


def particle_net_forward(x, pos, params, settings):
    n_conv = len(settings["conv_params"])
    assert n_conv >= 1, "ParticleNet needs at least one EdgeConv layer"
    fts = x
    for li, ((K, _), layer_p) in enumerate(zip(settings["conv_params"], params["convs"])):
        in_bn = (params["in_scale"], params["in_shift"]) if li == 0 else None
        last = li == n_conv - 1
        head = (params["fcs"], params["out_w"], params["out_b"]) if last else None
        res = dynamic_edge_conv(pos if li == 0 else None, fts, layer_p, K,
                                in_bn=in_bn, head=head)
        if last:
            return res                                    # [B, 1] sigmoid scores
        fts = res                                         # dynamic graph: next kNN on new feats
    return None


if __name__ == "__main__":
    B, N = 16, 16             # 16 graphs, 16 nodes each
    F_IN, POS_D = 4, 3
    settings = {
        "input_features": F_IN,
        # (k, channels); mixes aligned and unaligned Cout to exercise both output paths
        "conv_params": [(3, (8, 8, 8)), (3, (12, 12, 12)), (4, (16, 16, 16))],
        "fc_params": [(0.1, 32)],                              # (dropout, units)
    }
    key = jax.random.PRNGKey(0)
    kx, kp, kw = jax.random.split(key, 3)
    x = jax.random.normal(kx, (B, N, F_IN), jnp.float32)      # batch.x
    pos = jax.random.normal(kp, (B, N, POS_D), jnp.float32)   # batch.pos
    params = init_params(kw, settings)

    out = particle_net_forward(x, pos, params, settings)
    out = jax.block_until_ready(out)
    assert out.shape == (B, 1)
    assert bool(jnp.all(jnp.isfinite(out)))
    assert bool(jnp.all((out >= 0.0) & (out <= 1.0)))
    print("KERNEL_OK")
</pallas_src>

<mosaic_0001>
module attributes {stable_mosaic.version = 11 : i64} {
  func.func @edgeconv_kernel(%arg0: i32, %arg1: memref<8x16x3xf32, #tpu.memory_space<vmem>>, %arg2: memref<8x16x4xf32, #tpu.memory_space<vmem>>, %arg3: memref<1x1x4xf32, #tpu.memory_space<vmem>>, %arg4: memref<1x1x4xf32, #tpu.memory_space<vmem>>, %arg5: memref<4x8xbf16, #tpu.memory_space<vmem>>, %arg6: memref<4x8xbf16, #tpu.memory_space<vmem>>, %arg7: memref<1x8xf32, #tpu.memory_space<vmem>>, %arg8: memref<1x8xf32, #tpu.memory_space<vmem>>, %arg9: memref<8x8xbf16, #tpu.memory_space<vmem>>, %arg10: memref<1x8xf32, #tpu.memory_space<vmem>>, %arg11: memref<1x8xf32, #tpu.memory_space<vmem>>, %arg12: memref<8x8xbf16, #tpu.memory_space<vmem>>, %arg13: memref<1x8xf32, #tpu.memory_space<vmem>>, %arg14: memref<1x8xf32, #tpu.memory_space<vmem>>, %arg15: memref<4x8xbf16, #tpu.memory_space<vmem>>, %arg16: memref<1x8xf32, #tpu.memory_space<vmem>>, %arg17: memref<1x8xf32, #tpu.memory_space<vmem>>, %arg18: memref<8x128xf32, #tpu.memory_space<vmem>>) attributes {dimension_semantics = [#tpu.dimension_semantics<parallel>], iteration_bounds = array<i64: 2>, scalar_prefetch = 0 : i64, scratch_operands = 0 : i64, tpu.core_type = #tpu.core_type<tc>, window_params = [{transform_indices = @transform_0, window_bounds = array<i64: 8, 16, 3>}, {transform_indices = @transform_1, window_bounds = array<i64: 8, 16, 4>}, {pipeline_mode = #tpu.pipeline_mode<synchronous>, transform_indices = @transform_2, window_bounds = array<i64: 1, 1, 4>}, {pipeline_mode = #tpu.pipeline_mode<synchronous>, transform_indices = @transform_3, window_bounds = array<i64: 1, 1, 4>}, {pipeline_mode = #tpu.pipeline_mode<synchronous>, transform_indices = @transform_4, window_bounds = array<i64: 4, 8>}, {pipeline_mode = #tpu.pipeline_mode<synchronous>, transform_indices = @transform_5, window_bounds = array<i64: 4, 8>}, {pipeline_mode = #tpu.pipeline_mode<synchronous>, transform_indices = @transform_6, window_bounds = array<i64: 1, 8>}, {pipeline_mode = #tpu.pipeline_mode<synchronous>, transform_indices = @transform_7, window_bounds = array<i64: 1, 8>}, {pipeline_mode = #tpu.pipeline_mode<synchronous>, transform_indices = @transform_8, window_bounds = array<i64: 8, 8>}, {pipeline_mode = #tpu.pipeline_mode<synchronous>, transform_indices = @transform_9, window_bounds = array<i64: 1, 8>}, {pipeline_mode = #tpu.pipeline_mode<synchronous>, transform_indices = @transform_10, window_bounds = array<i64: 1, 8>}, {pipeline_mode = #tpu.pipeline_mode<synchronous>, transform_indices = @transform_11, window_bounds = array<i64: 8, 8>}, {pipeline_mode = #tpu.pipeline_mode<synchronous>, transform_indices = @transform_12, window_bounds = array<i64: 1, 8>}, {pipeline_mode = #tpu.pipeline_mode<synchronous>, transform_indices = @transform_13, window_bounds = array<i64: 1, 8>}, {pipeline_mode = #tpu.pipeline_mode<synchronous>, transform_indices = @transform_14, window_bounds = array<i64: 4, 8>}, {pipeline_mode = #tpu.pipeline_mode<synchronous>, transform_indices = @transform_15, window_bounds = array<i64: 1, 8>}, {pipeline_mode = #tpu.pipeline_mode<synchronous>, transform_indices = @transform_16, window_bounds = array<i64: 1, 8>}, {transform_indices = @transform_17, window_bounds = array<i64: 8, 128>}]} {
    %c0 = arith.constant 0 : index
    %c0_0 = arith.constant 0 : index
    %c0_1 = arith.constant 0 : index
    %0 = vector.load %arg2[%c0, %c0_0, %c0_1] : memref<8x16x4xf32, #tpu.memory_space<vmem>>, vector<8x16x4xf32>
    %c0_2 = arith.constant 0 : index
    %c0_3 = arith.constant 0 : index
    %c0_4 = arith.constant 0 : index
    %1 = vector.load %arg3[%c0_2, %c0_3, %c0_4] : memref<1x1x4xf32, #tpu.memory_space<vmem>>, vector<1x1x4xf32>
    %2 = vector.broadcast %1 : vector<1x1x4xf32> to vector<8x16x4xf32>
    %3 = arith.mulf %0, %2 : vector<8x16x4xf32>
    %c0_5 = arith.constant 0 : index
    %c0_6 = arith.constant 0 : index
    %c0_7 = arith.constant 0 : index
    %4 = vector.load %arg4[%c0_5, %c0_6, %c0_7] : memref<1x1x4xf32, #tpu.memory_space<vmem>>, vector<1x1x4xf32>
    %5 = vector.broadcast %4 : vector<1x1x4xf32> to vector<8x16x4xf32>
    %6 = arith.addf %3, %5 : vector<8x16x4xf32>
    %7 = arith.truncf %6 : vector<8x16x4xf32> to vector<8x16x4xbf16>
    %c0_8 = arith.constant 0 : index
    %c0_9 = arith.constant 0 : index
    %c0_10 = arith.constant 0 : index
    %8 = vector.load %arg1[%c0_8, %c0_9, %c0_10] : memref<8x16x3xf32, #tpu.memory_space<vmem>>, vector<8x16x3xf32>
    "tpu.trace_start"() <{level = 10 : i32, message = "bnd,bmd->bnm"}> : () -> ()
    %cst = arith.constant dense<0.000000e+00> : vector<8x16x16xf32>
    %9 = tpu.matmul %8, %8, %cst {dimension_numbers = #tpu.dot_dimension_numbers<[2], [2], [1], [1], [0, 0, 0, 1, 1, 1], [0], [0]>} : vector<8x16x3xf32>, vector<8x16x3xf32>, vector<8x16x16xf32> -> vector<8x16x16xf32>
    "tpu.trace_stop"() : () -> ()
    %10 = arith.mulf %8, %8 : vector<8x16x3xf32>
    %cst_11 = arith.constant dense<0.000000e+00> : vector<8x16xf32>
    %11 = vector.multi_reduction <add>, %10, %cst_11 [2] : vector<8x16x3xf32> to vector<8x16xf32>
    %12 = vector.shape_cast %11 : vector<8x16xf32> to vector<8x16x1xf32>
    %13 = vector.shape_cast %11 : vector<8x16xf32> to vector<8x1x16xf32>
    %14 = vector.broadcast %12 : vector<8x16x1xf32> to vector<8x16x16xf32>
    %15 = vector.broadcast %13 : vector<8x1x16xf32> to vector<8x16x16xf32>
    %16 = arith.addf %14, %15 : vector<8x16x16xf32>
    %cst_12 = arith.constant 2.000000e+00 : f32
    %17 = vector.broadcast %cst_12 : f32 to vector<8x16x16xf32>
    %18 = arith.mulf %17, %9 : vector<8x16x16xf32>
    %19 = arith.subf %16, %18 : vector<8x16x16xf32>
    %cst_13 = arith.constant 0.000000e+00 : f32
    %20 = vector.broadcast %cst_13 : f32 to vector<8x16x16xf32>
    %21 = arith.maximumf %19, %20 : vector<8x16x16xf32>
    %22 = tpu.iota {dimensions = array<i32: 1>} : vector<8x16x16xi32>
    %23 = tpu.iota {dimensions = array<i32: 2>} : vector<8x16x16xi32>
    %24 = tpu.bitcast %21 : vector<8x16x16xf32> -> vector<8x16x16xi32>
    %c4_i32 = arith.constant 4 : i32
    %25 = vector.broadcast %c4_i32 : i32 to vector<8x16x16xi32>
    %26 = arith.shrsi %24, %25 : vector<8x16x16xi32>
    %c4_i32_14 = arith.constant 4 : i32
    %27 = vector.broadcast %c4_i32_14 : i32 to vector<8x16x16xi32>
    %28 = arith.shli %26, %27 : vector<8x16x16xi32>
    %29 = arith.ori %28, %23 : vector<8x16x16xi32>
    %30 = arith.cmpi eq, %22, %23 : vector<8x16x16xi32>
    %c2139095040_i32 = arith.constant 2139095040 : i32
    %31 = vector.broadcast %c2139095040_i32 : i32 to vector<8x16x16xi32>
    %32 = arith.select %30, %31, %29 : vector<8x16x16xi1>, vector<8x16x16xi32>
    %33 = vector.shape_cast %7 : vector<8x16x4xbf16> to vector<128x4xbf16>
    %c0_15 = arith.constant 0 : index
    %c0_16 = arith.constant 0 : index
    %34 = vector.load %arg5[%c0_15, %c0_16] : memref<4x8xbf16, #tpu.memory_space<vmem>>, vector<4x8xbf16>
    %cst_17 = arith.constant dense<0.000000e+00> : vector<128x8xf32>
    %35 = tpu.matmul %33, %34, %cst_17 {dimension_numbers = #tpu.dot_dimension_numbers<[1], [0], [0], [1], [0, 0, 1, 1], [], []>} : vector<128x4xbf16>, vector<4x8xbf16>, vector<128x8xf32> -> vector<128x8xf32>
    %c0_18 = arith.constant 0 : index
    %c0_19 = arith.constant 0 : index
    %36 = vector.load %arg6[%c0_18, %c0_19] : memref<4x8xbf16, #tpu.memory_space<vmem>>, vector<4x8xbf16>
    %cst_20 = arith.constant dense<0.000000e+00> : vector<128x8xf32>
    %37 = tpu.matmul %33, %36, %cst_20 {dimension_numbers = #tpu.dot_dimension_numbers<[1], [0], [0], [1], [0, 0, 1, 1], [], []>} : vector<128x4xbf16>, vector<4x8xbf16>, vector<128x8xf32> -> vector<128x8xf32>
    %38 = arith.truncf %37 : vector<128x8xf32> to vector<128x8xbf16>
    %39 = arith.extf %38 : vector<128x8xbf16> to vector<128x8xf32>
    %40 = arith.subf %35, %39 : vector<128x8xf32>
    %41 = vector.shape_cast %40 : vector<128x8xf32> to vector<8x16x8xf32>
    %42 = vector.shape_cast %38 : vector<128x8xbf16> to vector<8x16x8xbf16>
    %c0_21 = arith.constant 0 : index
    %c0_22 = arith.constant 0 : index
    %43 = vector.load %arg7[%c0_21, %c0_22] : memref<1x8xf32, #tpu.memory_space<vmem>>, vector<1x8xf32>
    %c0_23 = arith.constant 0 : index
    %c0_24 = arith.constant 0 : index
    %44 = vector.load %arg8[%c0_23, %c0_24] : memref<1x8xf32, #tpu.memory_space<vmem>>, vector<1x8xf32>
    %c0_25 = arith.constant 0 : index
    %c0_26 = arith.constant 0 : index
    %45 = vector.load %arg10[%c0_25, %c0_26] : memref<1x8xf32, #tpu.memory_space<vmem>>, vector<1x8xf32>
    %c0_27 = arith.constant 0 : index
    %c0_28 = arith.constant 0 : index
    %46 = vector.load %arg11[%c0_27, %c0_28] : memref<1x8xf32, #tpu.memory_space<vmem>>, vector<1x8xf32>
    %c0_29 = arith.constant 0 : index
    %c0_30 = arith.constant 0 : index
    %47 = vector.load %arg13[%c0_29, %c0_30] : memref<1x8xf32, #tpu.memory_space<vmem>>, vector<1x8xf32>
    %c0_31 = arith.constant 0 : index
    %c0_32 = arith.constant 0 : index
    %48 = vector.load %arg14[%c0_31, %c0_32] : memref<1x8xf32, #tpu.memory_space<vmem>>, vector<1x8xf32>
    %c0_33 = arith.constant 0 : index
    %c0_34 = arith.constant 0 : index
    %49 = vector.load %arg9[%c0_33, %c0_34] : memref<8x8xbf16, #tpu.memory_space<vmem>>, vector<8x8xbf16>
    %c0_35 = arith.constant 0 : index
    %c0_36 = arith.constant 0 : index
    %50 = vector.load %arg12[%c0_35, %c0_36] : memref<8x8xbf16, #tpu.memory_space<vmem>>, vector<8x8xbf16>
    %cst_37 = arith.constant dense<2147483647> : vector<8x16xi32>
    %51 = vector.multi_reduction <minsi>, %32, %cst_37 [2] : vector<8x16x16xi32> to vector<8x16xi32>
    %52 = vector.shape_cast %51 : vector<8x16xi32> to vector<8x16x1xi32>
    %53 = vector.broadcast %52 : vector<8x16x1xi32> to vector<8x16x16xi32>
    %54 = arith.cmpi eq, %32, %53 : vector<8x16x16xi32>
    %55 = arith.extui %54 : vector<8x16x16xi1> to vector<8x16x16xi32>
    %56 = arith.sitofp %55 : vector<8x16x16xi32> to vector<8x16x16xf32>
    %57 = arith.truncf %56 : vector<8x16x16xf32> to vector<8x16x16xbf16>
    %c2139095040_i32_38 = arith.constant 2139095040 : i32
    %58 = vector.broadcast %c2139095040_i32_38 : i32 to vector<8x16x16xi32>
    %59 = arith.select %54, %58, %32 : vector<8x16x16xi1>, vector<8x16x16xi32>
    %cst_39 = arith.constant dense<2147483647> : vector<8x16xi32>
    %60 = vector.multi_reduction <minsi>, %59, %cst_39 [2] : vector<8x16x16xi32> to vector<8x16xi32>
    %61 = vector.shape_cast %60 : vector<8x16xi32> to vector<8x16x1xi32>
    %62 = vector.broadcast %61 : vector<8x16x1xi32> to vector<8x16x16xi32>
    %63 = arith.cmpi eq, %59, %62 : vector<8x16x16xi32>
    %64 = arith.extui %63 : vector<8x16x16xi1> to vector<8x16x16xi32>
    %65 = arith.sitofp %64 : vector<8x16x16xi32> to vector<8x16x16xf32>
    %66 = arith.truncf %65 : vector<8x16x16xf32> to vector<8x16x16xbf16>
    %c2139095040_i32_40 = arith.constant 2139095040 : i32
    %67 = vector.broadcast %c2139095040_i32_40 : i32 to vector<8x16x16xi32>
    %68 = arith.select %63, %67, %59 : vector<8x16x16xi1>, vector<8x16x16xi32>
    %cst_41 = arith.constant dense<2147483647> : vector<8x16xi32>
    %69 = vector.multi_reduction <minsi>, %68, %cst_41 [2] : vector<8x16x16xi32> to vector<8x16xi32>
    %70 = vector.shape_cast %69 : vector<8x16xi32> to vector<8x16x1xi32>
    %71 = vector.broadcast %70 : vector<8x16x1xi32> to vector<8x16x16xi32>
    %72 = arith.cmpi eq, %68, %71 : vector<8x16x16xi32>
    %73 = arith.extui %72 : vector<8x16x16xi1> to vector<8x16x16xi32>
    %74 = arith.sitofp %73 : vector<8x16x16xi32> to vector<8x16x16xf32>
    %75 = arith.truncf %74 : vector<8x16x16xf32> to vector<8x16x16xbf16>
    %76 = tpu.concatenate %57, %66, %75 in 1 : vector<8x16x16xbf16>, vector<8x16x16xbf16>, vector<8x16x16xbf16> -> vector<8x48x16xbf16>
    "tpu.trace_start"() <{level = 10 : i32, message = "bij,bjc->bic"}> : () -> ()
    %cst_42 = arith.constant dense<0.000000e+00> : vector<8x48x8xf32>
    %77 = tpu.matmul %76, %42, %cst_42 {dimension_numbers = #tpu.dot_dimension_numbers<[2], [1], [1], [2], [0, 0, 0, 1, 1, 2], [0], [0]>} : vector<8x48x16xbf16>, vector<8x16x8xbf16>, vector<8x48x8xf32> -> vector<8x48x8xf32>
    "tpu.trace_stop"() : () -> ()
    %78 = vector.shape_cast %77 : vector<8x48x8xf32> to vector<8x3x16x8xf32>
    %79 = vector.shape_cast %41 : vector<8x16x8xf32> to vector<8x1x16x8xf32>
    %80 = vector.broadcast %79 : vector<8x1x16x8xf32> to vector<8x3x16x8xf32>
    %81 = arith.addf %78, %80 : vector<8x3x16x8xf32>
    %82 = vector.shape_cast %43 : vector<1x8xf32> to vector<1x1x1x8xf32>
    %83 = vector.broadcast %82 : vector<1x1x1x8xf32> to vector<8x3x16x8xf32>
    %84 = arith.mulf %81, %83 : vector<8x3x16x8xf32>
    %85 = vector.shape_cast %44 : vector<1x8xf32> to vector<1x1x1x8xf32>
    %86 = vector.broadcast %85 : vector<1x1x1x8xf32> to vector<8x3x16x8xf32>
    %87 = arith.addf %84, %86 : vector<8x3x16x8xf32>
    %cst_43 = arith.constant 0.000000e+00 : f32
    %88 = vector.broadcast %cst_43 : f32 to vector<8x3x16x8xf32>
    %89 = arith.maximumf %87, %88 : vector<8x3x16x8xf32>
    %90 = vector.shape_cast %89 : vector<8x3x16x8xf32> to vector<384x8xf32>
    %91 = arith.truncf %90 : vector<384x8xf32> to vector<384x8xbf16>
    %cst_44 = arith.constant dense<0.000000e+00> : vector<384x8xf32>
    %92 = tpu.matmul %91, %49, %cst_44 {dimension_numbers = #tpu.dot_dimension_numbers<[1], [0], [0], [1], [0, 0, 1, 1], [], []>} : vector<384x8xbf16>, vector<8x8xbf16>, vector<384x8xf32> -> vector<384x8xf32>
    %93 = vector.broadcast %45 : vector<1x8xf32> to vector<384x8xf32>
    %94 = arith.mulf %92, %93 : vector<384x8xf32>
    %95 = vector.broadcast %46 : vector<1x8xf32> to vector<384x8xf32>
    %96 = arith.addf %94, %95 : vector<384x8xf32>
    %cst_45 = arith.constant 0.000000e+00 : f32
    %97 = vector.broadcast %cst_45 : f32 to vector<384x8xf32>
    %98 = arith.maximumf %96, %97 : vector<384x8xf32>
    %99 = arith.truncf %98 : vector<384x8xf32> to vector<384x8xbf16>
    %cst_46 = arith.constant dense<0.000000e+00> : vector<384x8xf32>
    %100 = tpu.matmul %99, %50, %cst_46 {dimension_numbers = #tpu.dot_dimension_numbers<[1], [0], [0], [1], [0, 0, 1, 1], [], []>} : vector<384x8xbf16>, vector<8x8xbf16>, vector<384x8xf32> -> vector<384x8xf32>
    %101 = vector.broadcast %47 : vector<1x8xf32> to vector<384x8xf32>
    %102 = arith.mulf %100, %101 : vector<384x8xf32>
    %103 = vector.broadcast %48 : vector<1x8xf32> to vector<384x8xf32>
    %104 = arith.addf %102, %103 : vector<384x8xf32>
    %cst_47 = arith.constant 0.000000e+00 : f32
    %105 = vector.broadcast %cst_47 : f32 to vector<384x8xf32>
    %106 = arith.maximumf %104, %105 : vector<384x8xf32>
    %107 = vector.shape_cast %106 : vector<384x8xf32> to vector<8x3x16x8xf32>
    %cst_48 = arith.constant dense<0xFF800000> : vector<8x16x8xf32>
    %108 = vector.multi_reduction <maximumf>, %107, %cst_48 [1] : vector<8x3x16x8xf32> to vector<8x16x8xf32>
    %c0_49 = arith.constant 0 : index
    %c0_50 = arith.constant 0 : index
    %109 = vector.load %arg15[%c0_49, %c0_50] : memref<4x8xbf16, #tpu.memory_space<vmem>>, vector<4x8xbf16>
    %cst_51 = arith.constant dense<0.000000e+00> : vector<128x8xf32>
    %110 = tpu.matmul %33, %109, %cst_51 {dimension_numbers = #tpu.dot_dimension_numbers<[1], [0], [0], [1], [0, 0, 1, 1], [], []>} : vector<128x4xbf16>, vector<4x8xbf16>, vector<128x8xf32> -> vector<128x8xf32>
    %c0_52 = arith.constant 0 : index
    %c0_53 = arith.constant 0 : index
    %111 = vector.load %arg16[%c0_52, %c0_53] : memref<1x8xf32, #tpu.memory_space<vmem>>, vector<1x8xf32>
    %112 = vector.broadcast %111 : vector<1x8xf32> to vector<128x8xf32>
    %113 = arith.mulf %110, %112 : vector<128x8xf32>
    %c0_54 = arith.constant 0 : index
    %c0_55 = arith.constant 0 : index
    %114 = vector.load %arg17[%c0_54, %c0_55] : memref<1x8xf32, #tpu.memory_space<vmem>>, vector<1x8xf32>
    %115 = vector.broadcast %114 : vector<1x8xf32> to vector<128x8xf32>
    %116 = arith.addf %113, %115 : vector<128x8xf32>
    %117 = vector.shape_cast %116 : vector<128x8xf32> to vector<8x16x8xf32>
    %118 = arith.addf %108, %117 : vector<8x16x8xf32>
    %cst_56 = arith.constant 0.000000e+00 : f32
    %119 = vector.broadcast %cst_56 : f32 to vector<8x16x8xf32>
    %120 = arith.maximumf %118, %119 : vector<8x16x8xf32>
    %121 = vector.shape_cast %120 : vector<8x16x8xf32> to vector<8x128xf32>
    %c0_57 = arith.constant 0 : index
    %c0_58 = arith.constant 0 : index
    %122 = vector.load %arg18[%c0_57, %c0_58] : memref<8x128xf32, #tpu.memory_space<vmem>>, vector<8x128xf32>
    tpu.vector_store %arg18[%c0_57, %c0_58], %121 {strides = array<i32>} : memref<8x128xf32, #tpu.memory_space<vmem>>, vector<8x128xf32>,
    return
  }
  func.func @transform_0(%arg0: i32) -> (i32, i32, i32) {
    %c0_i32 = arith.constant 0 : i32
    %c0_i32_0 = arith.constant 0 : i32
    %c0_i32_1 = arith.constant 0 : i32
    return %arg0, %c0_i32, %c0_i32_0 : i32, i32, i32
  }
  func.func @transform_1(%arg0: i32) -> (i32, i32, i32) {
    %c0_i32 = arith.constant 0 : i32
    %c0_i32_0 = arith.constant 0 : i32
    %c0_i32_1 = arith.constant 0 : i32
    return %arg0, %c0_i32, %c0_i32_0 : i32, i32, i32
  }
  func.func @transform_2(%arg0: i32) -> (i32, i32, i32) {
    %c0_i32 = arith.constant 0 : i32
    %c0_i32_0 = arith.constant 0 : i32
    %c0_i32_1 = arith.constant 0 : i32
    %c0_i32_2 = arith.constant 0 : i32
    return %c0_i32, %c0_i32_0, %c0_i32_1 : i32, i32, i32
  }
  func.func @transform_3(%arg0: i32) -> (i32, i32, i32) {
    %c0_i32 = arith.constant 0 : i32
    %c0_i32_0 = arith.constant 0 : i32
    %c0_i32_1 = arith.constant 0 : i32
    %c0_i32_2 = arith.constant 0 : i32
    return %c0_i32, %c0_i32_0, %c0_i32_1 : i32, i32, i32
  }
  func.func @transform_4(%arg0: i32) -> (i32, i32) {
    %c0_i32 = arith.constant 0 : i32
    %c0_i32_0 = arith.constant 0 : i32
    %c0_i32_1 = arith.constant 0 : i32
    return %c0_i32, %c0_i32_0 : i32, i32
  }
  func.func @transform_5(%arg0: i32) -> (i32, i32) {
    %c0_i32 = arith.constant 0 : i32
    %c0_i32_0 = arith.constant 0 : i32
    %c0_i32_1 = arith.constant 0 : i32
    return %c0_i32, %c0_i32_0 : i32, i32
  }
  func.func @transform_6(%arg0: i32) -> (i32, i32) {
    %c0_i32 = arith.constant 0 : i32
    %c0_i32_0 = arith.constant 0 : i32
    %c0_i32_1 = arith.constant 0 : i32
    return %c0_i32, %c0_i32_0 : i32, i32
  }
  func.func @transform_7(%arg0: i32) -> (i32, i32) {
    %c0_i32 = arith.constant 0 : i32
    %c0_i32_0 = arith.constant 0 : i32
    %c0_i32_1 = arith.constant 0 : i32
    return %c0_i32, %c0_i32_0 : i32, i32
  }
  func.func @transform_8(%arg0: i32) -> (i32, i32) {
    %c0_i32 = arith.constant 0 : i32
    %c0_i32_0 = arith.constant 0 : i32
    %c0_i32_1 = arith.constant 0 : i32
    return %c0_i32, %c0_i32_0 : i32, i32
  }
  func.func @transform_9(%arg0: i32) -> (i32, i32) {
    %c0_i32 = arith.constant 0 : i32
    %c0_i32_0 = arith.constant 0 : i32
    %c0_i32_1 = arith.constant 0 : i32
    return %c0_i32, %c0_i32_0 : i32, i32
  }
  func.func @transform_10(%arg0: i32) -> (i32, i32) {
    %c0_i32 = arith.constant 0 : i32
    %c0_i32_0 = arith.constant 0 : i32
    %c0_i32_1 = arith.constant 0 : i32
    return %c0_i32, %c0_i32_0 : i32, i32
  }
  func.func @transform_11(%arg0: i32) -> (i32, i32) {
    %c0_i32 = arith.constant 0 : i32
    %c0_i32_0 = arith.constant 0 : i32
    %c0_i32_1 = arith.constant 0 : i32
    return %c0_i32, %c0_i32_0 : i32, i32
  }
  func.func @transform_12(%arg0: i32) -> (i32, i32) {
    %c0_i32 = arith.constant 0 : i32
    %c0_i32_0 = arith.constant 0 : i32
    %c0_i32_1 = arith.constant 0 : i32
    return %c0_i32, %c0_i32_0 : i32, i32
  }
  func.func @transform_13(%arg0: i32) -> (i32, i32) {
    %c0_i32 = arith.constant 0 : i32
    %c0_i32_0 = arith.constant 0 : i32
    %c0_i32_1 = arith.constant 0 : i32
    return %c0_i32, %c0_i32_0 : i32, i32
  }
  func.func @transform_14(%arg0: i32) -> (i32, i32) {
    %c0_i32 = arith.constant 0 : i32
    %c0_i32_0 = arith.constant 0 : i32
    %c0_i32_1 = arith.constant 0 : i32
    return %c0_i32, %c0_i32_0 : i32, i32
  }
  func.func @transform_15(%arg0: i32) -> (i32, i32) {
    %c0_i32 = arith.constant 0 : i32
    %c0_i32_0 = arith.constant 0 : i32
    %c0_i32_1 = arith.constant 0 : i32
    return %c0_i32, %c0_i32_0 : i32, i32
  }
  func.func @transform_16(%arg0: i32) -> (i32, i32) {
    %c0_i32 = arith.constant 0 : i32
    %c0_i32_0 = arith.constant 0 : i32
    %c0_i32_1 = arith.constant 0 : i32
    return %c0_i32, %c0_i32_0 : i32, i32
  }
  func.func @transform_17(%arg0: i32) -> (i32, i32) {
    %c0_i32 = arith.constant 0 : i32
    %c0_i32_0 = arith.constant 0 : i32
    return %arg0, %c0_i32 : i32, i32
  }
}

</mosaic_0001>

<llo_original>
// kernel: tpu_custom_call.1
$region0: #{tpu_custom_call.1}
  #allocation0 [shape = 'u32[]', space=smem, size = 0x4, offset = 0x4, fixed_abs, tag = 'smem constant byte address 0x4 - core index']
  #allocation1 [shape = 'u32[144,128]{1,0:T(1,128)}', space=vmem, size = 0x12000, scoped, tag = 'internal scratch']
  %s0 = inlined_call_operand.hbm [shape: f32[16,16,3], index: 0, kind: input, shape index: {}]
  %s1 = inlined_call_operand.hbm [shape: f32[16,16,4], index: 1, kind: input, shape index: {}]
  %s2 = inlined_call_operand.hbm [shape: f32[1,1,4], index: 2, kind: input, shape index: {}]
  %s3 = inlined_call_operand.hbm [shape: f32[1,1,4], index: 3, kind: input, shape index: {}]
  %s4 = inlined_call_operand.hbm [shape: bf16[4,8], index: 4, kind: input, shape index: {}]
  %s5 = inlined_call_operand.hbm [shape: bf16[4,8], index: 5, kind: input, shape index: {}]
  %s6 = inlined_call_operand.hbm [shape: f32[1,8], index: 6, kind: input, shape index: {}]
  %s7 = inlined_call_operand.hbm [shape: f32[1,8], index: 7, kind: input, shape index: {}]
  %s8 = inlined_call_operand.hbm [shape: bf16[8,8], index: 8, kind: input, shape index: {}]
  %s9 = inlined_call_operand.hbm [shape: f32[1,8], index: 9, kind: input, shape index: {}]
  %s10 = inlined_call_operand.hbm [shape: f32[1,8], index: 10, kind: input, shape index: {}]
  %s11 = inlined_call_operand.hbm [shape: bf16[8,8], index: 11, kind: input, shape index: {}]
  %s12 = inlined_call_operand.hbm [shape: f32[1,8], index: 12, kind: input, shape index: {}]
  %s13 = inlined_call_operand.hbm [shape: f32[1,8], index: 13, kind: input, shape index: {}]
  %s14 = inlined_call_operand.hbm [shape: bf16[4,8], index: 14, kind: input, shape index: {}]
  %s15 = inlined_call_operand.hbm [shape: f32[1,8], index: 15, kind: input, shape index: {}]
  %s16 = inlined_call_operand.hbm [shape: f32[1,8], index: 16, kind: input, shape index: {}]
  %s17 = inlined_call_operand.hbm [shape: f32[16,128], index: 17, kind: output, shape index: {}]
  %s18 = sld [smem:[#allocation0]]
  $region169: #{tpu_custom_call.1} parent=0
    _
  %s20 = ssub.s32 1, %s18
  %s21 = scalar_select 0, %s20, %s18
  $region1: #{tpu_custom_call.1} parent=0
    #allocation2 [shape = 'u8[131072]{0}', space=vmem, size = 0x20000, scoped, tag = 'input window, operand 0']
    #allocation3 [shape = 's32[2]{0}', space=sflag, size = 0x8, scoped, tag = 'scoped memory for tpu_custom_call.1']
    #allocation4 [shape = 's32[2]{0}', space=sflag, size = 0x8, scoped, tag = 'scoped memory for tpu_custom_call.1']
    #allocation5 [shape = 'u8[131072]{0}', space=vmem, size = 0x20000, scoped, tag = 'input window, operand 1']
    #allocation6 [shape = 's32[2]{0}', space=sflag, size = 0x8, scoped, tag = 'scoped memory for tpu_custom_call.1']
    #allocation7 [shape = 'u8[512]{0}', space=vmem, size = 0x400, scoped, tag = 'input window, operand 2, single buffered']
    #allocation8 [shape = 'u8[512]{0}', space=vmem, size = 0x400, scoped, tag = 'input window, operand 3, single buffered']
    #allocation9 [shape = 's32[1]{0}', space=sflag, size = 0x4, scoped, tag = 'scoped memory for tpu_custom_call.1']
    #allocation10 [shape = 'u8[1024]{0}', space=vmem, size = 0x400, scoped, tag = 'input window, operand 4, single buffered']
    #allocation11 [shape = 'u8[1024]{0}', space=vmem, size = 0x400, scoped, tag = 'input window, operand 5, single buffered']
    #allocation12 [shape = 's32[1]{0}', space=sflag, size = 0x4, scoped, tag = 'scoped memory for tpu_custom_call.1']
    #allocation13 [shape = 'u8[512]{0}', space=vmem, size = 0x400, scoped, tag = 'input window, operand 6, single buffered']
    #allocation14 [shape = 'u8[512]{0}', space=vmem, size = 0x400, scoped, tag = 'input window, operand 7, single buffered']
    #allocation15 [shape = 's32[1]{0}', space=sflag, size = 0x4, scoped, tag = 'scoped memory for tpu_custom_call.1']
    #allocation16 [shape = 'u8[2048]{0}', space=vmem, size = 0x800, scoped, tag = 'input window, operand 8, single buffered']
    #allocation17 [shape = 'u8[512]{0}', space=vmem, size = 0x400, scoped, tag = 'input window, operand 9, single buffered']
    #allocation18 [shape = 's32[1]{0}', space=sflag, size = 0x4, scoped, tag = 'scoped memory for tpu_custom_call.1']
    #allocation19 [shape = 'u8[512]{0}', space=vmem, size = 0x400, scoped, tag = 'input window, operand 10, single buffered']
    #allocation20 [shape = 'u8[2048]{0}', space=vmem, size = 0x800, scoped, tag = 'input window, operand 11, single buffered']
    #allocation21 [shape = 's32[1]{0}', space=sflag, size = 0x4, scoped, tag = 'scoped memory for tpu_custom_call.1']
    #allocation22 [shape = 'u8[512]{0}', space=vmem, size = 0x400, scoped, tag = 'input window, operand 12, single buffered']
    #allocation23 [shape = 'u8[512]{0}', space=vmem, size = 0x400, scoped, tag = 'input window, operand 13, single buffered']
    #allocation24 [shape = 's32[1]{0}', space=sflag, size = 0x4, scoped, tag = 'scoped memory for tpu_custom_call.1']
    #allocation25 [shape = 'u8[1024]{0}', space=vmem, size = 0x400, scoped, tag = 'input window, operand 14, single buffered']
    #allocation26 [shape = 'u8[512]{0}', space=vmem, size = 0x400, scoped, tag = 'input window, operand 15, single buffered']
    #allocation27 [shape = 's32[1]{0}', space=sflag, size = 0x4, scoped, tag = 'scoped memory for tpu_custom_call.1']
    #allocation28 [shape = 'u8[512]{0}', space=vmem, size = 0x400, scoped, tag = 'input window, operand 16, single buffered']
    #allocation29 [shape = 'u8[8192]{0}', space=vmem, size = 0x2000, scoped, tag = 'output window, operand 0']
    %22 = vsyncpa [#allocation3], 0
    %s23 = scalar_lea.sflag [#allocation3], 1
    %24 = vsyncpa %s23, 0
    %25 = vsyncpa [#allocation6], 0
    %s26 = scalar_lea.sflag [#allocation6], 1
    %27 = vsyncpa %s26, 0
    %28 = vsyncpa [#allocation9], 0
    %29 = vsyncpa [#allocation12], 0
    %30 = vsyncpa [#allocation15], 0
    %31 = vsyncpa [#allocation18], 0
    %32 = vsyncpa [#allocation21], 0
    %33 = vsyncpa [#allocation24], 0
    %34 = vsyncpa [#allocation27], 0
    %35 = vsyncpa [#allocation4], 0
    %s36 = scalar_lea.sflag [#allocation4], 1
    %37 = vsyncpa %s36, 0
    loop: start=0, step=1, limit=4
    $region2: #{tpu_custom_call.1} parent=1 // loop_pre_header
      _
    $region3: #{tpu_custom_call.1} parent=1 // loop_header
      %s39 = sphi 0, %s43
      %p40 = scmp.ge.s32.totalorder %s39, 4
      %s49 = sphi 0, %s51
      %s52 = sphi 0, %s49
      %s53 = sphi 0, %s52
      %s69 = sphi 0, %s53
      %s75 = sphi 0, %s77
      %s78 = sphi 0, %s75
      %s79 = sphi 0, %s78
      %s95 = sphi 0, %s79
      %s99 = sphi 0, %s99
      %s101 = sphi 0, %s99
      %s102 = sphi 0, %s101
      %s116 = sphi 0, %s102
      %s120 = sphi 0, %s120
      %s122 = sphi 0, %s120
      %s123 = sphi 0, %s122
      %s137 = sphi 0, %s123
      %s141 = sphi 0, %s141
      %s143 = sphi 0, %s141
      %s144 = sphi 0, %s143
      %s158 = sphi 0, %s144
      %s162 = sphi 0, %s162
      %s164 = sphi 0, %s162
      %s165 = sphi 0, %s164
      %s179 = sphi 0, %s165
      %s183 = sphi 0, %s183
      %s185 = sphi 0, %s183
      %s186 = sphi 0, %s185
      %s200 = sphi 0, %s186
      %s204 = sphi 0, %s204
      %s206 = sphi 0, %s204
      %s207 = sphi 0, %s206
      %s221 = sphi 0, %s207
      %s225 = sphi 0, %s225
      %s227 = sphi 0, %s225
      %s228 = sphi 0, %s227
      %s242 = sphi 0, %s228
      %s246 = sphi 0, %s246
      %s248 = sphi 0, %s246
      %s249 = sphi 0, %s248
      %s263 = sphi 0, %s249
      %s267 = sphi 0, %s267
      %s269 = sphi 0, %s267
      %s270 = sphi 0, %s269
      %s284 = sphi 0, %s270
      %s288 = sphi 0, %s288
      %s290 = sphi 0, %s288
      %s291 = sphi 0, %s290
      %s305 = sphi 0, %s291
      %s309 = sphi 0, %s309
      %s311 = sphi 0, %s309
      %s312 = sphi 0, %s311
      %s326 = sphi 0, %s312
      %s330 = sphi 0, %s330
      %s332 = sphi 0, %s330
      %s333 = sphi 0, %s332
      %s347 = sphi 0, %s333
      %s351 = sphi 0, %s351
      %s353 = sphi 0, %s351
      %s354 = sphi 0, %s353
      %s368 = sphi 0, %s354
      %s372 = sphi 0, %s372
      %s374 = sphi 0, %s372
      %s375 = sphi 0, %s374
      %s389 = sphi 0, %s375
      %s393 = sphi 0, %s393
      %s395 = sphi 0, %s393
      %s396 = sphi 0, %s395
      %s410 = sphi 0, %s396
      %s416 = sphi 0, %s418
      %s419 = sphi 0, %s416
      %s420 = sphi 0, %s419
      %s436 = sphi 0, %s420
    $region4: #{tpu_custom_call.1} parent=1 // loop_header_branch
      %42 = sbr.rel (%p40) target = $region8
    $region5: #{tpu_custom_call.1} parent=1 // loop_body
      %s44 = ssub.s32 %s39, 1
      %s45 = ssub.s32 %s39, 2
      %s46 = sadd.s32 %s39, 1
      %s47 = ssub.s32 %s39, %s46
      %p48 = scmp.eq.s32.totalorder %s47, 0
      %s50 = sadd.s32 %s49, 1
      %s51 = scalar_select %p48, %s49, %s50
      %p54 = pneg %p48
      %p55 = scmp.eq.s32.totalorder %s39, 1
      %p56 = por %p54, %p55
      %p57 = scmp.ne.s32.totalorder %s49, %s52
      %p58 = scmp.eq.s32.totalorder %s39, 0
      %p59 = por %p57, %p58
      %p60 = scmp.ne.s32.totalorder %s49, %s52
      %p61 = scmp.eq.s32.totalorder %s44, 1
      %p62 = por %p60, %p61
      %p63 = scmp.ne.s32.totalorder %s52, %s53
      %p64 = scmp.eq.s32.totalorder %s44, 0
      %p65 = por %p63, %p64
      %p66 = scmp.ne.s32.totalorder %s52, %s53
      %p67 = scmp.eq.s32.totalorder %s45, 1
      %p68 = por %p66, %p67
      %p70 = scmp.ne.s32.totalorder %s53, %s69
      %p71 = scmp.eq.s32.totalorder %s45, 0
      %p72 = por %p70, %p71
      %s73 = ssub.s32 %s39, %s46
      %p74 = scmp.eq.s32.totalorder %s73, 0
      %s76 = sadd.s32 %s75, 1
      %s77 = scalar_select %p74, %s75, %s76
      %p80 = pneg %p74
      %p81 = scmp.eq.s32.totalorder %s39, 1
      %p82 = por %p80, %p81
      %p83 = scmp.ne.s32.totalorder %s75, %s78
      %p84 = scmp.eq.s32.totalorder %s39, 0
      %p85 = por %p83, %p84
      %p86 = scmp.ne.s32.totalorder %s75, %s78
      %p87 = scmp.eq.s32.totalorder %s44, 1
      %p88 = por %p86, %p87
      %p89 = scmp.ne.s32.totalorder %s78, %s79
      %p90 = scmp.eq.s32.totalorder %s44, 0
      %p91 = por %p89, %p90
      %p92 = scmp.ne.s32.totalorder %s78, %s79
      %p93 = scmp.eq.s32.totalorder %s45, 1
      %p94 = por %p92, %p93
      %p96 = scmp.ne.s32.totalorder %s79, %s95
      %p97 = scmp.eq.s32.totalorder %s45, 0
      %p98 = por %p96, %p97
      %s100 = sadd.s32 %s99, 1
      %p103 = scmp.eq.s32.totalorder %s39, 1
      %p104 = scmp.ne.s32.totalorder %s99, %s101
      %p105 = scmp.eq.s32.totalorder %s39, 0
      %p106 = por %p104, %p105
      %p107 = scmp.ne.s32.totalorder %s99, %s101
      %p108 = scmp.eq.s32.totalorder %s44, 1
      %p109 = por %p107, %p108
      %p110 = scmp.ne.s32.totalorder %s101, %s102
      %p111 = scmp.eq.s32.totalorder %s44, 0
      %p112 = por %p110, %p111
      %p113 = scmp.ne.s32.totalorder %s101, %s102
      %p114 = scmp.eq.s32.totalorder %s45, 1
      %p115 = por %p113, %p114
      %p117 = scmp.ne.s32.totalorder %s102, %s116
      %p118 = scmp.eq.s32.totalorder %s45, 0
      %p119 = por %p117, %p118
      %s121 = sadd.s32 %s120, 1
      %p124 = scmp.eq.s32.totalorder %s39, 1
      %p125 = scmp.ne.s32.totalorder %s120, %s122
      %p126 = scmp.eq.s32.totalorder %s39, 0
      %p127 = por %p125, %p126
      %p128 = scmp.ne.s32.totalorder %s120, %s122
      %p129 = scmp.eq.s32.totalorder %s44, 1
      %p130 = por %p128, %p129
      %p131 = scmp.ne.s32.totalorder %s122, %s123
      %p132 = scmp.eq.s32.totalorder %s44, 0
      %p133 = por %p131, %p132
      %p134 = scmp.ne.s32.totalorder %s122, %s123
      %p135 = scmp.eq.s32.totalorder %s45, 1
      %p136 = por %p134, %p135
      %p138 = scmp.ne.s32.totalorder %s123, %s137
      %p139 = scmp.eq.s32.totalorder %s45, 0
      %p140 = por %p138, %p139
      %s142 = sadd.s32 %s141, 1
      %p145 = scmp.eq.s32.totalorder %s39, 1
      %p146 = scmp.ne.s32.totalorder %s141, %s143
      %p147 = scmp.eq.s32.totalorder %s39, 0
      %p148 = por %p146, %p147
      %p149 = scmp.ne.s32.totalorder %s141, %s143
      %p150 = scmp.eq.s32.totalorder %s44, 1
      %p151 = por %p149, %p150
      %p152 = scmp.ne.s32.totalorder %s143, %s144
      %p153 = scmp.eq.s32.totalorder %s44, 0
      %p154 = por %p152, %p153
      %p155 = scmp.ne.s32.totalorder %s143, %s144
      %p156 = scmp.eq.s32.totalorder %s45, 1
      %p157 = por %p155, %p156
      %p159 = scmp.ne.s32.totalorder %s144, %s158
      %p160 = scmp.eq.s32.totalorder %s45, 0
      %p161 = por %p159, %p160
      %s163 = sadd.s32 %s162, 1
      %p166 = scmp.eq.s32.totalorder %s39, 1
      %p167 = scmp.ne.s32.totalorder %s162, %s164
      %p168 = scmp.eq.s32.totalorder %s39, 0
      %p169 = por %p167, %p168
      %p170 = scmp.ne.s32.totalorder %s162, %s164
      %p171 = scmp.eq.s32.totalorder %s44, 1
      %p172 = por %p170, %p171
      %p173 = scmp.ne.s32.totalorder %s164, %s165
      %p174 = scmp.eq.s32.totalorder %s44, 0
      %p175 = por %p173, %p174
      %p176 = scmp.ne.s32.totalorder %s164, %s165
      %p177 = scmp.eq.s32.totalorder %s45, 1
      %p178 = por %p176, %p177
      %p180 = scmp.ne.s32.totalorder %s165, %s179
      %p181 = scmp.eq.s32.totalorder %s45, 0
      %p182 = por %p180, %p181
      %s184 = sadd.s32 %s183, 1
      %p187 = scmp.eq.s32.totalorder %s39, 1
      %p188 = scmp.ne.s32.totalorder %s183, %s185
      %p189 = scmp.eq.s32.totalorder %s39, 0
      %p190 = por %p188, %p189
      %p191 = scmp.ne.s32.totalorder %s183, %s185
      %p192 = scmp.eq.s32.totalorder %s44, 1
      %p193 = por %p191, %p192
      %p194 = scmp.ne.s32.totalorder %s185, %s186
      %p195 = scmp.eq.s32.totalorder %s44, 0
      %p196 = por %p194, %p195
      %p197 = scmp.ne.s32.totalorder %s185, %s186
      %p198 = scmp.eq.s32.totalorder %s45, 1
      %p199 = por %p197, %p198
      %p201 = scmp.ne.s32.totalorder %s186, %s200
      %p202 = scmp.eq.s32.totalorder %s45, 0
      %p203 = por %p201, %p202
      %s205 = sadd.s32 %s204, 1
      %p208 = scmp.eq.s32.totalorder %s39, 1
      %p209 = scmp.ne.s32.totalorder %s204, %s206
      %p210 = scmp.eq.s32.totalorder %s39, 0
      %p211 = por %p209, %p210
      %p212 = scmp.ne.s32.totalorder %s204, %s206
      %p213 = scmp.eq.s32.totalorder %s44, 1
      %p214 = por %p212, %p213
      %p215 = scmp.ne.s32.totalorder %s206, %s207
      %p216 = scmp.eq.s32.totalorder %s44, 0
      %p217 = por %p215, %p216
      %p218 = scmp.ne.s32.totalorder %s206, %s207
      %p219 = scmp.eq.s32.totalorder %s45, 1
      %p220 = por %p218, %p219
      %p222 = scmp.ne.s32.totalorder %s207, %s221
      %p223 = scmp.eq.s32.totalorder %s45, 0
      %p224 = por %p222, %p223
      %s226 = sadd.s32 %s225, 1
      %p229 = scmp.eq.s32.totalorder %s39, 1
      %p230 = scmp.ne.s32.totalorder %s225, %s227
      %p231 = scmp.eq.s32.totalorder %s39, 0
      %p232 = por %p230, %p231
      %p233 = scmp.ne.s32.totalorder %s225, %s227
      %p234 = scmp.eq.s32.totalorder %s44, 1
      %p235 = por %p233, %p234
      %p236 = scmp.ne.s32.totalorder %s227, %s228
      %p237 = scmp.eq.s32.totalorder %s44, 0
      %p238 = por %p236, %p237
      %p239 = scmp.ne.s32.totalorder %s227, %s228
      %p240 = scmp.eq.s32.totalorder %s45, 1
      %p241 = por %p239, %p240
      %p243 = scmp.ne.s32.totalorder %s228, %s242
      %p244 = scmp.eq.s32.totalorder %s45, 0
      %p245 = por %p243, %p244
      %s247 = sadd.s32 %s246, 1
      %p250 = scmp.eq.s32.totalorder %s39, 1
      %p251 = scmp.ne.s32.totalorder %s246, %s248
      %p252 = scmp.eq.s32.totalorder %s39, 0
      %p253 = por %p251, %p252
      %p254 = scmp.ne.s32.totalorder %s246, %s248
      %p255 = scmp.eq.s32.totalorder %s44, 1
      %p256 = por %p254, %p255
      %p257 = scmp.ne.s32.totalorder %s248, %s249
      %p258 = scmp.eq.s32.totalorder %s44, 0
      %p259 = por %p257, %p258
      %p260 = scmp.ne.s32.totalorder %s248, %s249
      %p261 = scmp.eq.s32.totalorder %s45, 1
      %p262 = por %p260, %p261
      %p264 = scmp.ne.s32.totalorder %s249, %s263
      %p265 = scmp.eq.s32.totalorder %s45, 0
      %p266 = por %p264, %p265
      %s268 = sadd.s32 %s267, 1
      %p271 = scmp.eq.s32.totalorder %s39, 1
      %p272 = scmp.ne.s32.totalorder %s267, %s269
      %p273 = scmp.eq.s32.totalorder %s39, 0
      %p274 = por %p272, %p273
      %p275 = scmp.ne.s32.totalorder %s267, %s269
      %p276 = scmp.eq.s32.totalorder %s44, 1
      %p277 = por %p275, %p276
      %p278 = scmp.ne.s32.totalorder %s269, %s270
      %p279 = scmp.eq.s32.totalorder %s44, 0
      %p280 = por %p278, %p279
      %p281 = scmp.ne.s32.totalorder %s269, %s270
      %p282 = scmp.eq.s32.totalorder %s45, 1
      %p283 = por %p281, %p282
      %p285 = scmp.ne.s32.totalorder %s270, %s284
      %p286 = scmp.eq.s32.totalorder %s45, 0
      %p287 = por %p285, %p286
      %s289 = sadd.s32 %s288, 1
      %p292 = scmp.eq.s32.totalorder %s39, 1
      %p293 = scmp.ne.s32.totalorder %s288, %s290
      %p294 = scmp.eq.s32.totalorder %s39, 0
      %p295 = por %p293, %p294
      %p296 = scmp.ne.s32.totalorder %s288, %s290
      %p297 = scmp.eq.s32.totalorder %s44, 1
      %p298 = por %p296, %p297
      %p299 = scmp.ne.s32.totalorder %s290, %s291
      %p300 = scmp.eq.s32.totalorder %s44, 0
      %p301 = por %p299, %p300
      %p302 = scmp.ne.s32.totalorder %s290, %s291
      %p303 = scmp.eq.s32.totalorder %s45, 1
      %p304 = por %p302, %p303
      %p306 = scmp.ne.s32.totalorder %s291, %s305
      %p307 = scmp.eq.s32.totalorder %s45, 0
      %p308 = por %p306, %p307
      %s310 = sadd.s32 %s309, 1
      %p313 = scmp.eq.s32.totalorder %s39, 1
      %p314 = scmp.ne.s32.totalorder %s309, %s311
      %p315 = scmp.eq.s32.totalorder %s39, 0
      %p316 = por %p314, %p315
      %p317 = scmp.ne.s32.totalorder %s309, %s311
      %p318 = scmp.eq.s32.totalorder %s44, 1
      %p319 = por %p317, %p318
      %p320 = scmp.ne.s32.totalorder %s311, %s312
      %p321 = scmp.eq.s32.totalorder %s44, 0
      %p322 = por %p320, %p321
      %p323 = scmp.ne.s32.totalorder %s311, %s312
      %p324 = scmp.eq.s32.totalorder %s45, 1
      %p325 = por %p323, %p324
      %p327 = scmp.ne.s32.totalorder %s312, %s326
      %p328 = scmp.eq.s32.totalorder %s45, 0
      %p329 = por %p327, %p328
      %s331 = sadd.s32 %s330, 1
      %p334 = scmp.eq.s32.totalorder %s39, 1
      %p335 = scmp.ne.s32.totalorder %s330, %s332
      %p336 = scmp.eq.s32.totalorder %s39, 0
      %p337 = por %p335, %p336
      %p338 = scmp.ne.s32.totalorder %s330, %s332
      %p339 = scmp.eq.s32.totalorder %s44, 1
      %p340 = por %p338, %p339
      %p341 = scmp.ne.s32.totalorder %s332, %s333
      %p342 = scmp.eq.s32.totalorder %s44, 0
      %p343 = por %p341, %p342
      %p344 = scmp.ne.s32.totalorder %s332, %s333
      %p345 = scmp.eq.s32.totalorder %s45, 1
      %p346 = por %p344, %p345
      %p348 = scmp.ne.s32.totalorder %s333, %s347
      %p349 = scmp.eq.s32.totalorder %s45, 0
      %p350 = por %p348, %p349
      %s352 = sadd.s32 %s351, 1
      %p355 = scmp.eq.s32.totalorder %s39, 1
      %p356 = scmp.ne.s32.totalorder %s351, %s353
      %p357 = scmp.eq.s32.totalorder %s39, 0
      %p358 = por %p356, %p357
      %p359 = scmp.ne.s32.totalorder %s351, %s353
      %p360 = scmp.eq.s32.totalorder %s44, 1
      %p361 = por %p359, %p360
      %p362 = scmp.ne.s32.totalorder %s353, %s354
      %p363 = scmp.eq.s32.totalorder %s44, 0
      %p364 = por %p362, %p363
      %p365 = scmp.ne.s32.totalorder %s353, %s354
      %p366 = scmp.eq.s32.totalorder %s45, 1
      %p367 = por %p365, %p366
      %p369 = scmp.ne.s32.totalorder %s354, %s368
      %p370 = scmp.eq.s32.totalorder %s45, 0
      %p371 = por %p369, %p370
      %s373 = sadd.s32 %s372, 1
      %p376 = scmp.eq.s32.totalorder %s39, 1
      %p377 = scmp.ne.s32.totalorder %s372, %s374
      %p378 = scmp.eq.s32.totalorder %s39, 0
      %p379 = por %p377, %p378
      %p380 = scmp.ne.s32.totalorder %s372, %s374
      %p381 = scmp.eq.s32.totalorder %s44, 1
      %p382 = por %p380, %p381
      %p383 = scmp.ne.s32.totalorder %s374, %s375
      %p384 = scmp.eq.s32.totalorder %s44, 0
      %p385 = por %p383, %p384
      %p386 = scmp.ne.s32.totalorder %s374, %s375
      %p387 = scmp.eq.s32.totalorder %s45, 1
      %p388 = por %p386, %p387
      %p390 = scmp.ne.s32.totalorder %s375, %s389
      %p391 = scmp.eq.s32.totalorder %s45, 0
      %p392 = por %p390, %p391
      %s394 = sadd.s32 %s393, 1
      %p397 = scmp.eq.s32.totalorder %s39, 1
      %p398 = scmp.ne.s32.totalorder %s393, %s395
      %p399 = scmp.eq.s32.totalorder %s39, 0
      %p400 = por %p398, %p399
      %p401 = scmp.ne.s32.totalorder %s393, %s395
      %p402 = scmp.eq.s32.totalorder %s44, 1
      %p403 = por %p401, %p402
      %p404 = scmp.ne.s32.totalorder %s395, %s396
      %p405 = scmp.eq.s32.totalorder %s44, 0
      %p406 = por %p404, %p405
      %p407 = scmp.ne.s32.totalorder %s395, %s396
      %p408 = scmp.eq.s32.totalorder %s45, 1
      %p409 = por %p407, %p408
      %p411 = scmp.ne.s32.totalorder %s396, %s410
      %p412 = scmp.eq.s32.totalorder %s45, 0
      %p413 = por %p411, %p412
      %s414 = ssub.s32 %s39, %s46
      %p415 = scmp.eq.s32.totalorder %s414, 0
      %s417 = sadd.s32 %s416, 1
      %s418 = scalar_select %p415, %s416, %s417
      %p421 = pneg %p415
      %p422 = scmp.eq.s32.totalorder %s39, 1
      %p423 = por %p421, %p422
      %p424 = scmp.ne.s32.totalorder %s416, %s419
      %p425 = scmp.eq.s32.totalorder %s39, 0
      %p426 = por %p424, %p425
      %p427 = scmp.ne.s32.totalorder %s416, %s419
      %p428 = scmp.eq.s32.totalorder %s44, 1
      %p429 = por %p427, %p428
      %p430 = scmp.ne.s32.totalorder %s419, %s420
      %p431 = scmp.eq.s32.totalorder %s44, 0
      %p432 = por %p430, %p431
      %p433 = scmp.ne.s32.totalorder %s419, %s420
      %p434 = scmp.eq.s32.totalorder %s45, 1
      %p435 = por %p433, %p434
      %p437 = scmp.ne.s32.totalorder %s420, %s436
      %p438 = scmp.eq.s32.totalorder %s45, 0
      %p439 = por %p437, %p438
      %p440 = scmp.le.s32.totalorder 1, %s39
      %p441 = scmp.lt.s32.totalorder %s39, 3
      %p442 = pnand %p440, %p441
      %p443 = pneg %p442
      // Predicated region
      $region9: #{tpu_custom_call.1} parent=5 // pred_check
        _
      $region10: #{tpu_custom_call.1} parent=5 // pred_check_branch
        %445 = sbr.rel (%p442) target = $region12
      $region11: #{tpu_custom_call.1} parent=5 // pred_region
        %s446 = ssub.s32 %s39, 1
        // Predicated region
        $region13: #{tpu_custom_call.1} parent=11 // pred_check
          %p447 = pneg %p112
        $region14: #{tpu_custom_call.1} parent=11 // pred_check_branch
          %449 = sbr.rel (%p447) target = $region16
        $region15: #{tpu_custom_call.1} parent=11 // pred_region
          %s451 = ssub.s32 16, 16
          %452 = vsyncadd [#allocation6], %s451
          %s454 = sshll.u32 [#allocation7], 4
          %s455 = int_to_ptr.vmem [resolvable:$true] %s454
          %457 = dma.hbm_to_vmem [thread:$0]  %s2, 16, %s455, [#allocation6]
        $region16: #{tpu_custom_call.1} parent=11 // pred_fallthru
          _
        // Predicated region
        $region17: #{tpu_custom_call.1} parent=11 // pred_check
          %p458 = pneg %p133
        $region18: #{tpu_custom_call.1} parent=11 // pred_check_branch
          %460 = sbr.rel (%p458) target = $region20
        $region19: #{tpu_custom_call.1} parent=11 // pred_region
          %s462 = ssub.s32 16, 16
          %463 = vsyncadd [#allocation9], %s462
          %s465 = sshll.u32 [#allocation8], 4
          %s466 = int_to_ptr.vmem [resolvable:$true] %s465
          %468 = dma.hbm_to_vmem [thread:$0]  %s3, 16, %s466, [#allocation9]
        $region20: #{tpu_custom_call.1} parent=11 // pred_fallthru
          _
        // Predicated region
        $region21: #{tpu_custom_call.1} parent=11 // pred_check
          %p469 = pneg %p154
        $region22: #{tpu_custom_call.1} parent=11 // pred_check_branch
          %471 = sbr.rel (%p469) target = $region24
        $region23: #{tpu_custom_call.1} parent=11 // pred_region
          %s473 = ssub.s32 32, 32
          %474 = vsyncadd [#allocation9], %s473
          %s476 = sshll.u32 [#allocation10], 4
          %s477 = int_to_ptr.vmem [resolvable:$true] %s476
          %479 = dma.hbm_to_vmem [thread:$0]  %s4, 32, %s477, [#allocation9]
        $region24: #{tpu_custom_call.1} parent=11 // pred_fallthru
          _
        // Predicated region
        $region25: #{tpu_custom_call.1} parent=11 // pred_check
          %p480 = pneg %p175
        $region26: #{tpu_custom_call.1} parent=11 // pred_check_branch
          %482 = sbr.rel (%p480) target = $region28
        $region27: #{tpu_custom_call.1} parent=11 // pred_region
          %s484 = ssub.s32 32, 32
          %485 = vsyncadd [#allocation12], %s484
          %s487 = sshll.u32 [#allocation11], 4
          %s488 = int_to_ptr.vmem [resolvable:$true] %s487
          %490 = dma.hbm_to_vmem [thread:$0]  %s5, 32, %s488, [#allocation12]
        $region28: #{tpu_custom_call.1} parent=11 // pred_fallthru
          _
        // Predicated region
        $region29: #{tpu_custom_call.1} parent=11 // pred_check
          %p491 = pneg %p196
        $region30: #{tpu_custom_call.1} parent=11 // pred_check_branch
          %493 = sbr.rel (%p491) target = $region32
        $region31: #{tpu_custom_call.1} parent=11 // pred_region
          %s495 = ssub.s32 16, 16
          %496 = vsyncadd [#allocation12], %s495
          %s498 = sshll.u32 [#allocation13], 4
          %s499 = int_to_ptr.vmem [resolvable:$true] %s498
          %501 = dma.hbm_to_vmem [thread:$0]  %s6, 16, %s499, [#allocation12]
        $region32: #{tpu_custom_call.1} parent=11 // pred_fallthru
          _
        // Predicated region
        $region33: #{tpu_custom_call.1} parent=11 // pred_check
          %p502 = pneg %p217
        $region34: #{tpu_custom_call.1} parent=11 // pred_check_branch
          %504 = sbr.rel (%p502) target = $region36
        $region35: #{tpu_custom_call.1} parent=11 // pred_region
          %s506 = ssub.s32 16, 16
          %507 = vsyncadd [#allocation15], %s506
          %s509 = sshll.u32 [#allocation14], 4
          %s510 = int_to_ptr.vmem [resolvable:$true] %s509
          %512 = dma.hbm_to_vmem [thread:$0]  %s7, 16, %s510, [#allocation15]
        $region36: #{tpu_custom_call.1} parent=11 // pred_fallthru
          _
        // Predicated region
        $region37: #{tpu_custom_call.1} parent=11 // pred_check
          %p513 = pneg %p238
        $region38: #{tpu_custom_call.1} parent=11 // pred_check_branch
          %515 = sbr.rel (%p513) target = $region40
        $region39: #{tpu_custom_call.1} parent=11 // pred_region
          %s517 = ssub.s32 64, 64
          %518 = vsyncadd [#allocation15], %s517
          %s520 = sshll.u32 [#allocation16], 4
          %s521 = int_to_ptr.vmem [resolvable:$true] %s520
          %523 = dma.hbm_to_vmem [thread:$0]  %s8, 64, %s521, [#allocation15]
        $region40: #{tpu_custom_call.1} parent=11 // pred_fallthru
          _
        // Predicated region
        $region41: #{tpu_custom_call.1} parent=11 // pred_check
          %p524 = pneg %p259
        $region42: #{tpu_custom_call.1} parent=11 // pred_check_branch
          %526 = sbr.rel (%p524) target = $region44
        $region43: #{tpu_custom_call.1} parent=11 // pred_region
          %s528 = ssub.s32 16, 16
          %529 = vsyncadd [#allocation18], %s528
          %s531 = sshll.u32 [#allocation17], 4
          %s532 = int_to_ptr.vmem [resolvable:$true] %s531
          %534 = dma.hbm_to_vmem [thread:$0]  %s9, 16, %s532, [#allocation18]
        $region44: #{tpu_custom_call.1} parent=11 // pred_fallthru
          _
        // Predicated region
        $region45: #{tpu_custom_call.1} parent=11 // pred_check
          %p535 = pneg %p280
        $region46: #{tpu_custom_call.1} parent=11 // pred_check_branch
          %537 = sbr.rel (%p535) target = $region48
        $region47: #{tpu_custom_call.1} parent=11 // pred_region
          %s539 = ssub.s32 16, 16
          %540 = vsyncadd [#allocation18], %s539
          %s542 = sshll.u32 [#allocation19], 4
          %s543 = int_to_ptr.vmem [resolvable:$true] %s542
          %545 = dma.hbm_to_vmem [thread:$0]  %s10, 16, %s543, [#allocation18]
        $region48: #{tpu_custom_call.1} parent=11 // pred_fallthru
          _
        // Predicated region
        $region49: #{tpu_custom_call.1} parent=11 // pred_check
          %p546 = pneg %p301
        $region50: #{tpu_custom_call.1} parent=11 // pred_check_branch
          %548 = sbr.rel (%p546) target = $region52
        $region51: #{tpu_custom_call.1} parent=11 // pred_region
          %s550 = ssub.s32 64, 64
          %551 = vsyncadd [#allocation21], %s550
          %s553 = sshll.u32 [#allocation20], 4
          %s554 = int_to_ptr.vmem [resolvable:$true] %s553
          %556 = dma.hbm_to_vmem [thread:$0]  %s11, 64, %s554, [#allocation21]
        $region52: #{tpu_custom_call.1} parent=11 // pred_fallthru
          _
        // Predicated region
        $region53: #{tpu_custom_call.1} parent=11 // pred_check
          %p557 = pneg %p322
        $region54: #{tpu_custom_call.1} parent=11 // pred_check_branch
          %559 = sbr.rel (%p557) target = $region56
        $region55: #{tpu_custom_call.1} parent=11 // pred_region
          %s561 = ssub.s32 16, 16
          %562 = vsyncadd [#allocation21], %s561
          %s564 = sshll.u32 [#allocation22], 4
          %s565 = int_to_ptr.vmem [resolvable:$true] %s564
          %567 = dma.hbm_to_vmem [thread:$0]  %s12, 16, %s565, [#allocation21]
        $region56: #{tpu_custom_call.1} parent=11 // pred_fallthru
          _
        // Predicated region
        $region57: #{tpu_custom_call.1} parent=11 // pred_check
          %p568 = pneg %p343
        $region58: #{tpu_custom_call.1} parent=11 // pred_check_branch
          %570 = sbr.rel (%p568) target = $region60
        $region59: #{tpu_custom_call.1} parent=11 // pred_region
          %s572 = ssub.s32 16, 16
          %573 = vsyncadd [#allocation24], %s572
          %s575 = sshll.u32 [#allocation23], 4
          %s576 = int_to_ptr.vmem [resolvable:$true] %s575
          %578 = dma.hbm_to_vmem [thread:$0]  %s13, 16, %s576, [#allocation24]
        $region60: #{tpu_custom_call.1} parent=11 // pred_fallthru
          _
        // Predicated region
        $region61: #{tpu_custom_call.1} parent=11 // pred_check
          %p579 = pneg %p364
        $region62: #{tpu_custom_call.1} parent=11 // pred_check_branch
          %581 = sbr.rel (%p579) target = $region64
        $region63: #{tpu_custom_call.1} parent=11 // pred_region
          %s583 = ssub.s32 32, 32
          %584 = vsyncadd [#allocation24], %s583
          %s586 = sshll.u32 [#allocation25], 4
          %s587 = int_to_ptr.vmem [resolvable:$true] %s586
          %589 = dma.hbm_to_vmem [thread:$0]  %s14, 32, %s587, [#allocation24]
        $region64: #{tpu_custom_call.1} parent=11 // pred_fallthru
          _
        // Predicated region
        $region65: #{tpu_custom_call.1} parent=11 // pred_check
          %p590 = pneg %p385
        $region66: #{tpu_custom_call.1} parent=11 // pred_check_branch
          %592 = sbr.rel (%p590) target = $region68
        $region67: #{tpu_custom_call.1} parent=11 // pred_region
          %s594 = ssub.s32 16, 16
          %595 = vsyncadd [#allocation27], %s594
          %s597 = sshll.u32 [#allocation26], 4
          %s598 = int_to_ptr.vmem [resolvable:$true] %s597
          %600 = dma.hbm_to_vmem [thread:$0]  %s15, 16, %s598, [#allocation27]
        $region68: #{tpu_custom_call.1} parent=11 // pred_fallthru
          _
        // Predicated region
        $region69: #{tpu_custom_call.1} parent=11 // pred_check
          %p601 = pneg %p406
        $region70: #{tpu_custom_call.1} parent=11 // pred_check_branch
          %603 = sbr.rel (%p601) target = $region72
        $region71: #{tpu_custom_call.1} parent=11 // pred_region
          %s605 = ssub.s32 16, 16
          %606 = vsyncadd [#allocation27], %s605
          %s608 = sshll.u32 [#allocation28], 4
          %s609 = int_to_ptr.vmem [resolvable:$true] %s608
          %611 = dma.hbm_to_vmem [thread:$0]  %s16, 16, %s609, [#allocation27]
        $region72: #{tpu_custom_call.1} parent=11 // pred_fallthru
          _
      $region12: #{tpu_custom_call.1} parent=5 // pred_fallthru
        _
      %p612 = scmp.lt.s32.totalorder %s39, 2
      // Predicated region
      $region73: #{tpu_custom_call.1} parent=5 // pred_check
        %p613 = pneg %p612
      $region74: #{tpu_custom_call.1} parent=5 // pred_check_branch
        %615 = sbr.rel (%p613) target = $region76
      $region75: #{tpu_custom_call.1} parent=5 // pred_region
        // Predicated region
        $region77: #{tpu_custom_call.1} parent=75 // pred_check
          %p616 = pneg %p59
        $region78: #{tpu_custom_call.1} parent=75 // pred_check_branch
          %618 = sbr.rel (%p616) target = $region80
        $region79: #{tpu_custom_call.1} parent=75 // pred_region
          %s619 = sand.u32 %s49, 1
          %s620 = scalar_lea.sflag [#allocation3], %s619
          %s621 = sand.u32 %s49, 1
          %s622 = smul.addr %s621, 128
          %s623 = scalar_lea.vmem [#allocation2], %s622
          %s624 = smul.u32 8, %s39
          %s626 = ssub.s32 2048, 2048
          %627 = vsyncadd %s620, %s626
          %s628 = smul.addr %s624, 2
          %s629 = smul.addr %s628, 128
          %s630 = scalar_lea.hbm %s0, %s629
          %s631 = sshll.u32 %s623, 4
          %s632 = int_to_ptr.vmem [resolvable:$true] %s631
          %637 = dma.hbm_to_vmem [thread:$0]  %s630, 2048, %s632, %s620, 128, 128, 8
        $region80: #{tpu_custom_call.1} parent=75 // pred_fallthru
          _
        // Predicated region
        $region81: #{tpu_custom_call.1} parent=75 // pred_check
          %p638 = pneg %p85
        $region82: #{tpu_custom_call.1} parent=75 // pred_check_branch
          %640 = sbr.rel (%p638) target = $region84
        $region83: #{tpu_custom_call.1} parent=75 // pred_region
          %s641 = sand.u32 %s39, 1
          %s642 = scalar_lea.sflag [#allocation6], %s641
          %s643 = sand.u32 %s75, 1
          %s644 = smul.addr %s643, 128
          %s645 = scalar_lea.vmem [#allocation5], %s644
          %s646 = smul.u32 8, %s39
          %s648 = ssub.s32 2048, 2048
          %649 = vsyncadd %s642, %s648
          %s650 = smul.addr %s646, 2
          %s651 = smul.addr %s650, 128
          %s652 = scalar_lea.hbm %s1, %s651
          %s653 = sshll.u32 %s645, 4
          %s654 = int_to_ptr.vmem [resolvable:$true] %s653
          %659 = dma.hbm_to_vmem [thread:$0]  %s652, 2048, %s654, %s642, 128, 128, 8
        $region84: #{tpu_custom_call.1} parent=75 // pred_fallthru
          _
      $region76: #{tpu_custom_call.1} parent=5 // pred_fallthru
        _
      %p660 = scmp.le.s32.totalorder 1, %s39
      %p661 = scmp.lt.s32.totalorder %s39, 3
      %p662 = pnand %p660, %p661
      %p663 = pneg %p662
      // Predicated region
      $region85: #{tpu_custom_call.1} parent=5 // pred_check
        _
      $region86: #{tpu_custom_call.1} parent=5 // pred_check_branch
        %665 = sbr.rel (%p662) target = $region88
      $region87: #{tpu_custom_call.1} parent=5 // pred_region
        %s666 = ssub.s32 %s39, 1
        %s667 = sand.u32 %s52, 1
        %s668 = scalar_lea.sflag [#allocation3], %s667
        %s669 = sand.u32 %s52, 1
        %s670 = smul.addr %s669, 128
        %s671 = scalar_lea.vmem [#allocation2], %s670
        // Predicated region
        $region89: #{tpu_custom_call.1} parent=87 // pred_check
          %p672 = pneg %p65
        $region90: #{tpu_custom_call.1} parent=87 // pred_check_branch
          %674 = sbr.rel (%p672) target = $region92
        $region91: #{tpu_custom_call.1} parent=87 // pred_region
          %675 = dma.done %s668, 2048
        $region92: #{tpu_custom_call.1} parent=87 // pred_fallthru
          _
        %s676 = sand.u32 %s44, 1
        %s677 = scalar_lea.sflag [#allocation6], %s676
        %s678 = sand.u32 %s78, 1
        %s679 = smul.addr %s678, 128
        %s680 = scalar_lea.vmem [#allocation5], %s679
        // Predicated region
        $region93: #{tpu_custom_call.1} parent=87 // pred_check
          %p681 = pneg %p91
        $region94: #{tpu_custom_call.1} parent=87 // pred_check_branch
          %683 = sbr.rel (%p681) target = $region96
        $region95: #{tpu_custom_call.1} parent=87 // pred_region
          %684 = dma.done %s677, 2048
        $region96: #{tpu_custom_call.1} parent=87 // pred_fallthru
          _
        // Predicated region
        $region97: #{tpu_custom_call.1} parent=87 // pred_check
          %p685 = pneg %p112
        $region98: #{tpu_custom_call.1} parent=87 // pred_check_branch
          %687 = sbr.rel (%p685) target = $region100
        $region99: #{tpu_custom_call.1} parent=87 // pred_region
          %688 = dma.done [#allocation6], 16
        $region100: #{tpu_custom_call.1} parent=87 // pred_fallthru
          _
        // Predicated region
        $region101: #{tpu_custom_call.1} parent=87 // pred_check
          %p689 = pneg %p133
        $region102: #{tpu_custom_call.1} parent=87 // pred_check_branch
          %691 = sbr.rel (%p689) target = $region104
        $region103: #{tpu_custom_call.1} parent=87 // pred_region
          %692 = dma.done [#allocation9], 16
        $region104: #{tpu_custom_call.1} parent=87 // pred_fallthru
          _
        // Predicated region
        $region105: #{tpu_custom_call.1} parent=87 // pred_check
          %p693 = pneg %p154
        $region106: #{tpu_custom_call.1} parent=87 // pred_check_branch
          %695 = sbr.rel (%p693) target = $region108
        $region107: #{tpu_custom_call.1} parent=87 // pred_region
          %696 = dma.done [#allocation9], 32
        $region108: #{tpu_custom_call.1} parent=87 // pred_fallthru
          _
        // Predicated region
        $region109: #{tpu_custom_call.1} parent=87 // pred_check
          %p697 = pneg %p175
        $region110: #{tpu_custom_call.1} parent=87 // pred_check_branch
          %699 = sbr.rel (%p697) target = $region112
        $region111: #{tpu_custom_call.1} parent=87 // pred_region
          %700 = dma.done [#allocation12], 32
        $region112: #{tpu_custom_call.1} parent=87 // pred_fallthru
          _
        // Predicated region
        $region113: #{tpu_custom_call.1} parent=87 // pred_check
          %p701 = pneg %p196
        $region114: #{tpu_custom_call.1} parent=87 // pred_check_branch
          %703 = sbr.rel (%p701) target = $region116
        $region115: #{tpu_custom_call.1} parent=87 // pred_region
          %704 = dma.done [#allocation12], 16
        $region116: #{tpu_custom_call.1} parent=87 // pred_fallthru
          _
        // Predicated region
        $region117: #{tpu_custom_call.1} parent=87 // pred_check
          %p705 = pneg %p217
        $region118: #{tpu_custom_call.1} parent=87 // pred_check_branch
          %707 = sbr.rel (%p705) target = $region120
        $region119: #{tpu_custom_call.1} parent=87 // pred_region
          %708 = dma.done [#allocation15], 16
        $region120: #{tpu_custom_call.1} parent=87 // pred_fallthru
          _
        // Predicated region
        $region121: #{tpu_custom_call.1} parent=87 // pred_check
          %p709 = pneg %p238
        $region122: #{tpu_custom_call.1} parent=87 // pred_check_branch
          %711 = sbr.rel (%p709) target = $region124
        $region123: #{tpu_custom_call.1} parent=87 // pred_region
          %712 = dma.done [#allocation15], 64
        $region124: #{tpu_custom_call.1} parent=87 // pred_fallthru
          _
        // Predicated region
        $region125: #{tpu_custom_call.1} parent=87 // pred_check
          %p713 = pneg %p259
        $region126: #{tpu_custom_call.1} parent=87 // pred_check_branch
          %715 = sbr.rel (%p713) target = $region128
        $region127: #{tpu_custom_call.1} parent=87 // pred_region
          %716 = dma.done [#allocation18], 16
        $region128: #{tpu_custom_call.1} parent=87 // pred_fallthru
          _
        // Predicated region
        $region129: #{tpu_custom_call.1} parent=87 // pred_check
          %p717 = pneg %p280
        $region130: #{tpu_custom_call.1} parent=87 // pred_check_branch
          %719 = sbr.rel (%p717) target = $region132
        $region131: #{tpu_custom_call.1} parent=87 // pred_region
          %720 = dma.done [#allocation18], 16
        $region132: #{tpu_custom_call.1} parent=87 // pred_fallthru
          _
        // Predicated region
        $region133: #{tpu_custom_call.1} parent=87 // pred_check
          %p721 = pneg %p301
        $region134: #{tpu_custom_call.1} parent=87 // pred_check_branch
          %723 = sbr.rel (%p721) target = $region136
        $region135: #{tpu_custom_call.1} parent=87 // pred_region
          %724 = dma.done [#allocation21], 64
        $region136: #{tpu_custom_call.1} parent=87 // pred_fallthru
          _
        // Predicated region
        $region137: #{tpu_custom_call.1} parent=87 // pred_check
          %p725 = pneg %p322
        $region138: #{tpu_custom_call.1} parent=87 // pred_check_branch
          %727 = sbr.rel (%p725) target = $region140
        $region139: #{tpu_custom_call.1} parent=87 // pred_region
          %728 = dma.done [#allocation21], 16
        $region140: #{tpu_custom_call.1} parent=87 // pred_fallthru
          _
        // Predicated region
        $region141: #{tpu_custom_call.1} parent=87 // pred_check
          %p729 = pneg %p343
        $region142: #{tpu_custom_call.1} parent=87 // pred_check_branch
          %731 = sbr.rel (%p729) target = $region144
        $region143: #{tpu_custom_call.1} parent=87 // pred_region
          %732 = dma.done [#allocation24], 16
        $region144: #{tpu_custom_call.1} parent=87 // pred_fallthru
          _
        // Predicated region
        $region145: #{tpu_custom_call.1} parent=87 // pred_check
          %p733 = pneg %p364
        $region146: #{tpu_custom_call.1} parent=87 // pred_check_branch
          %735 = sbr.rel (%p733) target = $region148
        $region147: #{tpu_custom_call.1} parent=87 // pred_region
          %736 = dma.done [#allocation24], 32
        $region148: #{tpu_custom_call.1} parent=87 // pred_fallthru
          _
        // Predicated region
        $region149: #{tpu_custom_call.1} parent=87 // pred_check
          %p737 = pneg %p385
        $region150: #{tpu_custom_call.1} parent=87 // pred_check_branch
          %739 = sbr.rel (%p737) target = $region152
        $region151: #{tpu_custom_call.1} parent=87 // pred_region
          %740 = dma.done [#allocation27], 16
        $region152: #{tpu_custom_call.1} parent=87 // pred_fallthru
          _
        // Predicated region
        $region153: #{tpu_custom_call.1} parent=87 // pred_check
          %p741 = pneg %p406
        $region154: #{tpu_custom_call.1} parent=87 // pred_check_branch
          %743 = sbr.rel (%p741) target = $region156
        $region155: #{tpu_custom_call.1} parent=87 // pred_region
          %744 = dma.done [#allocation27], 16
        $region156: #{tpu_custom_call.1} parent=87 // pred_fallthru
          _
        %s745 = sand.u32 %s52, 1
        %s746 = scalar_lea.sflag [#allocation3], %s745
        %s747 = sand.u32 %s52, 1
        %s748 = smul.addr %s747, 128
        %s749 = scalar_lea.vmem [#allocation2], %s748
        %p750 = pneg %p65
        %p751 = pneg %p62
        %s752 = sand.u32 %s44, 1
        %s753 = scalar_lea.sflag [#allocation6], %s752
        %s754 = sand.u32 %s78, 1
        %s755 = smul.addr %s754, 128
        %s756 = scalar_lea.vmem [#allocation5], %s755
        %p757 = pneg %p91
        %p758 = pneg %p88
        %p759 = pneg %p112
        %p760 = pneg %p109
        %p761 = pneg %p133
        %p762 = pneg %p130
        %p763 = pneg %p154
        %p764 = pneg %p151
        %p765 = pneg %p175
        %p766 = pneg %p172
        %p767 = pneg %p196
        %p768 = pneg %p193
        %p769 = pneg %p217
        %p770 = pneg %p214
        %p771 = pneg %p238
        %p772 = pneg %p235
        %p773 = pneg %p259
        %p774 = pneg %p256
        %p775 = pneg %p280
        %p776 = pneg %p277
        %p777 = pneg %p301
        %p778 = pneg %p298
        %p779 = pneg %p322
        %p780 = pneg %p319
        %p781 = pneg %p343
        %p782 = pneg %p340
        %p783 = pneg %p364
        %p784 = pneg %p361
        %p785 = pneg %p385
        %p786 = pneg %p382
        %p787 = pneg %p406
        %p788 = pneg %p403
        %p789 = pneg %p432
        %p790 = pneg %p429
        %s791 = sand.u32 %s419, 1
        %s792 = scalar_lea.sflag [#allocation4], %s791
        %s793 = sand.u32 %s419, 1
        %s794 = smul.addr %s793, 8
        %s795 = scalar_lea.vmem [#allocation29], %s794
        %s796 = smul.u32 8, %s44
        %s797 = smul.u32 8, %s44
        %v799 = vld [vmem:[%s680] sm:$0xff]
        %v800 = vld [vmem:[%s680 + $0x8] sm:$0xff]
        %v801 = vld [vmem:[%s680 + $0x10] sm:$0xff]
        %v802 = vld [vmem:[%s680 + $0x18] sm:$0xff]
        %v803 = vld [vmem:[%s680 + $0x20] sm:$0xff]
        %v804 = vld [vmem:[%s680 + $0x28] sm:$0xff]
        %v805 = vld [vmem:[%s680 + $0x30] sm:$0xff]
        %v806 = vld [vmem:[%s680 + $0x38] sm:$0xff]
        %v807 = vld [vmem:[%s680 + $0x40] sm:$0xff]
        %v808 = vld [vmem:[%s680 + $0x48] sm:$0xff]
        %v809 = vld [vmem:[%s680 + $0x50] sm:$0xff]
        %v810 = vld [vmem:[%s680 + $0x58] sm:$0xff]
        %v811 = vld [vmem:[%s680 + $0x60] sm:$0xff]
        %v812 = vld [vmem:[%s680 + $0x68] sm:$0xff]
        %v813 = vld [vmem:[%s680 + $0x70] sm:$0xff]
        %v814 = vld [vmem:[%s680 + $0x78] sm:$0xff]
        %v815 = vld [vmem:[#allocation7] sm:$0x1]
        %v817 = vlaneseq
        %v818 = vshrl.u32 %v817, 7
        %v819 = vsub.s32 0, %v818
        %v820 = vrot.slane %v815, %v819
        %v822 = vmul.f32 %v799, %v820
        %v823 = vmul.f32 %v800, %v820
        %v824 = vmul.f32 %v801, %v820
        %v825 = vmul.f32 %v802, %v820
        %v826 = vmul.f32 %v803, %v820
        %v827 = vmul.f32 %v804, %v820
        %v828 = vmul.f32 %v805, %v820
        %v829 = vmul.f32 %v806, %v820
        %v830 = vmul.f32 %v807, %v820
        %v831 = vmul.f32 %v808, %v820
        %v832 = vmul.f32 %v809, %v820
        %v833 = vmul.f32 %v810, %v820
        %v834 = vmul.f32 %v811, %v820
        %v835 = vmul.f32 %v812, %v820
        %v836 = vmul.f32 %v813, %v820
        %v837 = vmul.f32 %v814, %v820
        %v838 = vld [vmem:[#allocation8] sm:$0x1]
        %v840 = vlaneseq
        %v841 = vshrl.u32 %v840, 7
        %v842 = vsub.s32 0, %v841
        %v843 = vrot.slane %v838, %v842
        %v845 = vadd.f32 %v822, %v843
        %v846 = vadd.f32 %v823, %v843
        %v847 = vadd.f32 %v824, %v843
        %v848 = vadd.f32 %v825, %v843
        %v849 = vadd.f32 %v826, %v843
        %v850 = vadd.f32 %v827, %v843
        %v851 = vadd.f32 %v828, %v843
        %v852 = vadd.f32 %v829, %v843
        %v853 = vadd.f32 %v830, %v843
        %v854 = vadd.f32 %v831, %v843
        %v855 = vadd.f32 %v832, %v843
        %v856 = vadd.f32 %v833, %v843
        %v857 = vadd.f32 %v834, %v843
        %v858 = vadd.f32 %v835, %v843
        %v859 = vadd.f32 %v836, %v843
        %v860 = vadd.f32 %v837, %v843
        %v861 = vpack.c.bf16 %v846, %v845
        %v862 = vpack.c.bf16 %v848, %v847
        %v863 = vpack.c.bf16 %v850, %v849
        %v864 = vpack.c.bf16 %v852, %v851
        %v865 = vpack.c.bf16 %v854, %v853
        %v866 = vpack.c.bf16 %v856, %v855
        %v867 = vpack.c.bf16 %v858, %v857
        %v868 = vpack.c.bf16 %v860, %v859
        %v869 = vld [vmem:[%s671] sm:$0xff]
        %v870 = vld [vmem:[%s671 + $0x8] sm:$0xff]
        %v871 = vld [vmem:[%s671 + $0x10] sm:$0xff]
        %v872 = vld [vmem:[%s671 + $0x18] sm:$0xff]
        %v873 = vld [vmem:[%s671 + $0x20] sm:$0xff]
        %v874 = vld [vmem:[%s671 + $0x28] sm:$0xff]
        %v875 = vld [vmem:[%s671 + $0x30] sm:$0xff]
        %v876 = vld [vmem:[%s671 + $0x38] sm:$0xff]
        %v877 = vld [vmem:[%s671 + $0x40] sm:$0xff]
        %v878 = vld [vmem:[%s671 + $0x48] sm:$0xff]
        %v879 = vld [vmem:[%s671 + $0x50] sm:$0xff]
        %v880 = vld [vmem:[%s671 + $0x58] sm:$0xff]
        %v881 = vld [vmem:[%s671 + $0x60] sm:$0xff]
        %v882 = vld [vmem:[%s671 + $0x68] sm:$0xff]
        %v883 = vld [vmem:[%s671 + $0x70] sm:$0xff]
        %v884 = vld [vmem:[%s671 + $0x78] sm:$0xff]
        %vm885 = vcmask 23552
        %v887 = vsel %vm885, %v869, 0
        %v890 = vsel %vm885, %v870, 0
        %892 = vmatprep.subr.mxu0 0.0
        %893 = vmatpush1.xpose.msra.mxu0 %v887
        %894 = vmatprep.subr.mxu0 0.0
        %895 = vmatpush1.xpose.msra.mxu0 %v890
        %896 = vmatprep.subr.mxu0 0.0
        %897 = vmatpush1.xpose.msra.mxu0 0.0
        %898 = vmatprep.subr.mxu0 0.0
        %899 = vmatpush1.xpose.msra.mxu0 0.0
        %900 = vmatprep.subr.mxu0 0.0
        %901 = vmatpush1.xpose.msra.mxu0 0.0
        %902 = vmatprep.subr.mxu0 0.0
        %903 = vmatpush1.xpose.msra.mxu0 0.0
        %904 = vmatprep.subr.mxu0 0.0
        %905 = vmatpush1.xpose.msra.mxu0 0.0
        %906 = vmatprep.subr.mxu0 0.0
        %907 = vmatpush1.xpose.msra.mxu0 0.0
        %908 = vmatprep.subr.mxu0 0.0
        %909 = vmatpush1.xpose.msra.mxu0 0.0
        %910 = vmatprep.subr.mxu0 0.0
        %911 = vmatpush1.xpose.msra.mxu0 0.0
        %912 = vmatprep.subr.mxu0 0.0
        %913 = vmatpush1.xpose.msra.mxu0 0.0
        %914 = vmatprep.subr.mxu0 0.0
        %915 = vmatpush1.xpose.msra.mxu0 0.0
        %916 = vmatprep.subr.mxu0 0.0
        %917 = vmatpush1.xpose.msra.mxu0 0.0
        %918 = vmatprep.subr.mxu0 0.0
        %919 = vmatpush1.xpose.msra.mxu0 0.0
        %920 = vmatprep.subr.mxu0 0.0
        %921 = vmatpush1.xpose.msra.mxu0 0.0
        %922 = vmatprep.subr.mxu0 0.0
        %923 = vmatpush1.xpose.msra.mxu0 0.0
        %924 = vmatprep.subr.mxu0 0.0
        %925 = vmatpush1.xpose.msra.mxu0 0.0
        %926 = vmatprep.subr.mxu0 0.0
        %927 = vmatpush1.xpose.msra.mxu0 0.0
        %928 = vmatprep.subr.mxu0 0.0
        %929 = vmatpush1.xpose.msra.mxu0 0.0
        %930 = vmatprep.subr.mxu0 0.0
        %931 = vmatpush1.xpose.msra.mxu0 0.0
        %932 = vmatprep.subr.mxu0 0.0
        %933 = vmatpush1.xpose.msra.mxu0 0.0
        %934 = vmatprep.subr.mxu0 0.0
        %935 = vmatpush1.xpose.msra.mxu0 0.0
        %936 = vmatprep.subr.mxu0 0.0
        %937 = vmatpush1.xpose.msra.mxu0 0.0
        %938 = vmatprep.subr.mxu0 0.0
        %939 = vmatpush1.xpose.msra.mxu0 0.0
        %940 = vmatprep.subr.mxu0 0.0
        %941 = vmatpush1.xpose.msra.mxu0 0.0
        %942 = vmatprep.subr.mxu0 0.0
        %943 = vmatpush1.xpose.msra.mxu0 0.0
        %944 = vmatprep.subr.mxu0 0.0
        %945 = vmatpush1.xpose.msra.mxu0 0.0
        %946 = vmatprep.subr.mxu0 0.0
        %947 = vmatpush1.xpose.msra.mxu0 0.0
        %948 = vmatprep.subr.mxu0 0.0
        %949 = vmatpush1.xpose.msra.mxu0 0.0
        %950 = vmatprep.subr.mxu0 0.0
        %951 = vmatpush1.xpose.msra.mxu0 0.0
        %952 = vmatprep.subr.mxu0 0.0
        %953 = vmatpush1.xpose.msra.mxu0 0.0
        %954 = vmatprep.subr.mxu0 0.0
        %955 = vmatpush1.xpose.msra.mxu0 0.0
        %956 = vmatprep.mubr.f32.mxu0 0.0
        %957 = vmatmul.mubr.f32.gmra.mrb[0].mxu0 %v887
        %v958 = vpop.f32.mrb[0].mxu0
        %v959 = vadd.f32 0.0, %v958
        %v960 = vpop.f32.mrb[0].mxu0
        %961 = vmatprep.mubr.f32.mxu0 0.0
        %962 = vmatmul.mubr.f32.gmra.mrb[0].mxu0 %v890
        %v963 = vpop.f32.mrb[0].mxu0
        %v964 = vadd.f32 0.0, %v963
        %v965 = vpop.f32.mrb[0].mxu0
        %966 = vdwg.mxu0
        %v968 = vsel %vm885, %v871, 0
        %v971 = vsel %vm885, %v872, 0
        %973 = vmatprep.subr.mxu0 0.0
        %974 = vmatpush1.xpose.msra.mxu0 %v968
        %975 = vmatprep.subr.mxu0 0.0
        %976 = vmatpush1.xpose.msra.mxu0 %v971
        %977 = vmatprep.subr.mxu0 0.0
        %978 = vmatpush1.xpose.msra.mxu0 0.0
        %979 = vmatprep.subr.mxu0 0.0
        %980 = vmatpush1.xpose.msra.mxu0 0.0
        %981 = vmatprep.subr.mxu0 0.0
        %982 = vmatpush1.xpose.msra.mxu0 0.0
        %983 = vmatprep.subr.mxu0 0.0
        %984 = vmatpush1.xpose.msra.mxu0 0.0
        %985 = vmatprep.subr.mxu0 0.0
        %986 = vmatpush1.xpose.msra.mxu0 0.0
        %987 = vmatprep.subr.mxu0 0.0
        %988 = vmatpush1.xpose.msra.mxu0 0.0
        %989 = vmatprep.subr.mxu0 0.0
        %990 = vmatpush1.xpose.msra.mxu0 0.0
        %991 = vmatprep.subr.mxu0 0.0
        %992 = vmatpush1.xpose.msra.mxu0 0.0
        %993 = vmatprep.subr.mxu0 0.0
        %994 = vmatpush1.xpose.msra.mxu0 0.0
        %995 = vmatprep.subr.mxu0 0.0
        %996 = vmatpush1.xpose.msra.mxu0 0.0
        %997 = vmatprep.subr.mxu0 0.0
        %998 = vmatpush1.xpose.msra.mxu0 0.0
        %999 = vmatprep.subr.mxu0 0.0
        %1000 = vmatpush1.xpose.msra.mxu0 0.0
        %1001 = vmatprep.subr.mxu0 0.0
        %1002 = vmatpush1.xpose.msra.mxu0 0.0
        %1003 = vmatprep.subr.mxu0 0.0
        %1004 = vmatpush1.xpose.msra.mxu0 0.0
        %1005 = vmatprep.subr.mxu0 0.0
        %1006 = vmatpush1.xpose.msra.mxu0 0.0
        %1007 = vmatprep.subr.mxu0 0.0
        %1008 = vmatpush1.xpose.msra.mxu0 0.0
        %1009 = vmatprep.subr.mxu0 0.0
        %1010 = vmatpush1.xpose.msra.mxu0 0.0
        %1011 = vmatprep.subr.mxu0 0.0
        %1012 = vmatpush1.xpose.msra.mxu0 0.0
        %1013 = vmatprep.subr.mxu0 0.0
        %1014 = vmatpush1.xpose.msra.mxu0 0.0
        %1015 = vmatprep.subr.mxu0 0.0
        %1016 = vmatpush1.xpose.msra.mxu0 0.0
        %1017 = vmatprep.subr.mxu0 0.0
        %1018 = vmatpush1.xpose.msra.mxu0 0.0
        %1019 = vmatprep.subr.mxu0 0.0
        %1020 = vmatpush1.xpose.msra.mxu0 0.0
        %1021 = vmatprep.subr.mxu0 0.0
        %1022 = vmatpush1.xpose.msra.mxu0 0.0
        %1023 = vmatprep.subr.mxu0 0.0
        %1024 = vmatpush1.xpose.msra.mxu0 0.0
        %1025 = vmatprep.subr.mxu0 0.0
        %1026 = vmatpush1.xpose.msra.mxu0 0.0
        %1027 = vmatprep.subr.mxu0 0.0
        %1028 = vmatpush1.xpose.msra.mxu0 0.0
        %1029 = vmatprep.subr.mxu0 0.0
        %1030 = vmatpush1.xpose.msra.mxu0 0.0
        %1031 = vmatprep.subr.mxu0 0.0
        %1032 = vmatpush1.xpose.msra.mxu0 0.0
        %1033 = vmatprep.subr.mxu0 0.0
        %1034 = vmatpush1.xpose.msra.mxu0 0.0
        %1035 = vmatprep.subr.mxu0 0.0
        %1036 = vmatpush1.xpose.msra.mxu0 0.0
        %1037 = vmatprep.mubr.f32.mxu0 0.0
        %1038 = vmatmul.mubr.f32.gmra.mrb[0].mxu0 %v968
        %v1039 = vpop.f32.mrb[0].mxu0
        %v1040 = vadd.f32 0.0, %v1039
        %v1041 = vpop.f32.mrb[0].mxu0
        %1042 = vmatprep.mubr.f32.mxu0 0.0
        %1043 = vmatmul.mubr.f32.gmra.mrb[0].mxu0 %v971
        %v1044 = vpop.f32.mrb[0].mxu0
        %v1045 = vadd.f32 0.0, %v1044
        %v1046 = vpop.f32.mrb[0].mxu0
        %1047 = vdwg.mxu0
        %v1049 = vsel %vm885, %v873, 0
        %v1052 = vsel %vm885, %v874, 0
        %1054 = vmatprep.subr.mxu0 0.0
        %1055 = vmatpush1.xpose.msra.mxu0 %v1049
        %1056 = vmatprep.subr.mxu0 0.0
        %1057 = vmatpush1.xpose.msra.mxu0 %v1052
        %1058 = vmatprep.subr.mxu0 0.0
        %1059 = vmatpush1.xpose.msra.mxu0 0.0
        %1060 = vmatprep.subr.mxu0 0.0
        %1061 = vmatpush1.xpose.msra.mxu0 0.0
        %1062 = vmatprep.subr.mxu0 0.0
        %1063 = vmatpush1.xpose.msra.mxu0 0.0
        %1064 = vmatprep.subr.mxu0 0.0
        %1065 = vmatpush1.xpose.msra.mxu0 0.0
        %1066 = vmatprep.subr.mxu0 0.0
        %1067 = vmatpush1.xpose.msra.mxu0 0.0
        %1068 = vmatprep.subr.mxu0 0.0
        %1069 = vmatpush1.xpose.msra.mxu0 0.0
        %1070 = vmatprep.subr.mxu0 0.0
        %1071 = vmatpush1.xpose.msra.mxu0 0.0
        %1072 = vmatprep.subr.mxu0 0.0
        %1073 = vmatpush1.xpose.msra.mxu0 0.0
        %1074 = vmatprep.subr.mxu0 0.0
        %1075 = vmatpush1.xpose.msra.mxu0 0.0
        %1076 = vmatprep.subr.mxu0 0.0
        %1077 = vmatpush1.xpose.msra.mxu0 0.0
        %1078 = vmatprep.subr.mxu0 0.0
        %1079 = vmatpush1.xpose.msra.mxu0 0.0
        %1080 = vmatprep.subr.mxu0 0.0
        %1081 = vmatpush1.xpose.msra.mxu0 0.0
        %1082 = vmatprep.subr.mxu0 0.0
        %1083 = vmatpush1.xpose.msra.mxu0 0.0
        %1084 = vmatprep.subr.mxu0 0.0
        %1085 = vmatpush1.xpose.msra.mxu0 0.0
        %1086 = vmatprep.subr.mxu0 0.0
        %1087 = vmatpush1.xpose.msra.mxu0 0.0
        %1088 = vmatprep.subr.mxu0 0.0
        %1089 = vmatpush1.xpose.msra.mxu0 0.0
        %1090 = vmatprep.subr.mxu0 0.0
        %1091 = vmatpush1.xpose.msra.mxu0 0.0
        %1092 = vmatprep.subr.mxu0 0.0
        %1093 = vmatpush1.xpose.msra.mxu0 0.0
        %1094 = vmatprep.subr.mxu0 0.0
        %1095 = vmatpush1.xpose.msra.mxu0 0.0
        %1096 = vmatprep.subr.mxu0 0.0
        %1097 = vmatpush1.xpose.msra.mxu0 0.0
        %1098 = vmatprep.subr.mxu0 0.0
        %1099 = vmatpush1.xpose.msra.mxu0 0.0
        %1100 = vmatprep.subr.mxu0 0.0
        %1101 = vmatpush1.xpose.msra.mxu0 0.0
        %1102 = vmatprep.subr.mxu0 0.0
        %1103 = vmatpush1.xpose.msra.mxu0 0.0
        %1104 = vmatprep.subr.mxu0 0.0
        %1105 = vmatpush1.xpose.msra.mxu0 0.0
        %1106 = vmatprep.subr.mxu0 0.0
        %1107 = vmatpush1.xpose.msra.mxu0 0.0
        %1108 = vmatprep.subr.mxu0 0.0
        %1109 = vmatpush1.xpose.msra.mxu0 0.0
        %1110 = vmatprep.subr.mxu0 0.0
        %1111 = vmatpush1.xpose.msra.mxu0 0.0
        %1112 = vmatprep.subr.mxu0 0.0
        %1113 = vmatpush1.xpose.msra.mxu0 0.0
        %1114 = vmatprep.subr.mxu0 0.0
        %1115 = vmatpush1.xpose.msra.mxu0 0.0
        %1116 = vmatprep.subr.mxu0 0.0
        %1117 = vmatpush1.xpose.msra.mxu0 0.0
        %1118 = vmatprep.mubr.f32.mxu0 0.0
        %1119 = vmatmul.mubr.f32.gmra.mrb[0].mxu0 %v1049
        %v1120 = vpop.f32.mrb[0].mxu0
        %v1121 = vadd.f32 0.0, %v1120
        %v1122 = vpop.f32.mrb[0].mxu0
        %1123 = vmatprep.mubr.f32.mxu0 0.0
        %1124 = vmatmul.mubr.f32.gmra.mrb[0].mxu0 %v1052
        %v1125 = vpop.f32.mrb[0].mxu0
        %v1126 = vadd.f32 0.0, %v1125
        %v1127 = vpop.f32.mrb[0].mxu0
        %1128 = vdwg.mxu0
        %v1130 = vsel %vm885, %v875, 0
        %v1133 = vsel %vm885, %v876, 0
        %1135 = vmatprep.subr.mxu0 0.0
        %1136 = vmatpush1.xpose.msra.mxu0 %v1130
        %1137 = vmatprep.subr.mxu0 0.0
        %1138 = vmatpush1.xpose.msra.mxu0 %v1133
        %1139 = vmatprep.subr.mxu0 0.0
        %1140 = vmatpush1.xpose.msra.mxu0 0.0
        %1141 = vmatprep.subr.mxu0 0.0
        %1142 = vmatpush1.xpose.msra.mxu0 0.0
        %1143 = vmatprep.subr.mxu0 0.0
        %1144 = vmatpush1.xpose.msra.mxu0 0.0
        %1145 = vmatprep.subr.mxu0 0.0
        %1146 = vmatpush1.xpose.msra.mxu0 0.0
        %1147 = vmatprep.subr.mxu0 0.0
        %1148 = vmatpush1.xpose.msra.mxu0 0.0
        %1149 = vmatprep.subr.mxu0 0.0
        %1150 = vmatpush1.xpose.msra.mxu0 0.0
        %1151 = vmatprep.subr.mxu0 0.0
        %1152 = vmatpush1.xpose.msra.mxu0 0.0
        %1153 = vmatprep.subr.mxu0 0.0
        %1154 = vmatpush1.xpose.msra.mxu0 0.0
        %1155 = vmatprep.subr.mxu0 0.0
        %1156 = vmatpush1.xpose.msra.mxu0 0.0
        %1157 = vmatprep.subr.mxu0 0.0
        %1158 = vmatpush1.xpose.msra.mxu0 0.0
        %1159 = vmatprep.subr.mxu0 0.0
        %1160 = vmatpush1.xpose.msra.mxu0 0.0
        %1161 = vmatprep.subr.mxu0 0.0
        %1162 = vmatpush1.xpose.msra.mxu0 0.0
        %1163 = vmatprep.subr.mxu0 0.0
        %1164 = vmatpush1.xpose.msra.mxu0 0.0
        %1165 = vmatprep.subr.mxu0 0.0
        %1166 = vmatpush1.xpose.msra.mxu0 0.0
        %1167 = vmatprep.subr.mxu0 0.0
        %1168 = vmatpush1.xpose.msra.mxu0 0.0
        %1169 = vmatprep.subr.mxu0 0.0
        %1170 = vmatpush1.xpose.msra.mxu0 0.0
        %1171 = vmatprep.subr.mxu0 0.0
        %1172 = vmatpush1.xpose.msra.mxu0 0.0
        %1173 = vmatprep.subr.mxu0 0.0
        %1174 = vmatpush1.xpose.msra.mxu0 0.0
        %1175 = vmatprep.subr.mxu0 0.0
        %1176 = vmatpush1.xpose.msra.mxu0 0.0
        %1177 = vmatprep.subr.mxu0 0.0
        %1178 = vmatpush1.xpose.msra.mxu0 0.0
        %1179 = vmatprep.subr.mxu0 0.0
        %1180 = vmatpush1.xpose.msra.mxu0 0.0
        %1181 = vmatprep.subr.mxu0 0.0
        %1182 = vmatpush1.xpose.msra.mxu0 0.0
        %1183 = vmatprep.subr.mxu0 0.0
        %1184 = vmatpush1.xpose.msra.mxu0 0.0
        %1185 = vmatprep.subr.mxu0 0.0
        %1186 = vmatpush1.xpose.msra.mxu0 0.0
        %1187 = vmatprep.subr.mxu0 0.0
        %1188 = vmatpush1.xpose.msra.mxu0 0.0
        %1189 = vmatprep.subr.mxu0 0.0
        %1190 = vmatpush1.xpose.msra.mxu0 0.0
        %1191 = vmatprep.subr.mxu0 0.0
        %1192 = vmatpush1.xpose.msra.mxu0 0.0
        %1193 = vmatprep.subr.mxu0 0.0
        %1194 = vmatpush1.xpose.msra.mxu0 0.0
        %1195 = vmatprep.subr.mxu0 0.0
        %1196 = vmatpush1.xpose.msra.mxu0 0.0
        %1197 = vmatprep.subr.mxu0 0.0
        %1198 = vmatpush1.xpose.msra.mxu0 0.0
        %1199 = vmatprep.mubr.f32.mxu0 0.0
        %1200 = vmatmul.mubr.f32.gmra.mrb[0].mxu0 %v1130
        %v1201 = vpop.f32.mrb[0].mxu0
        %v1202 = vadd.f32 0.0, %v1201
        %v1203 = vpop.f32.mrb[0].mxu0
        %1204 = vmatprep.mubr.f32.mxu0 0.0
        %1205 = vmatmul.mubr.f32.gmra.mrb[0].mxu0 %v1133
        %v1206 = vpop.f32.mrb[0].mxu0
        %v1207 = vadd.f32 0.0, %v1206
        %v1208 = vpop.f32.mrb[0].mxu0
        %1209 = vdwg.mxu0
        %v1211 = vsel %vm885, %v877, 0
        %v1214 = vsel %vm885, %v878, 0
        %1216 = vmatprep.subr.mxu0 0.0
        %1217 = vmatpush1.xpose.msra.mxu0 %v1211
        %1218 = vmatprep.subr.mxu0 0.0
        %1219 = vmatpush1.xpose.msra.mxu0 %v1214
        %1220 = vmatprep.subr.mxu0 0.0
        %1221 = vmatpush1.xpose.msra.mxu0 0.0
        %1222 = vmatprep.subr.mxu0 0.0
        %1223 = vmatpush1.xpose.msra.mxu0 0.0
        %1224 = vmatprep.subr.mxu0 0.0
        %1225 = vmatpush1.xpose.msra.mxu0 0.0
        %1226 = vmatprep.subr.mxu0 0.0
        %1227 = vmatpush1.xpose.msra.mxu0 0.0
        %1228 = vmatprep.subr.mxu0 0.0
        %1229 = vmatpush1.xpose.msra.mxu0 0.0
        %1230 = vmatprep.subr.mxu0 0.0
        %1231 = vmatpush1.xpose.msra.mxu0 0.0
        %1232 = vmatprep.subr.mxu0 0.0
        %1233 = vmatpush1.xpose.msra.mxu0 0.0
        %1234 = vmatprep.subr.mxu0 0.0
        %1235 = vmatpush1.xpose.msra.mxu0 0.0
        %1236 = vmatprep.subr.mxu0 0.0
        %1237 = vmatpush1.xpose.msra.mxu0 0.0
        %1238 = vmatprep.subr.mxu0 0.0
        %1239 = vmatpush1.xpose.msra.mxu0 0.0
        %1240 = vmatprep.subr.mxu0 0.0
        %1241 = vmatpush1.xpose.msra.mxu0 0.0
        %1242 = vmatprep.subr.mxu0 0.0
        %1243 = vmatpush1.xpose.msra.mxu0 0.0
        %1244 = vmatprep.subr.mxu0 0.0
        %1245 = vmatpush1.xpose.msra.mxu0 0.0
        %1246 = vmatprep.subr.mxu0 0.0
        %1247 = vmatpush1.xpose.msra.mxu0 0.0
        %1248 = vmatprep.subr.mxu0 0.0
        %1249 = vmatpush1.xpose.msra.mxu0 0.0
        %1250 = vmatprep.subr.mxu0 0.0
        %1251 = vmatpush1.xpose.msra.mxu0 0.0
        %1252 = vmatprep.subr.mxu0 0.0
        %1253 = vmatpush1.xpose.msra.mxu0 0.0
        %1254 = vmatprep.subr.mxu0 0.0
        %1255 = vmatpush1.xpose.msra.mxu0 0.0
        %1256 = vmatprep.subr.mxu0 0.0
        %1257 = vmatpush1.xpose.msra.mxu0 0.0
        %1258 = vmatprep.subr.mxu0 0.0
        %1259 = vmatpush1.xpose.msra.mxu0 0.0
        %1260 = vmatprep.subr.mxu0 0.0
        %1261 = vmatpush1.xpose.msra.mxu0 0.0
        %1262 = vmatprep.subr.mxu0 0.0
        %1263 = vmatpush1.xpose.msra.mxu0 0.0
        %1264 = vmatprep.subr.mxu0 0.0
        %1265 = vmatpush1.xpose.msra.mxu0 0.0
        %1266 = vmatprep.subr.mxu0 0.0
        %1267 = vmatpush1.xpose.msra.mxu0 0.0
        %1268 = vmatprep.subr.mxu0 0.0
        %1269 = vmatpush1.xpose.msra.mxu0 0.0
        %1270 = vmatprep.subr.mxu0 0.0
        %1271 = vmatpush1.xpose.msra.mxu0 0.0
        %1272 = vmatprep.subr.mxu0 0.0
        %1273 = vmatpush1.xpose.msra.mxu0 0.0
        %1274 = vmatprep.subr.mxu0 0.0
        %1275 = vmatpush1.xpose.msra.mxu0 0.0
        %1276 = vmatprep.subr.mxu0 0.0
        %1277 = vmatpush1.xpose.msra.mxu0 0.0
        %1278 = vmatprep.subr.mxu0 0.0
        %1279 = vmatpush1.xpose.msra.mxu0 0.0
        %1280 = vmatprep.mubr.f32.mxu0 0.0
        %1281 = vmatmul.mubr.f32.gmra.mrb[0].mxu0 %v1211
        %v1282 = vpop.f32.mrb[0].mxu0
        %v1283 = vadd.f32 0.0, %v1282
        %v1284 = vpop.f32.mrb[0].mxu0
        %1285 = vmatprep.mubr.f32.mxu0 0.0
        %1286 = vmatmul.mubr.f32.gmra.mrb[0].mxu0 %v1214
        %v1287 = vpop.f32.mrb[0].mxu0
        %v1288 = vadd.f32 0.0, %v1287
        %v1289 = vpop.f32.mrb[0].mxu0
        %1290 = vdwg.mxu0
        %v1292 = vsel %vm885, %v879, 0
        %v1295 = vsel %vm885, %v880, 0
        %1297 = vmatprep.subr.mxu0 0.0
        %1298 = vmatpush1.xpose.msra.mxu0 %v1292
        %1299 = vmatprep.subr.mxu0 0.0
        %1300 = vmatpush1.xpose.msra.mxu0 %v1295
        %1301 = vmatprep.subr.mxu0 0.0
        %1302 = vmatpush1.xpose.msra.mxu0 0.0
        %1303 = vmatprep.subr.mxu0 0.0
        %1304 = vmatpush1.xpose.msra.mxu0 0.0
        %1305 = vmatprep.subr.mxu0 0.0
        %1306 = vmatpush1.xpose.msra.mxu0 0.0
        %1307 = vmatprep.subr.mxu0 0.0
        %1308 = vmatpush1.xpose.msra.mxu0 0.0
        %1309 = vmatprep.subr.mxu0 0.0
        %1310 = vmatpush1.xpose.msra.mxu0 0.0
        %1311 = vmatprep.subr.mxu0 0.0
        %1312 = vmatpush1.xpose.msra.mxu0 0.0
        %1313 = vmatprep.subr.mxu0 0.0
        %1314 = vmatpush1.xpose.msra.mxu0 0.0
        %1315 = vmatprep.subr.mxu0 0.0
        %1316 = vmatpush1.xpose.msra.mxu0 0.0
        %1317 = vmatprep.subr.mxu0 0.0
        %1318 = vmatpush1.xpose.msra.mxu0 0.0
        %1319 = vmatprep.subr.mxu0 0.0
        %1320 = vmatpush1.xpose.msra.mxu0 0.0
        %1321 = vmatprep.subr.mxu0 0.0
        %1322 = vmatpush1.xpose.msra.mxu0 0.0
        %1323 = vmatprep.subr.mxu0 0.0
        %1324 = vmatpush1.xpose.msra.mxu0 0.0
        %1325 = vmatprep.subr.mxu0 0.0
        %1326 = vmatpush1.xpose.msra.mxu0 0.0
        %1327 = vmatprep.subr.mxu0 0.0
        %1328 = vmatpush1.xpose.msra.mxu0 0.0
        %1329 = vmatprep.subr.mxu0 0.0
        %1330 = vmatpush1.xpose.msra.mxu0 0.0
        %1331 = vmatprep.subr.mxu0 0.0
        %1332 = vmatpush1.xpose.msra.mxu0 0.0
        %1333 = vmatprep.subr.mxu0 0.0
        %1334 = vmatpush1.xpose.msra.mxu0 0.0
        %1335 = vmatprep.subr.mxu0 0.0
        %1336 = vmatpush1.xpose.msra.mxu0 0.0
        %1337 = vmatprep.subr.mxu0 0.0
        %1338 = vmatpush1.xpose.msra.mxu0 0.0
        %1339 = vmatprep.subr.mxu0 0.0
        %1340 = vmatpush1.xpose.msra.mxu0 0.0
        %1341 = vmatprep.subr.mxu0 0.0
        %1342 = vmatpush1.xpose.msra.mxu0 0.0
        %1343 = vmatprep.subr.mxu0 0.0
        %1344 = vmatpush1.xpose.msra.mxu0 0.0
        %1345 = vmatprep.subr.mxu0 0.0
        %1346 = vmatpush1.xpose.msra.mxu0 0.0
        %1347 = vmatprep.subr.mxu0 0.0
        %1348 = vmatpush1.xpose.msra.mxu0 0.0
        %1349 = vmatprep.subr.mxu0 0.0
        %1350 = vmatpush1.xpose.msra.mxu0 0.0
        %1351 = vmatprep.subr.mxu0 0.0
        %1352 = vmatpush1.xpose.msra.mxu0 0.0
        %1353 = vmatprep.subr.mxu0 0.0
        %1354 = vmatpush1.xpose.msra.mxu0 0.0
        %1355 = vmatprep.subr.mxu0 0.0
        %1356 = vmatpush1.xpose.msra.mxu0 0.0
        %1357 = vmatprep.subr.mxu0 0.0
        %1358 = vmatpush1.xpose.msra.mxu0 0.0
        %1359 = vmatprep.subr.mxu0 0.0
        %1360 = vmatpush1.xpose.msra.mxu0 0.0
        %1361 = vmatprep.mubr.f32.mxu0 0.0
        %1362 = vmatmul.mubr.f32.gmra.mrb[0].mxu0 %v1292
        %v1363 = vpop.f32.mrb[0].mxu0
        %v1364 = vadd.f32 0.0, %v1363
        %v1365 = vpop.f32.mrb[0].mxu0
        %1366 = vmatprep.mubr.f32.mxu0 0.0
        %1367 = vmatmul.mubr.f32.gmra.mrb[0].mxu0 %v1295
        %v1368 = vpop.f32.mrb[0].mxu0
        %v1369 = vadd.f32 0.0, %v1368
        %v1370 = vpop.f32.mrb[0].mxu0
        %1371 = vdwg.mxu0
        %v1373 = vsel %vm885, %v881, 0
        %v1376 = vsel %vm885, %v882, 0
        %1378 = vmatprep.subr.mxu0 0.0
        %1379 = vmatpush1.xpose.msra.mxu0 %v1373
        %1380 = vmatprep.subr.mxu0 0.0
        %1381 = vmatpush1.xpose.msra.mxu0 %v1376
        %1382 = vmatprep.subr.mxu0 0.0
        %1383 = vmatpush1.xpose.msra.mxu0 0.0
        %1384 = vmatprep.subr.mxu0 0.0
        %1385 = vmatpush1.xpose.msra.mxu0 0.0
        %1386 = vmatprep.subr.mxu0 0.0
        %1387 = vmatpush1.xpose.msra.mxu0 0.0
        %1388 = vmatprep.subr.mxu0 0.0
        %1389 = vmatpush1.xpose.msra.mxu0 0.0
        %1390 = vmatprep.subr.mxu0 0.0
        %1391 = vmatpush1.xpose.msra.mxu0 0.0
        %1392 = vmatprep.subr.mxu0 0.0
        %1393 = vmatpush1.xpose.msra.mxu0 0.0
        %1394 = vmatprep.subr.mxu0 0.0
        %1395 = vmatpush1.xpose.msra.mxu0 0.0
        %1396 = vmatprep.subr.mxu0 0.0
        %1397 = vmatpush1.xpose.msra.mxu0 0.0
        %1398 = vmatprep.subr.mxu0 0.0
        %1399 = vmatpush1.xpose.msra.mxu0 0.0
        %1400 = vmatprep.subr.mxu0 0.0
        %1401 = vmatpush1.xpose.msra.mxu0 0.0
        %1402 = vmatprep.subr.mxu0 0.0
        %1403 = vmatpush1.xpose.msra.mxu0 0.0
        %1404 = vmatprep.subr.mxu0 0.0
        %1405 = vmatpush1.xpose.msra.mxu0 0.0
        %1406 = vmatprep.subr.mxu0 0.0
        %1407 = vmatpush1.xpose.msra.mxu0 0.0
        %1408 = vmatprep.subr.mxu0 0.0
        %1409 = vmatpush1.xpose.msra.mxu0 0.0
        %1410 = vmatprep.subr.mxu0 0.0
        %1411 = vmatpush1.xpose.msra.mxu0 0.0
        %1412 = vmatprep.subr.mxu0 0.0
        %1413 = vmatpush1.xpose.msra.mxu0 0.0
        %1414 = vmatprep.subr.mxu0 0.0
        %1415 = vmatpush1.xpose.msra.mxu0 0.0
        %1416 = vmatprep.subr.mxu0 0.0
        %1417 = vmatpush1.xpose.msra.mxu0 0.0
        %1418 = vmatprep.subr.mxu0 0.0
        %1419 = vmatpush1.xpose.msra.mxu0 0.0
        %1420 = vmatprep.subr.mxu0 0.0
        %1421 = vmatpush1.xpose.msra.mxu0 0.0
        %1422 = vmatprep.subr.mxu0 0.0
        %1423 = vmatpush1.xpose.msra.mxu0 0.0
        %1424 = vmatprep.subr.mxu0 0.0
        %1425 = vmatpush1.xpose.msra.mxu0 0.0
        %1426 = vmatprep.subr.mxu0 0.0
        %1427 = vmatpush1.xpose.msra.mxu0 0.0
        %1428 = vmatprep.subr.mxu0 0.0
        %1429 = vmatpush1.xpose.msra.mxu0 0.0
        %1430 = vmatprep.subr.mxu0 0.0
        %1431 = vmatpush1.xpose.msra.mxu0 0.0
        %1432 = vmatprep.subr.mxu0 0.0
        %1433 = vmatpush1.xpose.msra.mxu0 0.0
        %1434 = vmatprep.subr.mxu0 0.0
        %1435 = vmatpush1.xpose.msra.mxu0 0.0
        %1436 = vmatprep.subr.mxu0 0.0
        %1437 = vmatpush1.xpose.msra.mxu0 0.0
        %1438 = vmatprep.subr.mxu0 0.0
        %1439 = vmatpush1.xpose.msra.mxu0 0.0
        %1440 = vmatprep.subr.mxu0 0.0
        %1441 = vmatpush1.xpose.msra.mxu0 0.0
        %1442 = vmatprep.mubr.f32.mxu0 0.0
        %1443 = vmatmul.mubr.f32.gmra.mrb[0].mxu0 %v1373
        %v1444 = vpop.f32.mrb[0].mxu0
        %v1445 = vadd.f32 0.0, %v1444
        %v1446 = vpop.f32.mrb[0].mxu0
        %1447 = vmatprep.mubr.f32.mxu0 0.0
        %1448 = vmatmul.mubr.f32.gmra.mrb[0].mxu0 %v1376
        %v1449 = vpop.f32.mrb[0].mxu0
        %v1450 = vadd.f32 0.0, %v1449
        %v1451 = vpop.f32.mrb[0].mxu0
        %1452 = vdwg.mxu0
        %v1454 = vsel %vm885, %v883, 0
        %v1457 = vsel %vm885, %v884, 0
        %1459 = vmatprep.subr.mxu0 0.0
        %1460 = vmatpush1.xpose.msra.mxu0 %v1454
        %1461 = vmatprep.subr.mxu0 0.0
        %1462 = vmatpush1.xpose.msra.mxu0 %v1457
        %1463 = vmatprep.subr.mxu0 0.0
        %1464 = vmatpush1.xpose.msra.mxu0 0.0
        %1465 = vmatprep.subr.mxu0 0.0
        %1466 = vmatpush1.xpose.msra.mxu0 0.0
        %1467 = vmatprep.subr.mxu0 0.0
        %1468 = vmatpush1.xpose.msra.mxu0 0.0
        %1469 = vmatprep.subr.mxu0 0.0
        %1470 = vmatpush1.xpose.msra.mxu0 0.0
        %1471 = vmatprep.subr.mxu0 0.0
        %1472 = vmatpush1.xpose.msra.mxu0 0.0
        %1473 = vmatprep.subr.mxu0 0.0
        %1474 = vmatpush1.xpose.msra.mxu0 0.0
        %1475 = vmatprep.subr.mxu0 0.0
        %1476 = vmatpush1.xpose.msra.mxu0 0.0
        %1477 = vmatprep.subr.mxu0 0.0
        %1478 = vmatpush1.xpose.msra.mxu0 0.0
        %1479 = vmatprep.subr.mxu0 0.0
        %1480 = vmatpush1.xpose.msra.mxu0 0.0
        %1481 = vmatprep.subr.mxu0 0.0
        %1482 = vmatpush1.xpose.msra.mxu0 0.0
        %1483 = vmatprep.subr.mxu0 0.0
        %1484 = vmatpush1.xpose.msra.mxu0 0.0
        %1485 = vmatprep.subr.mxu0 0.0
        %1486 = vmatpush1.xpose.msra.mxu0 0.0
        %1487 = vmatprep.subr.mxu0 0.0
        %1488 = vmatpush1.xpose.msra.mxu0 0.0
        %1489 = vmatprep.subr.mxu0 0.0
        %1490 = vmatpush1.xpose.msra.mxu0 0.0
        %1491 = vmatprep.subr.mxu0 0.0
        %1492 = vmatpush1.xpose.msra.mxu0 0.0
        %1493 = vmatprep.subr.mxu0 0.0
        %1494 = vmatpush1.xpose.msra.mxu0 0.0
        %1495 = vmatprep.subr.mxu0 0.0
        %1496 = vmatpush1.xpose.msra.mxu0 0.0
        %1497 = vmatprep.subr.mxu0 0.0
        %1498 = vmatpush1.xpose.msra.mxu0 0.0
        %1499 = vmatprep.subr.mxu0 0.0
        %1500 = vmatpush1.xpose.msra.mxu0 0.0
        %1501 = vmatprep.subr.mxu0 0.0
        %1502 = vmatpush1.xpose.msra.mxu0 0.0
        %1503 = vmatprep.subr.mxu0 0.0
        %1504 = vmatpush1.xpose.msra.mxu0 0.0
        %1505 = vmatprep.subr.mxu0 0.0
        %1506 = vmatpush1.xpose.msra.mxu0 0.0
        %1507 = vmatprep.subr.mxu0 0.0
        %1508 = vmatpush1.xpose.msra.mxu0 0.0
        %1509 = vmatprep.subr.mxu0 0.0
        %1510 = vmatpush1.xpose.msra.mxu0 0.0
        %1511 = vmatprep.subr.mxu0 0.0
        %1512 = vmatpush1.xpose.msra.mxu0 0.0
        %1513 = vmatprep.subr.mxu0 0.0
        %1514 = vmatpush1.xpose.msra.mxu0 0.0
        %1515 = vmatprep.subr.mxu0 0.0
        %1516 = vmatpush1.xpose.msra.mxu0 0.0
        %1517 = vmatprep.subr.mxu0 0.0
        %1518 = vmatpush1.xpose.msra.mxu0 0.0
        %1519 = vmatprep.subr.mxu0 0.0
        %1520 = vmatpush1.xpose.msra.mxu0 0.0
        %1521 = vmatprep.subr.mxu0 0.0
        %1522 = vmatpush1.xpose.msra.mxu0 0.0
        %1523 = vmatprep.mubr.f32.mxu0 0.0
        %1524 = vmatmul.mubr.f32.gmra.mrb[0].mxu0 %v1454
        %v1525 = vpop.f32.mrb[0].mxu0
        %v1526 = vadd.f32 0.0, %v1525
        %v1527 = vpop.f32.mrb[0].mxu0
        %1528 = vmatprep.mubr.f32.mxu0 0.0
        %1529 = vmatmul.mubr.f32.gmra.mrb[0].mxu0 %v1457
        %v1530 = vpop.f32.mrb[0].mxu0
        %v1531 = vadd.f32 0.0, %v1530
        %v1532 = vpop.f32.mrb[0].mxu0
        %1533 = vdwg.mxu0
        %v1534 = vmul.f32 %v869, %v869
        %v1535 = vmul.f32 %v870, %v870
        %v1536 = vmul.f32 %v871, %v871
        %v1537 = vmul.f32 %v872, %v872
        %v1538 = vmul.f32 %v873, %v873
        %v1539 = vmul.f32 %v874, %v874
        %v1540 = vmul.f32 %v875, %v875
        %v1541 = vmul.f32 %v876, %v876
        %v1542 = vmul.f32 %v877, %v877
        %v1543 = vmul.f32 %v878, %v878
        %v1544 = vmul.f32 %v879, %v879
        %v1545 = vmul.f32 %v880, %v880
        %v1546 = vmul.f32 %v881, %v881
        %v1547 = vmul.f32 %v882, %v882
        %v1548 = vmul.f32 %v883, %v883
        %v1549 = vmul.f32 %v884, %v884
        %v1550 = vsel %vm885, %v1534, 0.0
        %1551 = vadd.xlane.f32.xlu0 %v1550
        %v1552 = vpop.xlane.xlu0 %1551
        %v1553 = vsel %vm885, %v1535, 0.0
        %1554 = vadd.xlane.f32.xlu0 %v1553
        %v1555 = vpop.xlane.xlu0 %1554
        %v1556 = vsel %vm885, %v1536, 0.0
        %1557 = vadd.xlane.f32.xlu0 %v1556
        %v1558 = vpop.xlane.xlu0 %1557
        %v1559 = vsel %vm885, %v1537, 0.0
        %1560 = vadd.xlane.f32.xlu0 %v1559
        %v1561 = vpop.xlane.xlu0 %1560
        %v1562 = vsel %vm885, %v1538, 0.0
        %1563 = vadd.xlane.f32.xlu0 %v1562
        %v1564 = vpop.xlane.xlu0 %1563
        %v1565 = vsel %vm885, %v1539, 0.0
        %1566 = vadd.xlane.f32.xlu0 %v1565
        %v1567 = vpop.xlane.xlu0 %1566
        %v1568 = vsel %vm885, %v1540, 0.0
        %1569 = vadd.xlane.f32.xlu0 %v1568
        %v1570 = vpop.xlane.xlu0 %1569
        %v1571 = vsel %vm885, %v1541, 0.0
        %1572 = vadd.xlane.f32.xlu0 %v1571
        %v1573 = vpop.xlane.xlu0 %1572
        %v1574 = vsel %vm885, %v1542, 0.0
        %1575 = vadd.xlane.f32.xlu0 %v1574
        %v1576 = vpop.xlane.xlu0 %1575
        %v1577 = vsel %vm885, %v1543, 0.0
        %1578 = vadd.xlane.f32.xlu0 %v1577
        %v1579 = vpop.xlane.xlu0 %1578
        %v1580 = vsel %vm885, %v1544, 0.0
        %1581 = vadd.xlane.f32.xlu0 %v1580
        %v1582 = vpop.xlane.xlu0 %1581
        %v1583 = vsel %vm885, %v1545, 0.0
        %1584 = vadd.xlane.f32.xlu0 %v1583
        %v1585 = vpop.xlane.xlu0 %1584
        %v1586 = vsel %vm885, %v1546, 0.0
        %1587 = vadd.xlane.f32.xlu0 %v1586
        %v1588 = vpop.xlane.xlu0 %1587
        %v1589 = vsel %vm885, %v1547, 0.0
        %1590 = vadd.xlane.f32.xlu0 %v1589
        %v1591 = vpop.xlane.xlu0 %1590
        %v1592 = vsel %vm885, %v1548, 0.0
        %1593 = vadd.xlane.f32.xlu0 %v1592
        %v1594 = vpop.xlane.xlu0 %1593
        %v1595 = vsel %vm885, %v1549, 0.0
        %1596 = vadd.xlane.f32.xlu0 %v1595
        %v1597 = vpop.xlane.xlu0 %1596
        %v1614 = vlaneseq
        %v1615 = vand.u32 %v1614, 127
        %v1616 = vlaneseq
        %v1617 = vshrl.u32 %v1616, 7
        %v1618 = vsub.s32 %v1615, %v1617
        %v1619 = vrot.slane %v1552, %v1618
        %v1620 = vadd.s32 %v1615, 4294967288
        %v1621 = vlaneseq
        %v1622 = vshrl.u32 %v1621, 7
        %v1623 = vsub.s32 %v1620, %v1622
        %v1624 = vrot.slane %v1555, %v1623
        %vm1625 = vcmask 130112
        %v1626 = vsel %vm1625, %v1624, %v1619
        %v1627 = vlaneseq
        %v1628 = vshrl.u32 %v1627, 7
        %v1629 = vsub.s32 %v1615, %v1628
        %v1630 = vrot.slane %v1558, %v1629
        %v1631 = vlaneseq
        %v1632 = vshrl.u32 %v1631, 7
        %v1633 = vsub.s32 %v1620, %v1632
        %v1634 = vrot.slane %v1561, %v1633
        %v1635 = vsel %vm1625, %v1634, %v1630
        %v1636 = vlaneseq
        %v1637 = vshrl.u32 %v1636, 7
        %v1638 = vsub.s32 %v1615, %v1637
        %v1639 = vrot.slane %v1564, %v1638
        %v1640 = vlaneseq
        %v1641 = vshrl.u32 %v1640, 7
        %v1642 = vsub.s32 %v1620, %v1641
        %v1643 = vrot.slane %v1567, %v1642
        %v1644 = vsel %vm1625, %v1643, %v1639
        %v1645 = vlaneseq
        %v1646 = vshrl.u32 %v1645, 7
        %v1647 = vsub.s32 %v1615, %v1646
        %v1648 = vrot.slane %v1570, %v1647
        %v1649 = vlaneseq
        %v1650 = vshrl.u32 %v1649, 7
        %v1651 = vsub.s32 %v1620, %v1650
        %v1652 = vrot.slane %v1573, %v1651
        %v1653 = vsel %vm1625, %v1652, %v1648
        %v1654 = vlaneseq
        %v1655 = vshrl.u32 %v1654, 7
        %v1656 = vsub.s32 %v1615, %v1655
        %v1657 = vrot.slane %v1576, %v1656
        %v1658 = vlaneseq
        %v1659 = vshrl.u32 %v1658, 7
        %v1660 = vsub.s32 %v1620, %v1659
        %v1661 = vrot.slane %v1579, %v1660
        %v1662 = vsel %vm1625, %v1661, %v1657
        %v1663 = vlaneseq
        %v1664 = vshrl.u32 %v1663, 7
        %v1665 = vsub.s32 %v1615, %v1664
        %v1666 = vrot.slane %v1582, %v1665
        %v1667 = vlaneseq
        %v1668 = vshrl.u32 %v1667, 7
        %v1669 = vsub.s32 %v1620, %v1668
        %v1670 = vrot.slane %v1585, %v1669
        %v1671 = vsel %vm1625, %v1670, %v1666
        %v1672 = vlaneseq
        %v1673 = vshrl.u32 %v1672, 7
        %v1674 = vsub.s32 %v1615, %v1673
        %v1675 = vrot.slane %v1588, %v1674
        %v1676 = vlaneseq
        %v1677 = vshrl.u32 %v1676, 7
        %v1678 = vsub.s32 %v1620, %v1677
        %v1679 = vrot.slane %v1591, %v1678
        %v1680 = vsel %vm1625, %v1679, %v1675
        %v1681 = vlaneseq
        %v1682 = vshrl.u32 %v1681, 7
        %v1683 = vsub.s32 %v1615, %v1682
        %v1684 = vrot.slane %v1594, %v1683
        %v1685 = vlaneseq
        %v1686 = vshrl.u32 %v1685, 7
        %v1687 = vsub.s32 %v1620, %v1686
        %v1688 = vrot.slane %v1597, %v1687
        %v1689 = vsel %vm1625, %v1688, %v1684
        %vm1690 = vcmask 1042434
        %v1691 = vsel %vm1690, %v1626, %v1626
        %vm1692 = vcmask 1043459
        %v1693 = vsel %vm1692, %v1626, %v1691
        %vm1694 = vcmask 1044484
        %v1695 = vsel %vm1694, %v1626, %v1693
        %vm1696 = vcmask 1045509
        %v1697 = vsel %vm1696, %v1626, %v1695
        %vm1698 = vcmask 1046534
        %v1699 = vsel %vm1698, %v1626, %v1697
        %vm1700 = vcmask 1047559
        %v1701 = vsel %vm1700, %v1626, %v1699
        %v1702 = vsel %vm1690, %v1635, %v1635
        %v1703 = vsel %vm1692, %v1635, %v1702
        %v1704 = vsel %vm1694, %v1635, %v1703
        %v1705 = vsel %vm1696, %v1635, %v1704
        %v1706 = vsel %vm1698, %v1635, %v1705
        %v1707 = vsel %vm1700, %v1635, %v1706
        %v1708 = vsel %vm1690, %v1644, %v1644
        %v1709 = vsel %vm1692, %v1644, %v1708
        %v1710 = vsel %vm1694, %v1644, %v1709
        %v1711 = vsel %vm1696, %v1644, %v1710
        %v1712 = vsel %vm1698, %v1644, %v1711
        %v1713 = vsel %vm1700, %v1644, %v1712
        %v1714 = vsel %vm1690, %v1653, %v1653
        %v1715 = vsel %vm1692, %v1653, %v1714
        %v1716 = vsel %vm1694, %v1653, %v1715
        %v1717 = vsel %vm1696, %v1653, %v1716
        %v1718 = vsel %vm1698, %v1653, %v1717
        %v1719 = vsel %vm1700, %v1653, %v1718
        %v1720 = vsel %vm1690, %v1662, %v1662
        %v1721 = vsel %vm1692, %v1662, %v1720
        %v1722 = vsel %vm1694, %v1662, %v1721
        %v1723 = vsel %vm1696, %v1662, %v1722
        %v1724 = vsel %vm1698, %v1662, %v1723
        %v1725 = vsel %vm1700, %v1662, %v1724
        %v1726 = vsel %vm1690, %v1671, %v1671
        %v1727 = vsel %vm1692, %v1671, %v1726
        %v1728 = vsel %vm1694, %v1671, %v1727
        %v1729 = vsel %vm1696, %v1671, %v1728
        %v1730 = vsel %vm1698, %v1671, %v1729
        %v1731 = vsel %vm1700, %v1671, %v1730
        %v1732 = vsel %vm1690, %v1680, %v1680
        %v1733 = vsel %vm1692, %v1680, %v1732
        %v1734 = vsel %vm1694, %v1680, %v1733
        %v1735 = vsel %vm1696, %v1680, %v1734
        %v1736 = vsel %vm1698, %v1680, %v1735
        %v1737 = vsel %vm1700, %v1680, %v1736
        %v1738 = vsel %vm1690, %v1689, %v1689
        %v1739 = vsel %vm1692, %v1689, %v1738
        %v1740 = vsel %vm1694, %v1689, %v1739
        %v1741 = vsel %vm1696, %v1689, %v1740
        %v1742 = vsel %vm1698, %v1689, %v1741
        %v1743 = vsel %vm1700, %v1689, %v1742
        %v1752 = vadd.f32 %v1552, %v1701
        %v1753 = vadd.f32 %v1555, %v1701
        %v1754 = vadd.f32 %v1558, %v1707
        %v1755 = vadd.f32 %v1561, %v1707
        %v1756 = vadd.f32 %v1564, %v1713
        %v1757 = vadd.f32 %v1567, %v1713
        %v1758 = vadd.f32 %v1570, %v1719
        %v1759 = vadd.f32 %v1573, %v1719
        %v1760 = vadd.f32 %v1576, %v1725
        %v1761 = vadd.f32 %v1579, %v1725
        %v1762 = vadd.f32 %v1582, %v1731
        %v1763 = vadd.f32 %v1585, %v1731
        %v1764 = vadd.f32 %v1588, %v1737
        %v1765 = vadd.f32 %v1591, %v1737
        %v1766 = vadd.f32 %v1594, %v1743
        %v1767 = vadd.f32 %v1597, %v1743
        %v1768 = vmul.f32 %v959, 2.0
        %v1769 = vmul.f32 %v964, 2.0
        %v1770 = vmul.f32 %v1040, 2.0
        %v1771 = vmul.f32 %v1045, 2.0
        %v1772 = vmul.f32 %v1121, 2.0
        %v1773 = vmul.f32 %v1126, 2.0
        %v1774 = vmul.f32 %v1202, 2.0
        %v1775 = vmul.f32 %v1207, 2.0
        %v1776 = vmul.f32 %v1283, 2.0
        %v1777 = vmul.f32 %v1288, 2.0
        %v1778 = vmul.f32 %v1364, 2.0
        %v1779 = vmul.f32 %v1369, 2.0
        %v1780 = vmul.f32 %v1445, 2.0
        %v1781 = vmul.f32 %v1450, 2.0
        %v1782 = vmul.f32 %v1526, 2.0
        %v1783 = vmul.f32 %v1531, 2.0
        %v1784 = vsub.f32 %v1752, %v1768
        %v1785 = vsub.f32 %v1753, %v1769
        %v1786 = vsub.f32 %v1754, %v1770
        %v1787 = vsub.f32 %v1755, %v1771
        %v1788 = vsub.f32 %v1756, %v1772
        %v1789 = vsub.f32 %v1757, %v1773
        %v1790 = vsub.f32 %v1758, %v1774
        %v1791 = vsub.f32 %v1759, %v1775
        %v1792 = vsub.f32 %v1760, %v1776
        %v1793 = vsub.f32 %v1761, %v1777
        %v1794 = vsub.f32 %v1762, %v1778
        %v1795 = vsub.f32 %v1763, %v1779
        %v1796 = vsub.f32 %v1764, %v1780
        %v1797 = vsub.f32 %v1765, %v1781
        %v1798 = vsub.f32 %v1766, %v1782
        %v1799 = vsub.f32 %v1767, %v1783
        %v1800 = vmax.f32 %v1784, 0.0
        %v1801 = vmax.f32 %v1785, 0.0
        %v1802 = vmax.f32 %v1786, 0.0
        %v1803 = vmax.f32 %v1787, 0.0
        %v1804 = vmax.f32 %v1788, 0.0
        %v1805 = vmax.f32 %v1789, 0.0
        %v1806 = vmax.f32 %v1790, 0.0
        %v1807 = vmax.f32 %v1791, 0.0
        %v1808 = vmax.f32 %v1792, 0.0
        %v1809 = vmax.f32 %v1793, 0.0
        %v1810 = vmax.f32 %v1794, 0.0
        %v1811 = vmax.f32 %v1795, 0.0
        %v1812 = vmax.f32 %v1796, 0.0
        %v1813 = vmax.f32 %v1797, 0.0
        %v1814 = vmax.f32 %v1798, 0.0
        %v1815 = vmax.f32 %v1799, 0.0
        %v1816 = vlaneseq
        %v1817 = vshrl.u32 %v1816, 7
        %v1818 = vadd.s32 %v1817, 8
        %v1835 = vshra.s32 %v1800, 4
        %v1836 = vshra.s32 %v1801, 4
        %v1837 = vshra.s32 %v1802, 4
        %v1838 = vshra.s32 %v1803, 4
        %v1839 = vshra.s32 %v1804, 4
        %v1840 = vshra.s32 %v1805, 4
        %v1841 = vshra.s32 %v1806, 4
        %v1842 = vshra.s32 %v1807, 4
        %v1843 = vshra.s32 %v1808, 4
        %v1844 = vshra.s32 %v1809, 4
        %v1845 = vshra.s32 %v1810, 4
        %v1846 = vshra.s32 %v1811, 4
        %v1847 = vshra.s32 %v1812, 4
        %v1848 = vshra.s32 %v1813, 4
        %v1849 = vshra.s32 %v1814, 4
        %v1850 = vshra.s32 %v1815, 4
        %v1851 = vshll.u32 %v1835, 4
        %v1852 = vshll.u32 %v1836, 4
        %v1853 = vshll.u32 %v1837, 4
        %v1854 = vshll.u32 %v1838, 4
        %v1855 = vshll.u32 %v1839, 4
        %v1856 = vshll.u32 %v1840, 4
        %v1857 = vshll.u32 %v1841, 4
        %v1858 = vshll.u32 %v1842, 4
        %v1859 = vshll.u32 %v1843, 4
        %v1860 = vshll.u32 %v1844, 4
        %v1861 = vshll.u32 %v1845, 4
        %v1862 = vshll.u32 %v1846, 4
        %v1863 = vshll.u32 %v1847, 4
        %v1864 = vshll.u32 %v1848, 4
        %v1865 = vshll.u32 %v1849, 4
        %v1866 = vshll.u32 %v1850, 4
        %v1867 = vor.u32 %v1851, %v1615
        %v1868 = vor.u32 %v1852, %v1615
        %v1869 = vor.u32 %v1853, %v1615
        %v1870 = vor.u32 %v1854, %v1615
        %v1871 = vor.u32 %v1855, %v1615
        %v1872 = vor.u32 %v1856, %v1615
        %v1873 = vor.u32 %v1857, %v1615
        %v1874 = vor.u32 %v1858, %v1615
        %v1875 = vor.u32 %v1859, %v1615
        %v1876 = vor.u32 %v1860, %v1615
        %v1877 = vor.u32 %v1861, %v1615
        %v1878 = vor.u32 %v1862, %v1615
        %v1879 = vor.u32 %v1863, %v1615
        %v1880 = vor.u32 %v1864, %v1615
        %v1881 = vor.u32 %v1865, %v1615
        %v1882 = vor.u32 %v1866, %v1615
        %vm1883 = vcmp.eq.s32.totalorder %v1817, %v1615
        %vm1884 = vcmp.eq.s32.totalorder %v1818, %v1615
        %v1885 = vsel %vm1883, 2139095040, %v1867
        %v1886 = vsel %vm1884, 2139095040, %v1868
        %v1887 = vsel %vm1883, 2139095040, %v1869
        %v1888 = vsel %vm1884, 2139095040, %v1870
        %v1889 = vsel %vm1883, 2139095040, %v1871
        %v1890 = vsel %vm1884, 2139095040, %v1872
        %v1891 = vsel %vm1883, 2139095040, %v1873
        %v1892 = vsel %vm1884, 2139095040, %v1874
        %v1893 = vsel %vm1883, 2139095040, %v1875
        %v1894 = vsel %vm1884, 2139095040, %v1876
        %v1895 = vsel %vm1883, 2139095040, %v1877
        %v1896 = vsel %vm1884, 2139095040, %v1878
        %v1897 = vsel %vm1883, 2139095040, %v1879
        %v1898 = vsel %vm1884, 2139095040, %v1880
        %v1899 = vsel %vm1883, 2139095040, %v1881
        %v1900 = vsel %vm1884, 2139095040, %v1882
        %v1901 = vld [vmem:[#allocation10] sm:$0x3]
        %vm1902 = vcmask 31744
        %v1904 = vsel %vm1902, %v861, 0
        %v1907 = vsel %vm1902, %v862, 0
        %v1910 = vsel %vm1902, %v863, 0
        %v1913 = vsel %vm1902, %v864, 0
        %v1916 = vsel %vm1902, %v865, 0
        %v1919 = vsel %vm1902, %v866, 0
        %v1922 = vsel %vm1902, %v867, 0
        %v1925 = vsel %vm1902, %v868, 0
        %vm1927 = vcmask 1041408
        %v1929 = vsel %vm1927, %v1901, 0
        %1931 = vmatprep.subr.bf16.mxu0 0
        %1932 = vmatpush1.bf16.msra.mxu0 %v1929
        %1933 = vmatprep.subr.bf16.mxu0 0
        %1934 = vmatpush1.bf16.msra.mxu0 0
        %1935 = vmatprep.subr.bf16.mxu0 0
        %1936 = vmatpush1.bf16.msra.mxu0 0
        %1937 = vmatprep.subr.bf16.mxu0 0
        %1938 = vmatpush1.bf16.msra.mxu0 0
        %1939 = vmatprep.subr.bf16.mxu0 0
        %1940 = vmatpush1.bf16.msra.mxu0 0
        %1941 = vmatprep.subr.bf16.mxu0 0
        %1942 = vmatpush1.bf16.msra.mxu0 0
        %1943 = vmatprep.subr.bf16.mxu0 0
        %1944 = vmatpush1.bf16.msra.mxu0 0
        %1945 = vmatprep.subr.bf16.mxu0 0
        %1946 = vmatpush1.bf16.msra.mxu0 0
        %1947 = vmatprep.subr.bf16.mxu0 0
        %1948 = vmatpush1.bf16.msra.mxu0 0
        %1949 = vmatprep.subr.bf16.mxu0 0
        %1950 = vmatpush1.bf16.msra.mxu0 0
        %1951 = vmatprep.subr.bf16.mxu0 0
        %1952 = vmatpush1.bf16.msra.mxu0 0
        %1953 = vmatprep.subr.bf16.mxu0 0
        %1954 = vmatpush1.bf16.msra.mxu0 0
        %1955 = vmatprep.subr.bf16.mxu0 0
        %1956 = vmatpush1.bf16.msra.mxu0 0
        %1957 = vmatprep.subr.bf16.mxu0 0
        %1958 = vmatpush1.bf16.msra.mxu0 0
        %1959 = vmatprep.subr.bf16.mxu0 0
        %1960 = vmatpush1.bf16.msra.mxu0 0
        %1961 = vmatprep.subr.bf16.mxu0 0
        %1962 = vmatpush1.bf16.msra.mxu0 0
        %1963 = vmatprep.mubr.bf16.mxu0 0
        %1964 = vmatmul.mubr.bf16.gmra.mrb[0].mxu0 %v1904
        %v1965 = vpop.f32.mrb[0].mxu0
        %v1966 = vadd.f32 0.0, %v1965
        %v1967 = vpop.f32.mrb[0].mxu0
        %v1968 = vpop.f32.mrb[0].mxu0
        %v1969 = vadd.f32 0.0, %v1968
        %v1970 = vpop.f32.mrb[0].mxu0
        %1971 = vmatprep.mubr.bf16.mxu0 0
        %1972 = vmatmul.mubr.bf16.gmra.mrb[0].mxu0 %v1907
        %v1973 = vpop.f32.mrb[0].mxu0
        %v1974 = vadd.f32 0.0, %v1973
        %v1975 = vpop.f32.mrb[0].mxu0
        %v1976 = vpop.f32.mrb[0].mxu0
        %v1977 = vadd.f32 0.0, %v1976
        %v1978 = vpop.f32.mrb[0].mxu0
        %1979 = vmatprep.mubr.bf16.mxu0 0
        %1980 = vmatmul.mubr.bf16.gmra.mrb[0].mxu0 %v1910
        %v1981 = vpop.f32.mrb[0].mxu0
        %v1982 = vadd.f32 0.0, %v1981
        %v1983 = vpop.f32.mrb[0].mxu0
        %v1984 = vpop.f32.mrb[0].mxu0
        %v1985 = vadd.f32 0.0, %v1984
        %v1986 = vpop.f32.mrb[0].mxu0
        %1987 = vmatprep.mubr.bf16.mxu0 0
        %1988 = vmatmul.mubr.bf16.gmra.mrb[0].mxu0 %v1913
        %v1989 = vpop.f32.mrb[0].mxu0
        %v1990 = vadd.f32 0.0, %v1989
        %v1991 = vpop.f32.mrb[0].mxu0
        %v1992 = vpop.f32.mrb[0].mxu0
        %v1993 = vadd.f32 0.0, %v1992
        %v1994 = vpop.f32.mrb[0].mxu0
        %1995 = vmatprep.mubr.bf16.mxu0 0
        %1996 = vmatmul.mubr.bf16.gmra.mrb[0].mxu0 %v1916
        %v1997 = vpop.f32.mrb[0].mxu0
        %v1998 = vadd.f32 0.0, %v1997
        %v1999 = vpop.f32.mrb[0].mxu0
        %v2000 = vpop.f32.mrb[0].mxu0
        %v2001 = vadd.f32 0.0, %v2000
        %v2002 = vpop.f32.mrb[0].mxu0
        %2003 = vmatprep.mubr.bf16.mxu0 0
        %2004 = vmatmul.mubr.bf16.gmra.mrb[0].mxu0 %v1919
        %v2005 = vpop.f32.mrb[0].mxu0
        %v2006 = vadd.f32 0.0, %v2005
        %v2007 = vpop.f32.mrb[0].mxu0
        %v2008 = vpop.f32.mrb[0].mxu0
        %v2009 = vadd.f32 0.0, %v2008
        %v2010 = vpop.f32.mrb[0].mxu0
        %2011 = vmatprep.mubr.bf16.mxu0 0
        %2012 = vmatmul.mubr.bf16.gmra.mrb[0].mxu0 %v1922
        %v2013 = vpop.f32.mrb[0].mxu0
        %v2014 = vadd.f32 0.0, %v2013
        %v2015 = vpop.f32.mrb[0].mxu0
        %v2016 = vpop.f32.mrb[0].mxu0
        %v2017 = vadd.f32 0.0, %v2016
        %v2018 = vpop.f32.mrb[0].mxu0
        %2019 = vmatprep.mubr.bf16.mxu0 0
        %2020 = vmatmul.mubr.bf16.gmra.mrb[0].mxu0 %v1925
        %v2021 = vpop.f32.mrb[0].mxu0
        %v2022 = vadd.f32 0.0, %v2021
        %v2023 = vpop.f32.mrb[0].mxu0
        %v2024 = vpop.f32.mrb[0].mxu0
        %v2025 = vadd.f32 0.0, %v2024
        %v2026 = vpop.f32.mrb[0].mxu0
        %2027 = vdwg.mxu0
        %v2028 = vld [vmem:[#allocation11] sm:$0x3]
        %v2030 = vsel %vm1927, %v2028, 0
        %2032 = vmatprep.subr.bf16.mxu0 0
        %2033 = vmatpush1.bf16.msra.mxu0 %v2030
        %2034 = vmatprep.subr.bf16.mxu0 0
        %2035 = vmatpush1.bf16.msra.mxu0 0
        %2036 = vmatprep.subr.bf16.mxu0 0
        %2037 = vmatpush1.bf16.msra.mxu0 0
        %2038 = vmatprep.subr.bf16.mxu0 0
        %2039 = vmatpush1.bf16.msra.mxu0 0
        %2040 = vmatprep.subr.bf16.mxu0 0
        %2041 = vmatpush1.bf16.msra.mxu0 0
        %2042 = vmatprep.subr.bf16.mxu0 0
        %2043 = vmatpush1.bf16.msra.mxu0 0
        %2044 = vmatprep.subr.bf16.mxu0 0
        %2045 = vmatpush1.bf16.msra.mxu0 0
        %2046 = vmatprep.subr.bf16.mxu0 0
        %2047 = vmatpush1.bf16.msra.mxu0 0
        %2048 = vmatprep.subr.bf16.mxu0 0
        %2049 = vmatpush1.bf16.msra.mxu0 0
        %2050 = vmatprep.subr.bf16.mxu0 0
        %2051 = vmatpush1.bf16.msra.mxu0 0
        %2052 = vmatprep.subr.bf16.mxu0 0
        %2053 = vmatpush1.bf16.msra.mxu0 0
        %2054 = vmatprep.subr.bf16.mxu0 0
        %2055 = vmatpush1.bf16.msra.mxu0 0
        %2056 = vmatprep.subr.bf16.mxu0 0
        %2057 = vmatpush1.bf16.msra.mxu0 0
        %2058 = vmatprep.subr.bf16.mxu0 0
        %2059 = vmatpush1.bf16.msra.mxu0 0
        %2060 = vmatprep.subr.bf16.mxu0 0
        %2061 = vmatpush1.bf16.msra.mxu0 0
        %2062 = vmatprep.subr.bf16.mxu0 0
        %2063 = vmatpush1.bf16.msra.mxu0 0
        %2064 = vmatprep.mubr.bf16.mxu0 0
        %2065 = vmatmul.mubr.bf16.gmra.mrb[0].mxu0 %v1904
        %v2066 = vpop.f32.mrb[0].mxu0
        %v2067 = vadd.f32 0.0, %v2066
        %v2068 = vpop.f32.mrb[0].mxu0
        %v2069 = vpop.f32.mrb[0].mxu0
        %v2070 = vadd.f32 0.0, %v2069
        %v2071 = vpop.f32.mrb[0].mxu0
        %2072 = vmatprep.mubr.bf16.mxu0 0
        %2073 = vmatmul.mubr.bf16.gmra.mrb[0].mxu0 %v1907
        %v2074 = vpop.f32.mrb[0].mxu0
        %v2075 = vadd.f32 0.0, %v2074
        %v2076 = vpop.f32.mrb[0].mxu0
        %v2077 = vpop.f32.mrb[0].mxu0
        %v2078 = vadd.f32 0.0, %v2077
        %v2079 = vpop.f32.mrb[0].mxu0
        %2080 = vmatprep.mubr.bf16.mxu0 0
        %2081 = vmatmul.mubr.bf16.gmra.mrb[0].mxu0 %v1910
        %v2082 = vpop.f32.mrb[0].mxu0
        %v2083 = vadd.f32 0.0, %v2082
        %v2084 = vpop.f32.mrb[0].mxu0
        %v2085 = vpop.f32.mrb[0].mxu0
        %v2086 = vadd.f32 0.0, %v2085
        %v2087 = vpop.f32.mrb[0].mxu0
        %2088 = vmatprep.mubr.bf16.mxu0 0
        %2089 = vmatmul.mubr.bf16.gmra.mrb[0].mxu0 %v1913
        %v2090 = vpop.f32.mrb[0].mxu0
        %v2091 = vadd.f32 0.0, %v2090
        %v2092 = vpop.f32.mrb[0].mxu0
        %v2093 = vpop.f32.mrb[0].mxu0
        %v2094 = vadd.f32 0.0, %v2093
        %v2095 = vpop.f32.mrb[0].mxu0
        %2096 = vmatprep.mubr.bf16.mxu0 0
        %2097 = vmatmul.mubr.bf16.gmra.mrb[0].mxu0 %v1916
        %v2098 = vpop.f32.mrb[0].mxu0
        %v2099 = vadd.f32 0.0, %v2098
        %v2100 = vpop.f32.mrb[0].mxu0
        %v2101 = vpop.f32.mrb[0].mxu0
        %v2102 = vadd.f32 0.0, %v2101
        %v2103 = vpop.f32.mrb[0].mxu0
        %2104 = vmatprep.mubr.bf16.mxu0 0
        %2105 = vmatmul.mubr.bf16.gmra.mrb[0].mxu0 %v1919
        %v2106 = vpop.f32.mrb[0].mxu0
        %v2107 = vadd.f32 0.0, %v2106
        %v2108 = vpop.f32.mrb[0].mxu0
        %v2109 = vpop.f32.mrb[0].mxu0
        %v2110 = vadd.f32 0.0, %v2109
        %v2111 = vpop.f32.mrb[0].mxu0
        %2112 = vmatprep.mubr.bf16.mxu0 0
        %2113 = vmatmul.mubr.bf16.gmra.mrb[0].mxu0 %v1922
        %v2114 = vpop.f32.mrb[0].mxu0
        %v2115 = vadd.f32 0.0, %v2114
        %v2116 = vpop.f32.mrb[0].mxu0
        %v2117 = vpop.f32.mrb[0].mxu0
        %v2118 = vadd.f32 0.0, %v2117
        %v2119 = vpop.f32.mrb[0].mxu0
        %2120 = vmatprep.mubr.bf16.mxu0 0
        %2121 = vmatmul.mubr.bf16.gmra.mrb[0].mxu0 %v1925
        %v2122 = vpop.f32.mrb[0].mxu0
        %v2123 = vadd.f32 0.0, %v2122
        %v2124 = vpop.f32.mrb[0].mxu0
        %v2125 = vpop.f32.mrb[0].mxu0
        %v2126 = vadd.f32 0.0, %v2125
        %v2127 = vpop.f32.mrb[0].mxu0
        %2128 = vdwg.mxu0
        %v2129 = vpack.c.bf16 %v2070, %v2067
        %v2130 = vpack.c.bf16 %v2078, %v2075
        %v2131 = vpack.c.bf16 %v2086, %v2083
        %v2132 = vpack.c.bf16 %v2094, %v2091
        %v2133 = vpack.c.bf16 %v2102, %v2099
        %v2134 = vpack.c.bf16 %v2110, %v2107
        %v2135 = vpack.c.bf16 %v2118, %v2115
        %v2136 = vpack.c.bf16 %v2126, %v2123
        %v2137 = vunpack.c.l.bf16 %v2129
        %v2138 = vunpack.c.h.bf16 %v2129
        %v2139 = vunpack.c.l.bf16 %v2130
        %v2140 = vunpack.c.h.bf16 %v2130
        %v2141 = vunpack.c.l.bf16 %v2131
        %v2142 = vunpack.c.h.bf16 %v2131
        %v2143 = vunpack.c.l.bf16 %v2132
        %v2144 = vunpack.c.h.bf16 %v2132
        %v2145 = vunpack.c.l.bf16 %v2133
        %v2146 = vunpack.c.h.bf16 %v2133
        %v2147 = vunpack.c.l.bf16 %v2134
        %v2148 = vunpack.c.h.bf16 %v2134
        %v2149 = vunpack.c.l.bf16 %v2135
        %v2150 = vunpack.c.h.bf16 %v2135
        %v2151 = vunpack.c.l.bf16 %v2136
        %v2152 = vunpack.c.h.bf16 %v2136
        %v2153 = vsub.f32 %v1966, %v2137
        %v2154 = vsub.f32 %v1969, %v2138
        %v2155 = vsub.f32 %v1974, %v2139
        %v2156 = vsub.f32 %v1977, %v2140
        %v2157 = vsub.f32 %v1982, %v2141
        %v2158 = vsub.f32 %v1985, %v2142
        %v2159 = vsub.f32 %v1990, %v2143
        %v2160 = vsub.f32 %v1993, %v2144
        %v2161 = vsub.f32 %v1998, %v2145
        %v2162 = vsub.f32 %v2001, %v2146
        %v2163 = vsub.f32 %v2006, %v2147
        %v2164 = vsub.f32 %v2009, %v2148
        %v2165 = vsub.f32 %v2014, %v2149
        %v2166 = vsub.f32 %v2017, %v2150
        %v2167 = vsub.f32 %v2022, %v2151
        %v2168 = vsub.f32 %v2025, %v2152
        %v2169 = vld [vmem:[#allocation13] sm:$0x1]
        %v2170 = vld [vmem:[#allocation14] sm:$0x1]
        %v2171 = vld [vmem:[#allocation17] sm:$0x1]
        %v2172 = vld [vmem:[#allocation19] sm:$0x1]
        %v2173 = vld [vmem:[#allocation22] sm:$0x1]
        %v2174 = vld [vmem:[#allocation23] sm:$0x1]
        %v2175 = vld [vmem:[#allocation16] sm:$0xf]
        %v2176 = vld [vmem:[#allocation20] sm:$0xf]
        %vm2177 = vcmask 130048
        %v2178 = vsel %vm2177, %v1885, 2147483647
        %v2179 = vand.u32 %v2178, 65535
        %v2180 = vshra.s32 %v2178, 16
        %v2181 = vcvt.s32.f32 %v2179
        %v2182 = vcvt.s32.f32 %v2180
        %2183 = vmin.xlane.f32.xlu0 %v2182
        %v2184 = vpop.xlane.xlu0 %2183
        %vm2185 = vcmp.eq.f32.partialorder %v2182, %v2184
        %v2186 = vsel %vm2185, %v2181, inf
        %2187 = vmin.xlane.f32.xlu0 %v2186
        %v2188 = vpop.xlane.xlu0 %2187
        %v2189 = vcvt.f32.s32 %v2188
        %v2190 = vcvt.f32.s32 %v2184
        %v2191 = vshll.u32 %v2190, 16
        %v2192 = vadd.s32 %v2191, %v2189
        %v2193 = vsel %vm2177, %v1886, 2147483647
        %v2194 = vand.u32 %v2193, 65535
        %v2195 = vshra.s32 %v2193, 16
        %v2196 = vcvt.s32.f32 %v2194
        %v2197 = vcvt.s32.f32 %v2195
        %2198 = vmin.xlane.f32.xlu0 %v2197
        %v2199 = vpop.xlane.xlu0 %2198
        %vm2200 = vcmp.eq.f32.partialorder %v2197, %v2199
        %v2201 = vsel %vm2200, %v2196, inf
        %2202 = vmin.xlane.f32.xlu0 %v2201
        %v2203 = vpop.xlane.xlu0 %2202
        %v2204 = vcvt.f32.s32 %v2203
        %v2205 = vcvt.f32.s32 %v2199
        %v2206 = vshll.u32 %v2205, 16
        %v2207 = vadd.s32 %v2206, %v2204
        %v2208 = vsel %vm2177, %v1887, 2147483647
        %v2209 = vand.u32 %v2208, 65535
        %v2210 = vshra.s32 %v2208, 16
        %v2211 = vcvt.s32.f32 %v2209
        %v2212 = vcvt.s32.f32 %v2210
        %2213 = vmin.xlane.f32.xlu0 %v2212
        %v2214 = vpop.xlane.xlu0 %2213
        %vm2215 = vcmp.eq.f32.partialorder %v2212, %v2214
        %v2216 = vsel %vm2215, %v2211, inf
        %2217 = vmin.xlane.f32.xlu0 %v2216
        %v2218 = vpop.xlane.xlu0 %2217
        %v2219 = vcvt.f32.s32 %v2218
        %v2220 = vcvt.f32.s32 %v2214
        %v2221 = vshll.u32 %v2220, 16
        %v2222 = vadd.s32 %v2221, %v2219
        %v2223 = vsel %vm2177, %v1888, 2147483647
        %v2224 = vand.u32 %v2223, 65535
        %v2225 = vshra.s32 %v2223, 16
        %v2226 = vcvt.s32.f32 %v2224
        %v2227 = vcvt.s32.f32 %v2225
        %2228 = vmin.xlane.f32.xlu0 %v2227
        %v2229 = vpop.xlane.xlu0 %2228
        %vm2230 = vcmp.eq.f32.partialorder %v2227, %v2229
        %v2231 = vsel %vm2230, %v2226, inf
        %2232 = vmin.xlane.f32.xlu0 %v2231
        %v2233 = vpop.xlane.xlu0 %2232
        %v2234 = vcvt.f32.s32 %v2233
        %v2235 = vcvt.f32.s32 %v2229
        %v2236 = vshll.u32 %v2235, 16
        %v2237 = vadd.s32 %v2236, %v2234
        %v2238 = vsel %vm2177, %v1889, 2147483647
        %v2239 = vand.u32 %v2238, 65535
        %v2240 = vshra.s32 %v2238, 16
        %v2241 = vcvt.s32.f32 %v2239
        %v2242 = vcvt.s32.f32 %v2240
        %2243 = vmin.xlane.f32.xlu0 %v2242
        %v2244 = vpop.xlane.xlu0 %2243
        %vm2245 = vcmp.eq.f32.partialorder %v2242, %v2244
        %v2246 = vsel %vm2245, %v2241, inf
        %2247 = vmin.xlane.f32.xlu0 %v2246
        %v2248 = vpop.xlane.xlu0 %2247
        %v2249 = vcvt.f32.s32 %v2248
        %v2250 = vcvt.f32.s32 %v2244
        %v2251 = vshll.u32 %v2250, 16
        %v2252 = vadd.s32 %v2251, %v2249
        %v2253 = vsel %vm2177, %v1890, 2147483647
        %v2254 = vand.u32 %v2253, 65535
        %v2255 = vshra.s32 %v2253, 16
        %v2256 = vcvt.s32.f32 %v2254
        %v2257 = vcvt.s32.f32 %v2255
        %2258 = vmin.xlane.f32.xlu0 %v2257
        %v2259 = vpop.xlane.xlu0 %2258
        %vm2260 = vcmp.eq.f32.partialorder %v2257, %v2259
        %v2261 = vsel %vm2260, %v2256, inf
        %2262 = vmin.xlane.f32.xlu0 %v2261
        %v2263 = vpop.xlane.xlu0 %2262
        %v2264 = vcvt.f32.s32 %v2263
        %v2265 = vcvt.f32.s32 %v2259
        %v2266 = vshll.u32 %v2265, 16
        %v2267 = vadd.s32 %v2266, %v2264
        %v2268 = vsel %vm2177, %v1891, 2147483647
        %v2269 = vand.u32 %v2268, 65535
        %v2270 = vshra.s32 %v2268, 16
        %v2271 = vcvt.s32.f32 %v2269
        %v2272 = vcvt.s32.f32 %v2270
        %2273 = vmin.xlane.f32.xlu0 %v2272
        %v2274 = vpop.xlane.xlu0 %2273
        %vm2275 = vcmp.eq.f32.partialorder %v2272, %v2274
        %v2276 = vsel %vm2275, %v2271, inf
        %2277 = vmin.xlane.f32.xlu0 %v2276
        %v2278 = vpop.xlane.xlu0 %2277
        %v2279 = vcvt.f32.s32 %v2278
        %v2280 = vcvt.f32.s32 %v2274
        %v2281 = vshll.u32 %v2280, 16
        %v2282 = vadd.s32 %v2281, %v2279
        %v2283 = vsel %vm2177, %v1892, 2147483647
        %v2284 = vand.u32 %v2283, 65535
        %v2285 = vshra.s32 %v2283, 16
        %v2286 = vcvt.s32.f32 %v2284
        %v2287 = vcvt.s32.f32 %v2285
        %2288 = vmin.xlane.f32.xlu0 %v2287
        %v2289 = vpop.xlane.xlu0 %2288
        %vm2290 = vcmp.eq.f32.partialorder %v2287, %v2289
        %v2291 = vsel %vm2290, %v2286, inf
        %2292 = vmin.xlane.f32.xlu0 %v2291
        %v2293 = vpop.xlane.xlu0 %2292
        %v2294 = vcvt.f32.s32 %v2293
        %v2295 = vcvt.f32.s32 %v2289
        %v2296 = vshll.u32 %v2295, 16
        %v2297 = vadd.s32 %v2296, %v2294
        %v2298 = vsel %vm2177, %v1893, 2147483647
        %v2299 = vand.u32 %v2298, 65535
        %v2300 = vshra.s32 %v2298, 16
        %v2301 = vcvt.s32.f32 %v2299
        %v2302 = vcvt.s32.f32 %v2300
        %2303 = vmin.xlane.f32.xlu0 %v2302
        %v2304 = vpop.xlane.xlu0 %2303
        %vm2305 = vcmp.eq.f32.partialorder %v2302, %v2304
        %v2306 = vsel %vm2305, %v2301, inf
        %2307 = vmin.xlane.f32.xlu0 %v2306
        %v2308 = vpop.xlane.xlu0 %2307
        %v2309 = vcvt.f32.s32 %v2308
        %v2310 = vcvt.f32.s32 %v2304
        %v2311 = vshll.u32 %v2310, 16
        %v2312 = vadd.s32 %v2311, %v2309
        %v2313 = vsel %vm2177, %v1894, 2147483647
        %v2314 = vand.u32 %v2313, 65535
        %v2315 = vshra.s32 %v2313, 16
        %v2316 = vcvt.s32.f32 %v2314
        %v2317 = vcvt.s32.f32 %v2315
        %2318 = vmin.xlane.f32.xlu0 %v2317
        %v2319 = vpop.xlane.xlu0 %2318
        %vm2320 = vcmp.eq.f32.partialorder %v2317, %v2319
        %v2321 = vsel %vm2320, %v2316, inf
        %2322 = vmin.xlane.f32.xlu0 %v2321
        %v2323 = vpop.xlane.xlu0 %2322
        %v2324 = vcvt.f32.s32 %v2323
        %v2325 = vcvt.f32.s32 %v2319
        %v2326 = vshll.u32 %v2325, 16
        %v2327 = vadd.s32 %v2326, %v2324
        %v2328 = vsel %vm2177, %v1895, 2147483647
        %v2329 = vand.u32 %v2328, 65535
        %v2330 = vshra.s32 %v2328, 16
        %v2331 = vcvt.s32.f32 %v2329
        %v2332 = vcvt.s32.f32 %v2330
        %2333 = vmin.xlane.f32.xlu0 %v2332
        %v2334 = vpop.xlane.xlu0 %2333
        %vm2335 = vcmp.eq.f32.partialorder %v2332, %v2334
        %v2336 = vsel %vm2335, %v2331, inf
        %2337 = vmin.xlane.f32.xlu0 %v2336
        %v2338 = vpop.xlane.xlu0 %2337
        %v2339 = vcvt.f32.s32 %v2338
        %v2340 = vcvt.f32.s32 %v2334
        %v2341 = vshll.u32 %v2340, 16
        %v2342 = vadd.s32 %v2341, %v2339
        %v2343 = vsel %vm2177, %v1896, 2147483647
        %v2344 = vand.u32 %v2343, 65535
        %v2345 = vshra.s32 %v2343, 16
        %v2346 = vcvt.s32.f32 %v2344
        %v2347 = vcvt.s32.f32 %v2345
        %2348 = vmin.xlane.f32.xlu0 %v2347
        %v2349 = vpop.xlane.xlu0 %2348
        %vm2350 = vcmp.eq.f32.partialorder %v2347, %v2349
        %v2351 = vsel %vm2350, %v2346, inf
        %2352 = vmin.xlane.f32.xlu0 %v2351
        %v2353 = vpop.xlane.xlu0 %2352
        %v2354 = vcvt.f32.s32 %v2353
        %v2355 = vcvt.f32.s32 %v2349
        %v2356 = vshll.u32 %v2355, 16
        %v2357 = vadd.s32 %v2356, %v2354
        %v2358 = vsel %vm2177, %v1897, 2147483647
        %v2359 = vand.u32 %v2358, 65535
        %v2360 = vshra.s32 %v2358, 16
        %v2361 = vcvt.s32.f32 %v2359
        %v2362 = vcvt.s32.f32 %v2360
        %2363 = vmin.xlane.f32.xlu0 %v2362
        %v2364 = vpop.xlane.xlu0 %2363
        %vm2365 = vcmp.eq.f32.partialorder %v2362, %v2364
        %v2366 = vsel %vm2365, %v2361, inf
        %2367 = vmin.xlane.f32.xlu0 %v2366
        %v2368 = vpop.xlane.xlu0 %2367
        %v2369 = vcvt.f32.s32 %v2368
        %v2370 = vcvt.f32.s32 %v2364
        %v2371 = vshll.u32 %v2370, 16
        %v2372 = vadd.s32 %v2371, %v2369
        %v2373 = vsel %vm2177, %v1898, 2147483647
        %v2374 = vand.u32 %v2373, 65535
        %v2375 = vshra.s32 %v2373, 16
        %v2376 = vcvt.s32.f32 %v2374
        %v2377 = vcvt.s32.f32 %v2375
        %2378 = vmin.xlane.f32.xlu0 %v2377
        %v2379 = vpop.xlane.xlu0 %2378
        %vm2380 = vcmp.eq.f32.partialorder %v2377, %v2379
        %v2381 = vsel %vm2380, %v2376, inf
        %2382 = vmin.xlane.f32.xlu0 %v2381
        %v2383 = vpop.xlane.xlu0 %2382
        %v2384 = vcvt.f32.s32 %v2383
        %v2385 = vcvt.f32.s32 %v2379
        %v2386 = vshll.u32 %v2385, 16
        %v2387 = vadd.s32 %v2386, %v2384
        %v2388 = vsel %vm2177, %v1899, 2147483647
        %v2389 = vand.u32 %v2388, 65535
        %v2390 = vshra.s32 %v2388, 16
        %v2391 = vcvt.s32.f32 %v2389
        %v2392 = vcvt.s32.f32 %v2390
        %2393 = vmin.xlane.f32.xlu0 %v2392
        %v2394 = vpop.xlane.xlu0 %2393
        %vm2395 = vcmp.eq.f32.partialorder %v2392, %v2394
        %v2396 = vsel %vm2395, %v2391, inf
        %2397 = vmin.xlane.f32.xlu0 %v2396
        %v2398 = vpop.xlane.xlu0 %2397
        %v2399 = vcvt.f32.s32 %v2398
        %v2400 = vcvt.f32.s32 %v2394
        %v2401 = vshll.u32 %v2400, 16
        %v2402 = vadd.s32 %v2401, %v2399
        %v2403 = vsel %vm2177, %v1900, 2147483647
        %v2404 = vand.u32 %v2403, 65535
        %v2405 = vshra.s32 %v2403, 16
        %v2406 = vcvt.s32.f32 %v2404
        %v2407 = vcvt.s32.f32 %v2405
        %2408 = vmin.xlane.f32.xlu0 %v2407
        %v2409 = vpop.xlane.xlu0 %2408
        %vm2410 = vcmp.eq.f32.partialorder %v2407, %v2409
        %v2411 = vsel %vm2410, %v2406, inf
        %2412 = vmin.xlane.f32.xlu0 %v2411
        %v2413 = vpop.xlane.xlu0 %2412
        %v2414 = vcvt.f32.s32 %v2413
        %v2415 = vcvt.f32.s32 %v2409
        %v2416 = vshll.u32 %v2415, 16
        %v2417 = vadd.s32 %v2416, %v2414
        %vm2418 = vcmp.eq.s32.totalorder %v1885, %v2192
        %vm2419 = vcmp.eq.s32.totalorder %v1886, %v2207
        %vm2420 = vcmp.eq.s32.totalorder %v1887, %v2222
        %vm2421 = vcmp.eq.s32.totalorder %v1888, %v2237
        %vm2422 = vcmp.eq.s32.totalorder %v1889, %v2252
        %vm2423 = vcmp.eq.s32.totalorder %v1890, %v2267
        %vm2424 = vcmp.eq.s32.totalorder %v1891, %v2282
        %vm2425 = vcmp.eq.s32.totalorder %v1892, %v2297
        %vm2426 = vcmp.eq.s32.totalorder %v1893, %v2312
        %vm2427 = vcmp.eq.s32.totalorder %v1894, %v2327
        %vm2428 = vcmp.eq.s32.totalorder %v1895, %v2342
        %vm2429 = vcmp.eq.s32.totalorder %v1896, %v2357
        %vm2430 = vcmp.eq.s32.totalorder %v1897, %v2372
        %vm2431 = vcmp.eq.s32.totalorder %v1898, %v2387
        %vm2432 = vcmp.eq.s32.totalorder %v1899, %v2402
        %vm2433 = vcmp.eq.s32.totalorder %v1900, %v2417
        %v2434 = vsel %vm2418, 1, 0
        %v2435 = vsel %vm2419, 1, 0
        %v2436 = vsel %vm2420, 1, 0
        %v2437 = vsel %vm2421, 1, 0
        %v2438 = vsel %vm2422, 1, 0
        %v2439 = vsel %vm2423, 1, 0
        %v2440 = vsel %vm2424, 1, 0
        %v2441 = vsel %vm2425, 1, 0
        %v2442 = vsel %vm2426, 1, 0
        %v2443 = vsel %vm2427, 1, 0
        %v2444 = vsel %vm2428, 1, 0
        %v2445 = vsel %vm2429, 1, 0
        %v2446 = vsel %vm2430, 1, 0
        %v2447 = vsel %vm2431, 1, 0
        %v2448 = vsel %vm2432, 1, 0
        %v2449 = vsel %vm2433, 1, 0
        %v2450 = vcvt.s32.f32 %v2434
        %v2451 = vcvt.s32.f32 %v2435
        %v2452 = vcvt.s32.f32 %v2436
        %v2453 = vcvt.s32.f32 %v2437
        %v2454 = vcvt.s32.f32 %v2438
        %v2455 = vcvt.s32.f32 %v2439
        %v2456 = vcvt.s32.f32 %v2440
        %v2457 = vcvt.s32.f32 %v2441
        %v2458 = vcvt.s32.f32 %v2442
        %v2459 = vcvt.s32.f32 %v2443
        %v2460 = vcvt.s32.f32 %v2444
        %v2461 = vcvt.s32.f32 %v2445
        %v2462 = vcvt.s32.f32 %v2446
        %v2463 = vcvt.s32.f32 %v2447
        %v2464 = vcvt.s32.f32 %v2448
        %v2465 = vcvt.s32.f32 %v2449
        %v2466 = vpack.c.bf16 %v2451, %v2450
        %v2467 = vpack.c.bf16 %v2453, %v2452
        %v2468 = vpack.c.bf16 %v2455, %v2454
        %v2469 = vpack.c.bf16 %v2457, %v2456
        %v2470 = vpack.c.bf16 %v2459, %v2458
        %v2471 = vpack.c.bf16 %v2461, %v2460
        %v2472 = vpack.c.bf16 %v2463, %v2462
        %v2473 = vpack.c.bf16 %v2465, %v2464
        %v2474 = vsel %vm2418, 2139095040, %v1885
        %v2475 = vsel %vm2419, 2139095040, %v1886
        %v2476 = vsel %vm2420, 2139095040, %v1887
        %v2477 = vsel %vm2421, 2139095040, %v1888
        %v2478 = vsel %vm2422, 2139095040, %v1889
        %v2479 = vsel %vm2423, 2139095040, %v1890
        %v2480 = vsel %vm2424, 2139095040, %v1891
        %v2481 = vsel %vm2425, 2139095040, %v1892
        %v2482 = vsel %vm2426, 2139095040, %v1893
        %v2483 = vsel %vm2427, 2139095040, %v1894
        %v2484 = vsel %vm2428, 2139095040, %v1895
        %v2485 = vsel %vm2429, 2139095040, %v1896
        %v2486 = vsel %vm2430, 2139095040, %v1897
        %v2487 = vsel %vm2431, 2139095040, %v1898
        %v2488 = vsel %vm2432, 2139095040, %v1899
        %v2489 = vsel %vm2433, 2139095040, %v1900
        %v2490 = vsel %vm2177, %v2474, 2147483647
        %v2491 = vand.u32 %v2490, 65535
        %v2492 = vshra.s32 %v2490, 16
        %v2493 = vcvt.s32.f32 %v2491
        %v2494 = vcvt.s32.f32 %v2492
        %2495 = vmin.xlane.f32.xlu0 %v2494
        %v2496 = vpop.xlane.xlu0 %2495
        %vm2497 = vcmp.eq.f32.partialorder %v2494, %v2496
        %v2498 = vsel %vm2497, %v2493, inf
        %2499 = vmin.xlane.f32.xlu0 %v2498
        %v2500 = vpop.xlane.xlu0 %2499
        %v2501 = vcvt.f32.s32 %v2500
        %v2502 = vcvt.f32.s32 %v2496
        %v2503 = vshll.u32 %v2502, 16
        %v2504 = vadd.s32 %v2503, %v2501
        %v2505 = vsel %vm2177, %v2475, 2147483647
        %v2506 = vand.u32 %v2505, 65535
        %v2507 = vshra.s32 %v2505, 16
        %v2508 = vcvt.s32.f32 %v2506
        %v2509 = vcvt.s32.f32 %v2507
        %2510 = vmin.xlane.f32.xlu0 %v2509
        %v2511 = vpop.xlane.xlu0 %2510
        %vm2512 = vcmp.eq.f32.partialorder %v2509, %v2511
        %v2513 = vsel %vm2512, %v2508, inf
        %2514 = vmin.xlane.f32.xlu0 %v2513
        %v2515 = vpop.xlane.xlu0 %2514
        %v2516 = vcvt.f32.s32 %v2515
        %v2517 = vcvt.f32.s32 %v2511
        %v2518 = vshll.u32 %v2517, 16
        %v2519 = vadd.s32 %v2518, %v2516
        %v2520 = vsel %vm2177, %v2476, 2147483647
        %v2521 = vand.u32 %v2520, 65535
        %v2522 = vshra.s32 %v2520, 16
        %v2523 = vcvt.s32.f32 %v2521
        %v2524 = vcvt.s32.f32 %v2522
        %2525 = vmin.xlane.f32.xlu0 %v2524
        %v2526 = vpop.xlane.xlu0 %2525
        %vm2527 = vcmp.eq.f32.partialorder %v2524, %v2526
        %v2528 = vsel %vm2527, %v2523, inf
        %2529 = vmin.xlane.f32.xlu0 %v2528
        %v2530 = vpop.xlane.xlu0 %2529
        %v2531 = vcvt.f32.s32 %v2530
        %v2532 = vcvt.f32.s32 %v2526
        %v2533 = vshll.u32 %v2532, 16
        %v2534 = vadd.s32 %v2533, %v2531
        %v2535 = vsel %vm2177, %v2477, 2147483647
        %v2536 = vand.u32 %v2535, 65535
        %v2537 = vshra.s32 %v2535, 16
        %v2538 = vcvt.s32.f32 %v2536
        %v2539 = vcvt.s32.f32 %v2537
        %2540 = vmin.xlane.f32.xlu0 %v2539
        %v2541 = vpop.xlane.xlu0 %2540
        %vm2542 = vcmp.eq.f32.partialorder %v2539, %v2541
        %v2543 = vsel %vm2542, %v2538, inf
        %2544 = vmin.xlane.f32.xlu0 %v2543
        %v2545 = vpop.xlane.xlu0 %2544
        %v2546 = vcvt.f32.s32 %v2545
        %v2547 = vcvt.f32.s32 %v2541
        %v2548 = vshll.u32 %v2547, 16
        %v2549 = vadd.s32 %v2548, %v2546
        %v2550 = vsel %vm2177, %v2478, 2147483647
        %v2551 = vand.u32 %v2550, 65535
        %v2552 = vshra.s32 %v2550, 16
        %v2553 = vcvt.s32.f32 %v2551
        %v2554 = vcvt.s32.f32 %v2552
        %2555 = vmin.xlane.f32.xlu0 %v2554
        %v2556 = vpop.xlane.xlu0 %2555
        %vm2557 = vcmp.eq.f32.partialorder %v2554, %v2556
        %v2558 = vsel %vm2557, %v2553, inf
        %2559 = vmin.xlane.f32.xlu0 %v2558
        %v2560 = vpop.xlane.xlu0 %2559
        %v2561 = vcvt.f32.s32 %v2560
        %v2562 = vcvt.f32.s32 %v2556
        %v2563 = vshll.u32 %v2562, 16
        %v2564 = vadd.s32 %v2563, %v2561
        %v2565 = vsel %vm2177, %v2479, 2147483647
        %v2566 = vand.u32 %v2565, 65535
        %v2567 = vshra.s32 %v2565, 16
        %v2568 = vcvt.s32.f32 %v2566
        %v2569 = vcvt.s32.f32 %v2567
        %2570 = vmin.xlane.f32.xlu0 %v2569
        %v2571 = vpop.xlane.xlu0 %2570
        %vm2572 = vcmp.eq.f32.partialorder %v2569, %v2571
        %v2573 = vsel %vm2572, %v2568, inf
        %2574 = vmin.xlane.f32.xlu0 %v2573
        %v2575 = vpop.xlane.xlu0 %2574
        %v2576 = vcvt.f32.s32 %v2575
        %v2577 = vcvt.f32.s32 %v2571
        %v2578 = vshll.u32 %v2577, 16
        %v2579 = vadd.s32 %v2578, %v2576
        %v2580 = vsel %vm2177, %v2480, 2147483647
        %v2581 = vand.u32 %v2580, 65535
        %v2582 = vshra.s32 %v2580, 16
        %v2583 = vcvt.s32.f32 %v2581
        %v2584 = vcvt.s32.f32 %v2582
        %2585 = vmin.xlane.f32.xlu0 %v2584
        %v2586 = vpop.xlane.xlu0 %2585
        %vm2587 = vcmp.eq.f32.partialorder %v2584, %v2586
        %v2588 = vsel %vm2587, %v2583, inf
        %2589 = vmin.xlane.f32.xlu0 %v2588
        %v2590 = vpop.xlane.xlu0 %2589
        %v2591 = vcvt.f32.s32 %v2590
        %v2592 = vcvt.f32.s32 %v2586
        %v2593 = vshll.u32 %v2592, 16
        %v2594 = vadd.s32 %v2593, %v2591
        %v2595 = vsel %vm2177, %v2481, 2147483647
        %v2596 = vand.u32 %v2595, 65535
        %v2597 = vshra.s32 %v2595, 16
        %v2598 = vcvt.s32.f32 %v2596
        %v2599 = vcvt.s32.f32 %v2597
        %2600 = vmin.xlane.f32.xlu0 %v2599
        %v2601 = vpop.xlane.xlu0 %2600
        %vm2602 = vcmp.eq.f32.partialorder %v2599, %v2601
        %v2603 = vsel %vm2602, %v2598, inf
        %2604 = vmin.xlane.f32.xlu0 %v2603
        %v2605 = vpop.xlane.xlu0 %2604
        %v2606 = vcvt.f32.s32 %v2605
        %v2607 = vcvt.f32.s32 %v2601
        %v2608 = vshll.u32 %v2607, 16
        %v2609 = vadd.s32 %v2608, %v2606
        %v2610 = vsel %vm2177, %v2482, 2147483647
        %v2611 = vand.u32 %v2610, 65535
        %v2612 = vshra.s32 %v2610, 16
        %v2613 = vcvt.s32.f32 %v2611
        %v2614 = vcvt.s32.f32 %v2612
        %2615 = vmin.xlane.f32.xlu0 %v2614
        %v2616 = vpop.xlane.xlu0 %2615
        %vm2617 = vcmp.eq.f32.partialorder %v2614, %v2616
        %v2618 = vsel %vm2617, %v2613, inf
        %2619 = vmin.xlane.f32.xlu0 %v2618
        %v2620 = vpop.xlane.xlu0 %2619
        %v2621 = vcvt.f32.s32 %v2620
        %v2622 = vcvt.f32.s32 %v2616
        %v2623 = vshll.u32 %v2622, 16
        %v2624 = vadd.s32 %v2623, %v2621
        %v2625 = vsel %vm2177, %v2483, 2147483647
        %v2626 = vand.u32 %v2625, 65535
        %v2627 = vshra.s32 %v2625, 16
        %v2628 = vcvt.s32.f32 %v2626
        %v2629 = vcvt.s32.f32 %v2627
        %2630 = vmin.xlane.f32.xlu0 %v2629
        %v2631 = vpop.xlane.xlu0 %2630
        %vm2632 = vcmp.eq.f32.partialorder %v2629, %v2631
        %v2633 = vsel %vm2632, %v2628, inf
        %2634 = vmin.xlane.f32.xlu0 %v2633
        %v2635 = vpop.xlane.xlu0 %2634
        %v2636 = vcvt.f32.s32 %v2635
        %v2637 = vcvt.f32.s32 %v2631
        %v2638 = vshll.u32 %v2637, 16
        %v2639 = vadd.s32 %v2638, %v2636
        %v2640 = vsel %vm2177, %v2484, 2147483647
        %v2641 = vand.u32 %v2640, 65535
        %v2642 = vshra.s32 %v2640, 16
        %v2643 = vcvt.s32.f32 %v2641
        %v2644 = vcvt.s32.f32 %v2642
        %2645 = vmin.xlane.f32.xlu0 %v2644
        %v2646 = vpop.xlane.xlu0 %2645
        %vm2647 = vcmp.eq.f32.partialorder %v2644, %v2646
        %v2648 = vsel %vm2647, %v2643, inf
        %2649 = vmin.xlane.f32.xlu0 %v2648
        %v2650 = vpop.xlane.xlu0 %2649
        %v2651 = vcvt.f32.s32 %v2650
        %v2652 = vcvt.f32.s32 %v2646
        %v2653 = vshll.u32 %v2652, 16
        %v2654 = vadd.s32 %v2653, %v2651
        %v2655 = vsel %vm2177, %v2485, 2147483647
        %v2656 = vand.u32 %v2655, 65535
        %v2657 = vshra.s32 %v2655, 16
        %v2658 = vcvt.s32.f32 %v2656
        %v2659 = vcvt.s32.f32 %v2657
        %2660 = vmin.xlane.f32.xlu0 %v2659
        %v2661 = vpop.xlane.xlu0 %2660
        %vm2662 = vcmp.eq.f32.partialorder %v2659, %v2661
        %v2663 = vsel %vm2662, %v2658, inf
        %2664 = vmin.xlane.f32.xlu0 %v2663
        %v2665 = vpop.xlane.xlu0 %2664
        %v2666 = vcvt.f32.s32 %v2665
        %v2667 = vcvt.f32.s32 %v2661
        %v2668 = vshll.u32 %v2667, 16
        %v2669 = vadd.s32 %v2668, %v2666
        %v2670 = vsel %vm2177, %v2486, 2147483647
        %v2671 = vand.u32 %v2670, 65535
        %v2672 = vshra.s32 %v2670, 16
        %v2673 = vcvt.s32.f32 %v2671
        %v2674 = vcvt.s32.f32 %v2672
        %2675 = vmin.xlane.f32.xlu0 %v2674
        %v2676 = vpop.xlane.xlu0 %2675
        %vm2677 = vcmp.eq.f32.partialorder %v2674, %v2676
        %v2678 = vsel %vm2677, %v2673, inf
        %2679 = vmin.xlane.f32.xlu0 %v2678
        %v2680 = vpop.xlane.xlu0 %2679
        %v2681 = vcvt.f32.s32 %v2680
        %v2682 = vcvt.f32.s32 %v2676
        %v2683 = vshll.u32 %v2682, 16
        %v2684 = vadd.s32 %v2683, %v2681
        %v2685 = vsel %vm2177, %v2487, 2147483647
        %v2686 = vand.u32 %v2685, 65535
        %v2687 = vshra.s32 %v2685, 16
        %v2688 = vcvt.s32.f32 %v2686
        %v2689 = vcvt.s32.f32 %v2687
        %2690 = vmin.xlane.f32.xlu0 %v2689
        %v2691 = vpop.xlane.xlu0 %2690
        %vm2692 = vcmp.eq.f32.partialorder %v2689, %v2691
        %v2693 = vsel %vm2692, %v2688, inf
        %2694 = vmin.xlane.f32.xlu0 %v2693
        %v2695 = vpop.xlane.xlu0 %2694
        %v2696 = vcvt.f32.s32 %v2695
        %v2697 = vcvt.f32.s32 %v2691
        %v2698 = vshll.u32 %v2697, 16
        %v2699 = vadd.s32 %v2698, %v2696
        %v2700 = vsel %vm2177, %v2488, 2147483647
        %v2701 = vand.u32 %v2700, 65535
        %v2702 = vshra.s32 %v2700, 16
        %v2703 = vcvt.s32.f32 %v2701
        %v2704 = vcvt.s32.f32 %v2702
        %2705 = vmin.xlane.f32.xlu0 %v2704
        %v2706 = vpop.xlane.xlu0 %2705
        %vm2707 = vcmp.eq.f32.partialorder %v2704, %v2706
        %v2708 = vsel %vm2707, %v2703, inf
        %2709 = vmin.xlane.f32.xlu0 %v2708
        %v2710 = vpop.xlane.xlu0 %2709
        %v2711 = vcvt.f32.s32 %v2710
        %v2712 = vcvt.f32.s32 %v2706
        %v2713 = vshll.u32 %v2712, 16
        %v2714 = vadd.s32 %v2713, %v2711
        %v2715 = vsel %vm2177, %v2489, 2147483647
        %v2716 = vand.u32 %v2715, 65535
        %v2717 = vshra.s32 %v2715, 16
        %v2718 = vcvt.s32.f32 %v2716
        %v2719 = vcvt.s32.f32 %v2717
        %2720 = vmin.xlane.f32.xlu0 %v2719
        %v2721 = vpop.xlane.xlu0 %2720
        %vm2722 = vcmp.eq.f32.partialorder %v2719, %v2721
        %v2723 = vsel %vm2722, %v2718, inf
        %2724 = vmin.xlane.f32.xlu0 %v2723
        %v2725 = vpop.xlane.xlu0 %2724
        %v2726 = vcvt.f32.s32 %v2725
        %v2727 = vcvt.f32.s32 %v2721
        %v2728 = vshll.u32 %v2727, 16
        %v2729 = vadd.s32 %v2728, %v2726
        %vm2730 = vcmp.eq.s32.totalorder %v2474, %v2504
        %vm2731 = vcmp.eq.s32.totalorder %v2475, %v2519
        %vm2732 = vcmp.eq.s32.totalorder %v2476, %v2534
        %vm2733 = vcmp.eq.s32.totalorder %v2477, %v2549
        %vm2734 = vcmp.eq.s32.totalorder %v2478, %v2564
        %vm2735 = vcmp.eq.s32.totalorder %v2479, %v2579
        %vm2736 = vcmp.eq.s32.totalorder %v2480, %v2594
        %vm2737 = vcmp.eq.s32.totalorder %v2481, %v2609
        %vm2738 = vcmp.eq.s32.totalorder %v2482, %v2624
        %vm2739 = vcmp.eq.s32.totalorder %v2483, %v2639
        %vm2740 = vcmp.eq.s32.totalorder %v2484, %v2654
        %vm2741 = vcmp.eq.s32.totalorder %v2485, %v2669
        %vm2742 = vcmp.eq.s32.totalorder %v2486, %v2684
        %vm2743 = vcmp.eq.s32.totalorder %v2487, %v2699
        %vm2744 = vcmp.eq.s32.totalorder %v2488, %v2714
        %vm2745 = vcmp.eq.s32.totalorder %v2489, %v2729
        %v2746 = vsel %vm2730, 1, 0
        %v2747 = vsel %vm2731, 1, 0
        %v2748 = vsel %vm2732, 1, 0
        %v2749 = vsel %vm2733, 1, 0
        %v2750 = vsel %vm2734, 1, 0
        %v2751 = vsel %vm2735, 1, 0
        %v2752 = vsel %vm2736, 1, 0
        %v2753 = vsel %vm2737, 1, 0
        %v2754 = vsel %vm2738, 1, 0
        %v2755 = vsel %vm2739, 1, 0
        %v2756 = vsel %vm2740, 1, 0
        %v2757 = vsel %vm2741, 1, 0
        %v2758 = vsel %vm2742, 1, 0
        %v2759 = vsel %vm2743, 1, 0
        %v2760 = vsel %vm2744, 1, 0
        %v2761 = vsel %vm2745, 1, 0
        %v2762 = vcvt.s32.f32 %v2746
        %v2763 = vcvt.s32.f32 %v2747
        %v2764 = vcvt.s32.f32 %v2748
        %v2765 = vcvt.s32.f32 %v2749
        %v2766 = vcvt.s32.f32 %v2750
        %v2767 = vcvt.s32.f32 %v2751
        %v2768 = vcvt.s32.f32 %v2752
        %v2769 = vcvt.s32.f32 %v2753
        %v2770 = vcvt.s32.f32 %v2754
        %v2771 = vcvt.s32.f32 %v2755
        %v2772 = vcvt.s32.f32 %v2756
        %v2773 = vcvt.s32.f32 %v2757
        %v2774 = vcvt.s32.f32 %v2758
        %v2775 = vcvt.s32.f32 %v2759
        %v2776 = vcvt.s32.f32 %v2760
        %v2777 = vcvt.s32.f32 %v2761
        %v2778 = vpack.c.bf16 %v2763, %v2762
        %v2779 = vpack.c.bf16 %v2765, %v2764
        %v2780 = vpack.c.bf16 %v2767, %v2766
        %v2781 = vpack.c.bf16 %v2769, %v2768
        %v2782 = vpack.c.bf16 %v2771, %v2770
        %v2783 = vpack.c.bf16 %v2773, %v2772
        %v2784 = vpack.c.bf16 %v2775, %v2774
        %v2785 = vpack.c.bf16 %v2777, %v2776
        %v2786 = vsel %vm2730, 2139095040, %v2474
        %v2787 = vsel %vm2731, 2139095040, %v2475
        %v2788 = vsel %vm2732, 2139095040, %v2476
        %v2789 = vsel %vm2733, 2139095040, %v2477
        %v2790 = vsel %vm2734, 2139095040, %v2478
        %v2791 = vsel %vm2735, 2139095040, %v2479
        %v2792 = vsel %vm2736, 2139095040, %v2480
        %v2793 = vsel %vm2737, 2139095040, %v2481
        %v2794 = vsel %vm2738, 2139095040, %v2482
        %v2795 = vsel %vm2739, 2139095040, %v2483
        %v2796 = vsel %vm2740, 2139095040, %v2484
        %v2797 = vsel %vm2741, 2139095040, %v2485
        %v2798 = vsel %vm2742, 2139095040, %v2486
        %v2799 = vsel %vm2743, 2139095040, %v2487
        %v2800 = vsel %vm2744, 2139095040, %v2488
        %v2801 = vsel %vm2745, 2139095040, %v2489
        %v2802 = vsel %vm2177, %v2786, 2147483647
        %v2803 = vand.u32 %v2802, 65535
        %v2804 = vshra.s32 %v2802, 16
        %v2805 = vcvt.s32.f32 %v2803
        %v2806 = vcvt.s32.f32 %v2804
        %2807 = vmin.xlane.f32.xlu0 %v2806
        %v2808 = vpop.xlane.xlu0 %2807
        %vm2809 = vcmp.eq.f32.partialorder %v2806, %v2808
        %v2810 = vsel %vm2809, %v2805, inf
        %2811 = vmin.xlane.f32.xlu0 %v2810
        %v2812 = vpop.xlane.xlu0 %2811
        %v2813 = vcvt.f32.s32 %v2812
        %v2814 = vcvt.f32.s32 %v2808
        %v2815 = vshll.u32 %v2814, 16
        %v2816 = vadd.s32 %v2815, %v2813
        %v2817 = vsel %vm2177, %v2787, 2147483647
        %v2818 = vand.u32 %v2817, 65535
        %v2819 = vshra.s32 %v2817, 16
        %v2820 = vcvt.s32.f32 %v2818
        %v2821 = vcvt.s32.f32 %v2819
        %2822 = vmin.xlane.f32.xlu0 %v2821
        %v2823 = vpop.xlane.xlu0 %2822
        %vm2824 = vcmp.eq.f32.partialorder %v2821, %v2823
        %v2825 = vsel %vm2824, %v2820, inf
        %2826 = vmin.xlane.f32.xlu0 %v2825
        %v2827 = vpop.xlane.xlu0 %2826
        %v2828 = vcvt.f32.s32 %v2827
        %v2829 = vcvt.f32.s32 %v2823
        %v2830 = vshll.u32 %v2829, 16
        %v2831 = vadd.s32 %v2830, %v2828
        %v2832 = vsel %vm2177, %v2788, 2147483647
        %v2833 = vand.u32 %v2832, 65535
        %v2834 = vshra.s32 %v2832, 16
        %v2835 = vcvt.s32.f32 %v2833
        %v2836 = vcvt.s32.f32 %v2834
        %2837 = vmin.xlane.f32.xlu0 %v2836
        %v2838 = vpop.xlane.xlu0 %2837
        %vm2839 = vcmp.eq.f32.partialorder %v2836, %v2838
        %v2840 = vsel %vm2839, %v2835, inf
        %2841 = vmin.xlane.f32.xlu0 %v2840
        %v2842 = vpop.xlane.xlu0 %2841
        %v2843 = vcvt.f32.s32 %v2842
        %v2844 = vcvt.f32.s32 %v2838
        %v2845 = vshll.u32 %v2844, 16
        %v2846 = vadd.s32 %v2845, %v2843
        %v2847 = vsel %vm2177, %v2789, 2147483647
        %v2848 = vand.u32 %v2847, 65535
        %v2849 = vshra.s32 %v2847, 16
        %v2850 = vcvt.s32.f32 %v2848
        %v2851 = vcvt.s32.f32 %v2849
        %2852 = vmin.xlane.f32.xlu0 %v2851
        %v2853 = vpop.xlane.xlu0 %2852
        %vm2854 = vcmp.eq.f32.partialorder %v2851, %v2853
        %v2855 = vsel %vm2854, %v2850, inf
        %2856 = vmin.xlane.f32.xlu0 %v2855
        %v2857 = vpop.xlane.xlu0 %2856
        %v2858 = vcvt.f32.s32 %v2857
        %v2859 = vcvt.f32.s32 %v2853
        %v2860 = vshll.u32 %v2859, 16
        %v2861 = vadd.s32 %v2860, %v2858
        %v2862 = vsel %vm2177, %v2790, 2147483647
        %v2863 = vand.u32 %v2862, 65535
        %v2864 = vshra.s32 %v2862, 16
        %v2865 = vcvt.s32.f32 %v2863
        %v2866 = vcvt.s32.f32 %v2864
        %2867 = vmin.xlane.f32.xlu0 %v2866
        %v2868 = vpop.xlane.xlu0 %2867
        %vm2869 = vcmp.eq.f32.partialorder %v2866, %v2868
        %v2870 = vsel %vm2869, %v2865, inf
        %2871 = vmin.xlane.f32.xlu0 %v2870
        %v2872 = vpop.xlane.xlu0 %2871
        %v2873 = vcvt.f32.s32 %v2872
        %v2874 = vcvt.f32.s32 %v2868
        %v2875 = vshll.u32 %v2874, 16
        %v2876 = vadd.s32 %v2875, %v2873
        %v2877 = vsel %vm2177, %v2791, 2147483647
        %v2878 = vand.u32 %v2877, 65535
        %v2879 = vshra.s32 %v2877, 16
        %v2880 = vcvt.s32.f32 %v2878
        %v2881 = vcvt.s32.f32 %v2879
        %2882 = vmin.xlane.f32.xlu0 %v2881
        %v2883 = vpop.xlane.xlu0 %2882
        %vm2884 = vcmp.eq.f32.partialorder %v2881, %v2883
        %v2885 = vsel %vm2884, %v2880, inf
        %2886 = vmin.xlane.f32.xlu0 %v2885
        %v2887 = vpop.xlane.xlu0 %2886
        %v2888 = vcvt.f32.s32 %v2887
        %v2889 = vcvt.f32.s32 %v2883
        %v2890 = vshll.u32 %v2889, 16
        %v2891 = vadd.s32 %v2890, %v2888
        %v2892 = vsel %vm2177, %v2792, 2147483647
        %v2893 = vand.u32 %v2892, 65535
        %v2894 = vshra.s32 %v2892, 16
        %v2895 = vcvt.s32.f32 %v2893
        %v2896 = vcvt.s32.f32 %v2894
        %2897 = vmin.xlane.f32.xlu0 %v2896
        %v2898 = vpop.xlane.xlu0 %2897
        %vm2899 = vcmp.eq.f32.partialorder %v2896, %v2898
        %v2900 = vsel %vm2899, %v2895, inf
        %2901 = vmin.xlane.f32.xlu0 %v2900
        %v2902 = vpop.xlane.xlu0 %2901
        %v2903 = vcvt.f32.s32 %v2902
        %v2904 = vcvt.f32.s32 %v2898
        %v2905 = vshll.u32 %v2904, 16
        %v2906 = vadd.s32 %v2905, %v2903
        %v2907 = vsel %vm2177, %v2793, 2147483647
        %v2908 = vand.u32 %v2907, 65535
        %v2909 = vshra.s32 %v2907, 16
        %v2910 = vcvt.s32.f32 %v2908
        %v2911 = vcvt.s32.f32 %v2909
        %2912 = vmin.xlane.f32.xlu0 %v2911
        %v2913 = vpop.xlane.xlu0 %2912
        %vm2914 = vcmp.eq.f32.partialorder %v2911, %v2913
        %v2915 = vsel %vm2914, %v2910, inf
        %2916 = vmin.xlane.f32.xlu0 %v2915
        %v2917 = vpop.xlane.xlu0 %2916
        %v2918 = vcvt.f32.s32 %v2917
        %v2919 = vcvt.f32.s32 %v2913
        %v2920 = vshll.u32 %v2919, 16
        %v2921 = vadd.s32 %v2920, %v2918
        %v2922 = vsel %vm2177, %v2794, 2147483647
        %v2923 = vand.u32 %v2922, 65535
        %v2924 = vshra.s32 %v2922, 16
        %v2925 = vcvt.s32.f32 %v2923
        %v2926 = vcvt.s32.f32 %v2924
        %2927 = vmin.xlane.f32.xlu0 %v2926
        %v2928 = vpop.xlane.xlu0 %2927
        %vm2929 = vcmp.eq.f32.partialorder %v2926, %v2928
        %v2930 = vsel %vm2929, %v2925, inf
        %2931 = vmin.xlane.f32.xlu0 %v2930
        %v2932 = vpop.xlane.xlu0 %2931
        %v2933 = vcvt.f32.s32 %v2932
        %v2934 = vcvt.f32.s32 %v2928
        %v2935 = vshll.u32 %v2934, 16
        %v2936 = vadd.s32 %v2935, %v2933
        %v2937 = vsel %vm2177, %v2795, 2147483647
        %v2938 = vand.u32 %v2937, 65535
        %v2939 = vshra.s32 %v2937, 16
        %v2940 = vcvt.s32.f32 %v2938
        %v2941 = vcvt.s32.f32 %v2939
        %2942 = vmin.xlane.f32.xlu0 %v2941
        %v2943 = vpop.xlane.xlu0 %2942
        %vm2944 = vcmp.eq.f32.partialorder %v2941, %v2943
        %v2945 = vsel %vm2944, %v2940, inf
        %2946 = vmin.xlane.f32.xlu0 %v2945
        %v2947 = vpop.xlane.xlu0 %2946
        %v2948 = vcvt.f32.s32 %v2947
        %v2949 = vcvt.f32.s32 %v2943
        %v2950 = vshll.u32 %v2949, 16
        %v2951 = vadd.s32 %v2950, %v2948
        %v2952 = vsel %vm2177, %v2796, 2147483647
        %v2953 = vand.u32 %v2952, 65535
        %v2954 = vshra.s32 %v2952, 16
        %v2955 = vcvt.s32.f32 %v2953
        %v2956 = vcvt.s32.f32 %v2954
        %2957 = vmin.xlane.f32.xlu0 %v2956
        %v2958 = vpop.xlane.xlu0 %2957
        %vm2959 = vcmp.eq.f32.partialorder %v2956, %v2958
        %v2960 = vsel %vm2959, %v2955, inf
        %2961 = vmin.xlane.f32.xlu0 %v2960
        %v2962 = vpop.xlane.xlu0 %2961
        %v2963 = vcvt.f32.s32 %v2962
        %v2964 = vcvt.f32.s32 %v2958
        %v2965 = vshll.u32 %v2964, 16
        %v2966 = vadd.s32 %v2965, %v2963
        %v2967 = vsel %vm2177, %v2797, 2147483647
        %v2968 = vand.u32 %v2967, 65535
        %v2969 = vshra.s32 %v2967, 16
        %v2970 = vcvt.s32.f32 %v2968
        %v2971 = vcvt.s32.f32 %v2969
        %2972 = vmin.xlane.f32.xlu0 %v2971
        %v2973 = vpop.xlane.xlu0 %2972
        %vm2974 = vcmp.eq.f32.partialorder %v2971, %v2973
        %v2975 = vsel %vm2974, %v2970, inf
        %2976 = vmin.xlane.f32.xlu0 %v2975
        %v2977 = vpop.xlane.xlu0 %2976
        %v2978 = vcvt.f32.s32 %v2977
        %v2979 = vcvt.f32.s32 %v2973
        %v2980 = vshll.u32 %v2979, 16
        %v2981 = vadd.s32 %v2980, %v2978
        %v2982 = vsel %vm2177, %v2798, 2147483647
        %v2983 = vand.u32 %v2982, 65535
        %v2984 = vshra.s32 %v2982, 16
        %v2985 = vcvt.s32.f32 %v2983
        %v2986 = vcvt.s32.f32 %v2984
        %2987 = vmin.xlane.f32.xlu0 %v2986
        %v2988 = vpop.xlane.xlu0 %2987
        %vm2989 = vcmp.eq.f32.partialorder %v2986, %v2988
        %v2990 = vsel %vm2989, %v2985, inf
        %2991 = vmin.xlane.f32.xlu0 %v2990
        %v2992 = vpop.xlane.xlu0 %2991
        %v2993 = vcvt.f32.s32 %v2992
        %v2994 = vcvt.f32.s32 %v2988
        %v2995 = vshll.u32 %v2994, 16
        %v2996 = vadd.s32 %v2995, %v2993
        %v2997 = vsel %vm2177, %v2799, 2147483647
        %v2998 = vand.u32 %v2997, 65535
        %v2999 = vshra.s32 %v2997, 16
        %v3000 = vcvt.s32.f32 %v2998
        %v3001 = vcvt.s32.f32 %v2999
        %3002 = vmin.xlane.f32.xlu0 %v3001
        %v3003 = vpop.xlane.xlu0 %3002
        %vm3004 = vcmp.eq.f32.partialorder %v3001, %v3003
        %v3005 = vsel %vm3004, %v3000, inf
        %3006 = vmin.xlane.f32.xlu0 %v3005
        %v3007 = vpop.xlane.xlu0 %3006
        %v3008 = vcvt.f32.s32 %v3007
        %v3009 = vcvt.f32.s32 %v3003
        %v3010 = vshll.u32 %v3009, 16
        %v3011 = vadd.s32 %v3010, %v3008
        %v3012 = vsel %vm2177, %v2800, 2147483647
        %v3013 = vand.u32 %v3012, 65535
        %v3014 = vshra.s32 %v3012, 16
        %v3015 = vcvt.s32.f32 %v3013
        %v3016 = vcvt.s32.f32 %v3014
        %3017 = vmin.xlane.f32.xlu0 %v3016
        %v3018 = vpop.xlane.xlu0 %3017
        %vm3019 = vcmp.eq.f32.partialorder %v3016, %v3018
        %v3020 = vsel %vm3019, %v3015, inf
        %3021 = vmin.xlane.f32.xlu0 %v3020
        %v3022 = vpop.xlane.xlu0 %3021
        %v3023 = vcvt.f32.s32 %v3022
        %v3024 = vcvt.f32.s32 %v3018
        %v3025 = vshll.u32 %v3024, 16
        %v3026 = vadd.s32 %v3025, %v3023
        %v3027 = vsel %vm2177, %v2801, 2147483647
        %v3028 = vand.u32 %v3027, 65535
        %v3029 = vshra.s32 %v3027, 16
        %v3030 = vcvt.s32.f32 %v3028
        %v3031 = vcvt.s32.f32 %v3029
        %3032 = vmin.xlane.f32.xlu0 %v3031
        %v3033 = vpop.xlane.xlu0 %3032
        %vm3034 = vcmp.eq.f32.partialorder %v3031, %v3033
        %v3035 = vsel %vm3034, %v3030, inf
        %3036 = vmin.xlane.f32.xlu0 %v3035
        %v3037 = vpop.xlane.xlu0 %3036
        %v3038 = vcvt.f32.s32 %v3037
        %v3039 = vcvt.f32.s32 %v3033
        %v3040 = vshll.u32 %v3039, 16
        %v3041 = vadd.s32 %v3040, %v3038
        %vm3042 = vcmp.eq.s32.totalorder %v2786, %v2816
        %vm3043 = vcmp.eq.s32.totalorder %v2787, %v2831
        %vm3044 = vcmp.eq.s32.totalorder %v2788, %v2846
        %vm3045 = vcmp.eq.s32.totalorder %v2789, %v2861
        %vm3046 = vcmp.eq.s32.totalorder %v2790, %v2876
        %vm3047 = vcmp.eq.s32.totalorder %v2791, %v2891
        %vm3048 = vcmp.eq.s32.totalorder %v2792, %v2906
        %vm3049 = vcmp.eq.s32.totalorder %v2793, %v2921
        %vm3050 = vcmp.eq.s32.totalorder %v2794, %v2936
        %vm3051 = vcmp.eq.s32.totalorder %v2795, %v2951
        %vm3052 = vcmp.eq.s32.totalorder %v2796, %v2966
        %vm3053 = vcmp.eq.s32.totalorder %v2797, %v2981
        %vm3054 = vcmp.eq.s32.totalorder %v2798, %v2996
        %vm3055 = vcmp.eq.s32.totalorder %v2799, %v3011
        %vm3056 = vcmp.eq.s32.totalorder %v2800, %v3026
        %vm3057 = vcmp.eq.s32.totalorder %v2801, %v3041
        %v3058 = vsel %vm3042, 1, 0
        %v3059 = vsel %vm3043, 1, 0
        %v3060 = vsel %vm3044, 1, 0
        %v3061 = vsel %vm3045, 1, 0
        %v3062 = vsel %vm3046, 1, 0
        %v3063 = vsel %vm3047, 1, 0
        %v3064 = vsel %vm3048, 1, 0
        %v3065 = vsel %vm3049, 1, 0
        %v3066 = vsel %vm3050, 1, 0
        %v3067 = vsel %vm3051, 1, 0
        %v3068 = vsel %vm3052, 1, 0
        %v3069 = vsel %vm3053, 1, 0
        %v3070 = vsel %vm3054, 1, 0
        %v3071 = vsel %vm3055, 1, 0
        %v3072 = vsel %vm3056, 1, 0
        %v3073 = vsel %vm3057, 1, 0
        %v3074 = vcvt.s32.f32 %v3058
        %v3075 = vcvt.s32.f32 %v3059
        %v3076 = vcvt.s32.f32 %v3060
        %v3077 = vcvt.s32.f32 %v3061
        %v3078 = vcvt.s32.f32 %v3062
        %v3079 = vcvt.s32.f32 %v3063
        %v3080 = vcvt.s32.f32 %v3064
        %v3081 = vcvt.s32.f32 %v3065
        %v3082 = vcvt.s32.f32 %v3066
        %v3083 = vcvt.s32.f32 %v3067
        %v3084 = vcvt.s32.f32 %v3068
        %v3085 = vcvt.s32.f32 %v3069
        %v3086 = vcvt.s32.f32 %v3070
        %v3087 = vcvt.s32.f32 %v3071
        %v3088 = vcvt.s32.f32 %v3072
        %v3089 = vcvt.s32.f32 %v3073
        %v3090 = vpack.c.bf16 %v3075, %v3074
        %v3091 = vpack.c.bf16 %v3077, %v3076
        %v3092 = vpack.c.bf16 %v3079, %v3078
        %v3093 = vpack.c.bf16 %v3081, %v3080
        %v3094 = vpack.c.bf16 %v3083, %v3082
        %v3095 = vpack.c.bf16 %v3085, %v3084
        %v3096 = vpack.c.bf16 %v3087, %v3086
        %v3097 = vpack.c.bf16 %v3089, %v3088
        %v3099 = vsel %vm2177, %v2466, 0
        %v3102 = vsel %vm2177, %v2778, 0
        %v3105 = vsel %vm2177, %v3090, 0
        %3107 = vmatprep.subr.bf16.mxu0 0
        %3108 = vmatpush1.bf16.msra.mxu0 %v2129
        %3109 = vmatprep.subr.bf16.mxu0 0
        %3110 = vmatpush1.bf16.msra.mxu0 0
        %3111 = vmatprep.subr.bf16.mxu0 0
        %3112 = vmatpush1.bf16.msra.mxu0 0
        %3113 = vmatprep.subr.bf16.mxu0 0
        %3114 = vmatpush1.bf16.msra.mxu0 0
        %3115 = vmatprep.subr.bf16.mxu0 0
        %3116 = vmatpush1.bf16.msra.mxu0 0
        %3117 = vmatprep.subr.bf16.mxu0 0
        %3118 = vmatpush1.bf16.msra.mxu0 0
        %3119 = vmatprep.subr.bf16.mxu0 0
        %3120 = vmatpush1.bf16.msra.mxu0 0
        %3121 = vmatprep.subr.bf16.mxu0 0
        %3122 = vmatpush1.bf16.msra.mxu0 0
        %3123 = vmatprep.subr.bf16.mxu0 0
        %3124 = vmatpush1.bf16.msra.mxu0 0
        %3125 = vmatprep.subr.bf16.mxu0 0
        %3126 = vmatpush1.bf16.msra.mxu0 0
        %3127 = vmatprep.subr.bf16.mxu0 0
        %3128 = vmatpush1.bf16.msra.mxu0 0
        %3129 = vmatprep.subr.bf16.mxu0 0
        %3130 = vmatpush1.bf16.msra.mxu0 0
        %3131 = vmatprep.subr.bf16.mxu0 0
        %3132 = vmatpush1.bf16.msra.mxu0 0
        %3133 = vmatprep.subr.bf16.mxu0 0
        %3134 = vmatpush1.bf16.msra.mxu0 0
        %3135 = vmatprep.subr.bf16.mxu0 0
        %3136 = vmatpush1.bf16.msra.mxu0 0
        %3137 = vmatprep.subr.bf16.mxu0 0
        %3138 = vmatpush1.bf16.msra.mxu0 0
        %3139 = vmatprep.mubr.bf16.mxu0 0
        %3140 = vmatmul.mubr.bf16.gmra.mrb[0].mxu0 %v3099
        %v3141 = vpop.f32.mrb[0].mxu0
        %v3142 = vadd.f32 0.0, %v3141
        %v3143 = vpop.f32.mrb[0].mxu0
        %v3144 = vpop.f32.mrb[0].mxu0
        %v3145 = vadd.f32 0.0, %v3144
        %v3146 = vpop.f32.mrb[0].mxu0
        %3147 = vmatprep.mubr.bf16.mxu0 0
        %3148 = vmatmul.mubr.bf16.gmra.mrb[0].mxu0 %v3102
        %v3149 = vpop.f32.mrb[0].mxu0
        %v3150 = vadd.f32 0.0, %v3149
        %v3151 = vpop.f32.mrb[0].mxu0
        %v3152 = vpop.f32.mrb[0].mxu0
        %v3153 = vadd.f32 0.0, %v3152
        %v3154 = vpop.f32.mrb[0].mxu0
        %3155 = vmatprep.mubr.bf16.mxu0 0
        %3156 = vmatmul.mubr.bf16.gmra.mrb[0].mxu0 %v3105
        %v3157 = vpop.f32.mrb[0].mxu0
        %v3158 = vadd.f32 0.0, %v3157
        %v3159 = vpop.f32.mrb[0].mxu0
        %v3160 = vpop.f32.mrb[0].mxu0
        %v3161 = vadd.f32 0.0, %v3160
        %v3162 = vpop.f32.mrb[0].mxu0
        %3163 = vdwg.mxu0
        %v3165 = vsel %vm2177, %v2467, 0
        %v3168 = vsel %vm2177, %v2779, 0
        %v3171 = vsel %vm2177, %v3091, 0
        %3173 = vmatprep.subr.bf16.mxu0 0
        %3174 = vmatpush1.bf16.msra.mxu0 %v2130
        %3175 = vmatprep.subr.bf16.mxu0 0
        %3176 = vmatpush1.bf16.msra.mxu0 0
        %3177 = vmatprep.subr.bf16.mxu0 0
        %3178 = vmatpush1.bf16.msra.mxu0 0
        %3179 = vmatprep.subr.bf16.mxu0 0
        %3180 = vmatpush1.bf16.msra.mxu0 0
        %3181 = vmatprep.subr.bf16.mxu0 0
        %3182 = vmatpush1.bf16.msra.mxu0 0
        %3183 = vmatprep.subr.bf16.mxu0 0
        %3184 = vmatpush1.bf16.msra.mxu0 0
        %3185 = vmatprep.subr.bf16.mxu0 0
        %3186 = vmatpush1.bf16.msra.mxu0 0
        %3187 = vmatprep.subr.bf16.mxu0 0
        %3188 = vmatpush1.bf16.msra.mxu0 0
        %3189 = vmatprep.subr.bf16.mxu0 0
        %3190 = vmatpush1.bf16.msra.mxu0 0
        %3191 = vmatprep.subr.bf16.mxu0 0
        %3192 = vmatpush1.bf16.msra.mxu0 0
        %3193 = vmatprep.subr.bf16.mxu0 0
        %3194 = vmatpush1.bf16.msra.mxu0 0
        %3195 = vmatprep.subr.bf16.mxu0 0
        %3196 = vmatpush1.bf16.msra.mxu0 0
        %3197 = vmatprep.subr.bf16.mxu0 0
        %3198 = vmatpush1.bf16.msra.mxu0 0
        %3199 = vmatprep.subr.bf16.mxu0 0
        %3200 = vmatpush1.bf16.msra.mxu0 0
        %3201 = vmatprep.subr.bf16.mxu0 0
        %3202 = vmatpush1.bf16.msra.mxu0 0
        %3203 = vmatprep.subr.bf16.mxu0 0
        %3204 = vmatpush1.bf16.msra.mxu0 0
        %3205 = vmatprep.mubr.bf16.mxu0 0
        %3206 = vmatmul.mubr.bf16.gmra.mrb[0].mxu0 %v3165
        %v3207 = vpop.f32.mrb[0].mxu0
        %v3208 = vadd.f32 0.0, %v3207
        %v3209 = vpop.f32.mrb[0].mxu0
        %v3210 = vpop.f32.mrb[0].mxu0
        %v3211 = vadd.f32 0.0, %v3210
        %v3212 = vpop.f32.mrb[0].mxu0
        %3213 = vmatprep.mubr.bf16.mxu0 0
        %3214 = vmatmul.mubr.bf16.gmra.mrb[0].mxu0 %v3168
        %v3215 = vpop.f32.mrb[0].mxu0
        %v3216 = vadd.f32 0.0, %v3215
        %v3217 = vpop.f32.mrb[0].mxu0
        %v3218 = vpop.f32.mrb[0].mxu0
        %v3219 = vadd.f32 0.0, %v3218
        %v3220 = vpop.f32.mrb[0].mxu0
        %3221 = vmatprep.mubr.bf16.mxu0 0
        %3222 = vmatmul.mubr.bf16.gmra.mrb[0].mxu0 %v3171
        %v3223 = vpop.f32.mrb[0].mxu0
        %v3224 = vadd.f32 0.0, %v3223
        %v3225 = vpop.f32.mrb[0].mxu0
        %v3226 = vpop.f32.mrb[0].mxu0
        %v3227 = vadd.f32 0.0, %v3226
        %v3228 = vpop.f32.mrb[0].mxu0
        %3229 = vdwg.mxu0
        %v3231 = vsel %vm2177, %v2468, 0
        %v3234 = vsel %vm2177, %v2780, 0
        %v3237 = vsel %vm2177, %v3092, 0
        %3239 = vmatprep.subr.bf16.mxu0 0
        %3240 = vmatpush1.bf16.msra.mxu0 %v2131
        %3241 = vmatprep.subr.bf16.mxu0 0
        %3242 = vmatpush1.bf16.msra.mxu0 0
        %3243 = vmatprep.subr.bf16.mxu0 0
        %3244 = vmatpush1.bf16.msra.mxu0 0
        %3245 = vmatprep.subr.bf16.mxu0 0
        %3246 = vmatpush1.bf16.msra.mxu0 0
        %3247 = vmatprep.subr.bf16.mxu0 0
        %3248 = vmatpush1.bf16.msra.mxu0 0
        %3249 = vmatprep.subr.bf16.mxu0 0
        %3250 = vmatpush1.bf16.msra.mxu0 0
        %3251 = vmatprep.subr.bf16.mxu0 0
        %3252 = vmatpush1.bf16.msra.mxu0 0
        %3253 = vmatprep.subr.bf16.mxu0 0
        %3254 = vmatpush1.bf16.msra.mxu0 0
        %3255 = vmatprep.subr.bf16.mxu0 0
        %3256 = vmatpush1.bf16.msra.mxu0 0
        %3257 = vmatprep.subr.bf16.mxu0 0
        %3258 = vmatpush1.bf16.msra.mxu0 0
        %3259 = vmatprep.subr.bf16.mxu0 0
        %3260 = vmatpush1.bf16.msra.mxu0 0
        %3261 = vmatprep.subr.bf16.mxu0 0
        %3262 = vmatpush1.bf16.msra.mxu0 0
        %3263 = vmatprep.subr.bf16.mxu0 0
        %3264 = vmatpush1.bf16.msra.mxu0 0
        %3265 = vmatprep.subr.bf16.mxu0 0
        %3266 = vmatpush1.bf16.msra.mxu0 0
        %3267 = vmatprep.subr.bf16.mxu0 0
        %3268 = vmatpush1.bf16.msra.mxu0 0
        %3269 = vmatprep.subr.bf16.mxu0 0
        %3270 = vmatpush1.bf16.msra.mxu0 0
        %3271 = vmatprep.mubr.bf16.mxu0 0
        %3272 = vmatmul.mubr.bf16.gmra.mrb[0].mxu0 %v3231
        %v3273 = vpop.f32.mrb[0].mxu0
        %v3274 = vadd.f32 0.0, %v3273
        %v3275 = vpop.f32.mrb[0].mxu0
        %v3276 = vpop.f32.mrb[0].mxu0
        %v3277 = vadd.f32 0.0, %v3276
        %v3278 = vpop.f32.mrb[0].mxu0
        %3279 = vmatprep.mubr.bf16.mxu0 0
        %3280 = vmatmul.mubr.bf16.gmra.mrb[0].mxu0 %v3234
        %v3281 = vpop.f32.mrb[0].mxu0
        %v3282 = vadd.f32 0.0, %v3281
        %v3283 = vpop.f32.mrb[0].mxu0
        %v3284 = vpop.f32.mrb[0].mxu0
        %v3285 = vadd.f32 0.0, %v3284
        %v3286 = vpop.f32.mrb[0].mxu0
        %3287 = vmatprep.mubr.bf16.mxu0 0
        %3288 = vmatmul.mubr.bf16.gmra.mrb[0].mxu0 %v3237
        %v3289 = vpop.f32.mrb[0].mxu0
        %v3290 = vadd.f32 0.0, %v3289
        %v3291 = vpop.f32.mrb[0].mxu0
        %v3292 = vpop.f32.mrb[0].mxu0
        %v3293 = vadd.f32 0.0, %v3292
        %v3294 = vpop.f32.mrb[0].mxu0
        %3295 = vdwg.mxu0
        %v3297 = vsel %vm2177, %v2469, 0
        %v3300 = vsel %vm2177, %v2781, 0
        %v3303 = vsel %vm2177, %v3093, 0
        %3305 = vmatprep.subr.bf16.mxu0 0
        %3306 = vmatpush1.bf16.msra.mxu0 %v2132
        %3307 = vmatprep.subr.bf16.mxu0 0
        %3308 = vmatpush1.bf16.msra.mxu0 0
        %3309 = vmatprep.subr.bf16.mxu0 0
        %3310 = vmatpush1.bf16.msra.mxu0 0
        %3311 = vmatprep.subr.bf16.mxu0 0
        %3312 = vmatpush1.bf16.msra.mxu0 0
        %3313 = vmatprep.subr.bf16.mxu0 0
        %3314 = vmatpush1.bf16.msra.mxu0 0
        %3315 = vmatprep.subr.bf16.mxu0 0
        %3316 = vmatpush1.bf16.msra.mxu0 0
        %3317 = vmatprep.subr.bf16.mxu0 0
        %3318 = vmatpush1.bf16.msra.mxu0 0
        %3319 = vmatprep.subr.bf16.mxu0 0
        %3320 = vmatpush1.bf16.msra.mxu0 0
        %3321 = vmatprep.subr.bf16.mxu0 0
        %3322 = vmatpush1.bf16.msra.mxu0 0
        %3323 = vmatprep.subr.bf16.mxu0 0
        %3324 = vmatpush1.bf16.msra.mxu0 0
        %3325 = vmatprep.subr.bf16.mxu0 0
        %3326 = vmatpush1.bf16.msra.mxu0 0
        %3327 = vmatprep.subr.bf16.mxu0 0
        %3328 = vmatpush1.bf16.msra.mxu0 0
        %3329 = vmatprep.subr.bf16.mxu0 0
        %3330 = vmatpush1.bf16.msra.mxu0 0
        %3331 = vmatprep.subr.bf16.mxu0 0
        %3332 = vmatpush1.bf16.msra.mxu0 0
        %3333 = vmatprep.subr.bf16.mxu0 0
        %3334 = vmatpush1.bf16.msra.mxu0 0
        %3335 = vmatprep.subr.bf16.mxu0 0
        %3336 = vmatpush1.bf16.msra.mxu0 0
        %3337 = vmatprep.mubr.bf16.mxu0 0
        %3338 = vmatmul.mubr.bf16.gmra.mrb[0].mxu0 %v3297
        %v3339 = vpop.f32.mrb[0].mxu0
        %v3340 = vadd.f32 0.0, %v3339
        %v3341 = vpop.f32.mrb[0].mxu0
        %v3342 = vpop.f32.mrb[0].mxu0
        %v3343 = vadd.f32 0.0, %v3342
        %v3344 = vpop.f32.mrb[0].mxu0
        %3345 = vmatprep.mubr.bf16.mxu0 0
        %3346 = vmatmul.mubr.bf16.gmra.mrb[0].mxu0 %v3300
        %v3347 = vpop.f32.mrb[0].mxu0
        %v3348 = vadd.f32 0.0, %v3347
        %v3349 = vpop.f32.mrb[0].mxu0
        %v3350 = vpop.f32.mrb[0].mxu0
        %v3351 = vadd.f32 0.0, %v3350
        %v3352 = vpop.f32.mrb[0].mxu0
        %3353 = vmatprep.mubr.bf16.mxu0 0
        %3354 = vmatmul.mubr.bf16.gmra.mrb[0].mxu0 %v3303
        %v3355 = vpop.f32.mrb[0].mxu0
        %v3356 = vadd.f32 0.0, %v3355
        %v3357 = vpop.f32.mrb[0].mxu0
        %v3358 = vpop.f32.mrb[0].mxu0
        %v3359 = vadd.f32 0.0, %v3358
        %v3360 = vpop.f32.mrb[0].mxu0
        %3361 = vdwg.mxu0
        %v3363 = vsel %vm2177, %v2470, 0
        %v3366 = vsel %vm2177, %v2782, 0
        %v3369 = vsel %vm2177, %v3094, 0
        %3371 = vmatprep.subr.bf16.mxu0 0
        %3372 = vmatpush1.bf16.msra.mxu0 %v2133
        %3373 = vmatprep.subr.bf16.mxu0 0
        %3374 = vmatpush1.bf16.msra.mxu0 0
        %3375 = vmatprep.subr.bf16.mxu0 0
        %3376 = vmatpush1.bf16.msra.mxu0 0
        %3377 = vmatprep.subr.bf16.mxu0 0
        %3378 = vmatpush1.bf16.msra.mxu0 0
        %3379 = vmatprep.subr.bf16.mxu0 0
        %3380 = vmatpush1.bf16.msra.mxu0 0
        %3381 = vmatprep.subr.bf16.mxu0 0
        %3382 = vmatpush1.bf16.msra.mxu0 0
        %3383 = vmatprep.subr.bf16.mxu0 0
        %3384 = vmatpush1.bf16.msra.mxu0 0
        %3385 = vmatprep.subr.bf16.mxu0 0
        %3386 = vmatpush1.bf16.msra.mxu0 0
        %3387 = vmatprep.subr.bf16.mxu0 0
        %3388 = vmatpush1.bf16.msra.mxu0 0
        %3389 = vmatprep.subr.bf16.mxu0 0
        %3390 = vmatpush1.bf16.msra.mxu0 0
        %3391 = vmatprep.subr.bf16.mxu0 0
        %3392 = vmatpush1.bf16.msra.mxu0 0
        %3393 = vmatprep.subr.bf16.mxu0 0
        %3394 = vmatpush1.bf16.msra.mxu0 0
        %3395 = vmatprep.subr.bf16.mxu0 0
        %3396 = vmatpush1.bf16.msra.mxu0 0
        %3397 = vmatprep.subr.bf16.mxu0 0
        %3398 = vmatpush1.bf16.msra.mxu0 0
        %3399 = vmatprep.subr.bf16.mxu0 0
        %3400 = vmatpush1.bf16.msra.mxu0 0
        %3401 = vmatprep.subr.bf16.mxu0 0
        %3402 = vmatpush1.bf16.msra.mxu0 0
        %3403 = vmatprep.mubr.bf16.mxu0 0
        %3404 = vmatmul.mubr.bf16.gmra.mrb[0].mxu0 %v3363
        %v3405 = vpop.f32.mrb[0].mxu0
        %v3406 = vadd.f32 0.0, %v3405
        %v3407 = vpop.f32.mrb[0].mxu0
        %v3408 = vpop.f32.mrb[0].mxu0
        %v3409 = vadd.f32 0.0, %v3408
        %v3410 = vpop.f32.mrb[0].mxu0
        %3411 = vmatprep.mubr.bf16.mxu0 0
        %3412 = vmatmul.mubr.bf16.gmra.mrb[0].mxu0 %v3366
        %v3413 = vpop.f32.mrb[0].mxu0
        %v3414 = vadd.f32 0.0, %v3413
        %v3415 = vpop.f32.mrb[0].mxu0
        %v3416 = vpop.f32.mrb[0].mxu0
        %v3417 = vadd.f32 0.0, %v3416
        %v3418 = vpop.f32.mrb[0].mxu0
        %3419 = vmatprep.mubr.bf16.mxu0 0
        %3420 = vmatmul.mubr.bf16.gmra.mrb[0].mxu0 %v3369
        %v3421 = vpop.f32.mrb[0].mxu0
        %v3422 = vadd.f32 0.0, %v3421
        %v3423 = vpop.f32.mrb[0].mxu0
        %v3424 = vpop.f32.mrb[0].mxu0
        %v3425 = vadd.f32 0.0, %v3424
        %v3426 = vpop.f32.mrb[0].mxu0
        %3427 = vdwg.mxu0
        %v3429 = vsel %vm2177, %v2471, 0
        %v3432 = vsel %vm2177, %v2783, 0
        %v3435 = vsel %vm2177, %v3095, 0
        %3437 = vmatprep.subr.bf16.mxu0 0
        %3438 = vmatpush1.bf16.msra.mxu0 %v2134
        %3439 = vmatprep.subr.bf16.mxu0 0
        %3440 = vmatpush1.bf16.msra.mxu0 0
        %3441 = vmatprep.subr.bf16.mxu0 0
        %3442 = vmatpush1.bf16.msra.mxu0 0
        %3443 = vmatprep.subr.bf16.mxu0 0
        %3444 = vmatpush1.bf16.msra.mxu0 0
        %3445 = vmatprep.subr.bf16.mxu0 0
        %3446 = vmatpush1.bf16.msra.mxu0 0
        %3447 = vmatprep.subr.bf16.mxu0 0
        %3448 = vmatpush1.bf16.msra.mxu0 0
        %3449 = vmatprep.subr.bf16.mxu0 0
        %3450 = vmatpush1.bf16.msra.mxu0 0
        %3451 = vmatprep.subr.bf16.mxu0 0
        %3452 = vmatpush1.bf16.msra.mxu0 0
        %3453 = vmatprep.subr.bf16.mxu0 0
        %3454 = vmatpush1.bf16.msra.mxu0 0
        %3455 = vmatprep.subr.bf16.mxu0 0
        %3456 = vmatpush1.bf16.msra.mxu0 0
        %3457 = vmatprep.subr.bf16.mxu0 0
        %3458 = vmatpush1.bf16.msra.mxu0 0
        %3459 = vmatprep.subr.bf16.mxu0 0
        %3460 = vmatpush1.bf16.msra.mxu0 0
        %3461 = vmatprep.subr.bf16.mxu0 0
        %3462 = vmatpush1.bf16.msra.mxu0 0
        %3463 = vmatprep.subr.bf16.mxu0 0
        %3464 = vmatpush1.bf16.msra.mxu0 0
        %3465 = vmatprep.subr.bf16.mxu0 0
        %3466 = vmatpush1.bf16.msra.mxu0 0
        %3467 = vmatprep.subr.bf16.mxu0 0
        %3468 = vmatpush1.bf16.msra.mxu0 0
        %3469 = vmatprep.mubr.bf16.mxu0 0
        %3470 = vmatmul.mubr.bf16.gmra.mrb[0].mxu0 %v3429
        %v3471 = vpop.f32.mrb[0].mxu0
        %v3472 = vadd.f32 0.0, %v3471
        %v3473 = vpop.f32.mrb[0].mxu0
        %v3474 = vpop.f32.mrb[0].mxu0
        %v3475 = vadd.f32 0.0, %v3474
        %v3476 = vpop.f32.mrb[0].mxu0
        %3477 = vmatprep.mubr.bf16.mxu0 0
        %3478 = vmatmul.mubr.bf16.gmra.mrb[0].mxu0 %v3432
        %v3479 = vpop.f32.mrb[0].mxu0
        %v3480 = vadd.f32 0.0, %v3479
        %v3481 = vpop.f32.mrb[0].mxu0
        %v3482 = vpop.f32.mrb[0].mxu0
        %v3483 = vadd.f32 0.0, %v3482
        %v3484 = vpop.f32.mrb[0].mxu0
        %3485 = vmatprep.mubr.bf16.mxu0 0
        %3486 = vmatmul.mubr.bf16.gmra.mrb[0].mxu0 %v3435
        %v3487 = vpop.f32.mrb[0].mxu0
        %v3488 = vadd.f32 0.0, %v3487
        %v3489 = vpop.f32.mrb[0].mxu0
        %v3490 = vpop.f32.mrb[0].mxu0
        %v3491 = vadd.f32 0.0, %v3490
        %v3492 = vpop.f32.mrb[0].mxu0
        %3493 = vdwg.mxu0
        %v3495 = vsel %vm2177, %v2472, 0
        %v3498 = vsel %vm2177, %v2784, 0
        %v3501 = vsel %vm2177, %v3096, 0
        %3503 = vmatprep.subr.bf16.mxu0 0
        %3504 = vmatpush1.bf16.msra.mxu0 %v2135
        %3505 = vmatprep.subr.bf16.mxu0 0
        %3506 = vmatpush1.bf16.msra.mxu0 0
        %3507 = vmatprep.subr.bf16.mxu0 0
        %3508 = vmatpush1.bf16.msra.mxu0 0
        %3509 = vmatprep.subr.bf16.mxu0 0
        %3510 = vmatpush1.bf16.msra.mxu0 0
        %3511 = vmatprep.subr.bf16.mxu0 0
        %3512 = vmatpush1.bf16.msra.mxu0 0
        %3513 = vmatprep.subr.bf16.mxu0 0
        %3514 = vmatpush1.bf16.msra.mxu0 0
        %3515 = vmatprep.subr.bf16.mxu0 0
        %3516 = vmatpush1.bf16.msra.mxu0 0
        %3517 = vmatprep.subr.bf16.mxu0 0
        %3518 = vmatpush1.bf16.msra.mxu0 0
        %3519 = vmatprep.subr.bf16.mxu0 0
        %3520 = vmatpush1.bf16.msra.mxu0 0
        %3521 = vmatprep.subr.bf16.mxu0 0
        %3522 = vmatpush1.bf16.msra.mxu0 0
        %3523 = vmatprep.subr.bf16.mxu0 0
        %3524 = vmatpush1.bf16.msra.mxu0 0
        %3525 = vmatprep.subr.bf16.mxu0 0
        %3526 = vmatpush1.bf16.msra.mxu0 0
        %3527 = vmatprep.subr.bf16.mxu0 0
        %3528 = vmatpush1.bf16.msra.mxu0 0
        %3529 = vmatprep.subr.bf16.mxu0 0
        %3530 = vmatpush1.bf16.msra.mxu0 0
        %3531 = vmatprep.subr.bf16.mxu0 0
        %3532 = vmatpush1.bf16.msra.mxu0 0
        %3533 = vmatprep.subr.bf16.mxu0 0
        %3534 = vmatpush1.bf16.msra.mxu0 0
        %3535 = vmatprep.mubr.bf16.mxu0 0
        %3536 = vmatmul.mubr.bf16.gmra.mrb[0].mxu0 %v3495
        %v3537 = vpop.f32.mrb[0].mxu0
        %v3538 = vadd.f32 0.0, %v3537
        %v3539 = vpop.f32.mrb[0].mxu0
        %v3540 = vpop.f32.mrb[0].mxu0
        %v3541 = vadd.f32 0.0, %v3540
        %v3542 = vpop.f32.mrb[0].mxu0
        %3543 = vmatprep.mubr.bf16.mxu0 0
        %3544 = vmatmul.mubr.bf16.gmra.mrb[0].mxu0 %v3498
        %v3545 = vpop.f32.mrb[0].mxu0
        %v3546 = vadd.f32 0.0, %v3545
        %v3547 = vpop.f32.mrb[0].mxu0
        %v3548 = vpop.f32.mrb[0].mxu0
        %v3549 = vadd.f32 0.0, %v3548
        %v3550 = vpop.f32.mrb[0].mxu0
        %3551 = vmatprep.mubr.bf16.mxu0 0
        %3552 = vmatmul.mubr.bf16.gmra.mrb[0].mxu0 %v3501
        %v3553 = vpop.f32.mrb[0].mxu0
        %v3554 = vadd.f32 0.0, %v3553
        %v3555 = vpop.f32.mrb[0].mxu0
        %v3556 = vpop.f32.mrb[0].mxu0
        %v3557 = vadd.f32 0.0, %v3556
        %v3558 = vpop.f32.mrb[0].mxu0
        %3559 = vdwg.mxu0
        %v3561 = vsel %vm2177, %v2473, 0
        %v3564 = vsel %vm2177, %v2785, 0
        %v3567 = vsel %vm2177, %v3097, 0
        %3569 = vmatprep.subr.bf16.mxu0 0
        %3570 = vmatpush1.bf16.msra.mxu0 %v2136
        %3571 = vmatprep.subr.bf16.mxu0 0
        %3572 = vmatpush1.bf16.msra.mxu0 0
        %3573 = vmatprep.subr.bf16.mxu0 0
        %3574 = vmatpush1.bf16.msra.mxu0 0
        %3575 = vmatprep.subr.bf16.mxu0 0
        %3576 = vmatpush1.bf16.msra.mxu0 0
        %3577 = vmatprep.subr.bf16.mxu0 0
        %3578 = vmatpush1.bf16.msra.mxu0 0
        %3579 = vmatprep.subr.bf16.mxu0 0
        %3580 = vmatpush1.bf16.msra.mxu0 0
        %3581 = vmatprep.subr.bf16.mxu0 0
        %3582 = vmatpush1.bf16.msra.mxu0 0
        %3583 = vmatprep.subr.bf16.mxu0 0
        %3584 = vmatpush1.bf16.msra.mxu0 0
        %3585 = vmatprep.subr.bf16.mxu0 0
        %3586 = vmatpush1.bf16.msra.mxu0 0
        %3587 = vmatprep.subr.bf16.mxu0 0
        %3588 = vmatpush1.bf16.msra.mxu0 0
        %3589 = vmatprep.subr.bf16.mxu0 0
        %3590 = vmatpush1.bf16.msra.mxu0 0
        %3591 = vmatprep.subr.bf16.mxu0 0
        %3592 = vmatpush1.bf16.msra.mxu0 0
        %3593 = vmatprep.subr.bf16.mxu0 0
        %3594 = vmatpush1.bf16.msra.mxu0 0
        %3595 = vmatprep.subr.bf16.mxu0 0
        %3596 = vmatpush1.bf16.msra.mxu0 0
        %3597 = vmatprep.subr.bf16.mxu0 0
        %3598 = vmatpush1.bf16.msra.mxu0 0
        %3599 = vmatprep.subr.bf16.mxu0 0
        %3600 = vmatpush1.bf16.msra.mxu0 0
        %3601 = vmatprep.mubr.bf16.mxu0 0
        %3602 = vmatmul.mubr.bf16.gmra.mrb[0].mxu0 %v3561
        %v3603 = vpop.f32.mrb[0].mxu0
        %v3604 = vadd.f32 0.0, %v3603
        %v3605 = vpop.f32.mrb[0].mxu0
        %v3606 = vpop.f32.mrb[0].mxu0
        %v3607 = vadd.f32 0.0, %v3606
        %v3608 = vpop.f32.mrb[0].mxu0
        %3609 = vmatprep.mubr.bf16.mxu0 0
        %3610 = vmatmul.mubr.bf16.gmra.mrb[0].mxu0 %v3564
        %v3611 = vpop.f32.mrb[0].mxu0
        %v3612 = vadd.f32 0.0, %v3611
        %v3613 = vpop.f32.mrb[0].mxu0
        %v3614 = vpop.f32.mrb[0].mxu0
        %v3615 = vadd.f32 0.0, %v3614
        %v3616 = vpop.f32.mrb[0].mxu0
        %3617 = vmatprep.mubr.bf16.mxu0 0
        %3618 = vmatmul.mubr.bf16.gmra.mrb[0].mxu0 %v3567
        %v3619 = vpop.f32.mrb[0].mxu0
        %v3620 = vadd.f32 0.0, %v3619
        %v3621 = vpop.f32.mrb[0].mxu0
        %v3622 = vpop.f32.mrb[0].mxu0
        %v3623 = vadd.f32 0.0, %v3622
        %v3624 = vpop.f32.mrb[0].mxu0
        %3625 = vdwg.mxu0
        %v3626 = vadd.f32 %v3142, %v2153
        %v3627 = vadd.f32 %v3145, %v2154
        %v3628 = vadd.f32 %v3150, %v2153
        %v3629 = vadd.f32 %v3153, %v2154
        %v3630 = vadd.f32 %v3158, %v2153
        %v3631 = vadd.f32 %v3161, %v2154
        %v3632 = vadd.f32 %v3208, %v2155
        %v3633 = vadd.f32 %v3211, %v2156
        %v3634 = vadd.f32 %v3216, %v2155
        %v3635 = vadd.f32 %v3219, %v2156
        %v3636 = vadd.f32 %v3224, %v2155
        %v3637 = vadd.f32 %v3227, %v2156
        %v3638 = vadd.f32 %v3274, %v2157
        %v3639 = vadd.f32 %v3277, %v2158
        %v3640 = vadd.f32 %v3282, %v2157
        %v3641 = vadd.f32 %v3285, %v2158
        %v3642 = vadd.f32 %v3290, %v2157
        %v3643 = vadd.f32 %v3293, %v2158
        %v3644 = vadd.f32 %v3340, %v2159
        %v3645 = vadd.f32 %v3343, %v2160
        %v3646 = vadd.f32 %v3348, %v2159
        %v3647 = vadd.f32 %v3351, %v2160
        %v3648 = vadd.f32 %v3356, %v2159
        %v3649 = vadd.f32 %v3359, %v2160
        %v3650 = vadd.f32 %v3406, %v2161
        %v3651 = vadd.f32 %v3409, %v2162
        %v3652 = vadd.f32 %v3414, %v2161
        %v3653 = vadd.f32 %v3417, %v2162
        %v3654 = vadd.f32 %v3422, %v2161
        %v3655 = vadd.f32 %v3425, %v2162
        %v3656 = vadd.f32 %v3472, %v2163
        %v3657 = vadd.f32 %v3475, %v2164
        %v3658 = vadd.f32 %v3480, %v2163
        %v3659 = vadd.f32 %v3483, %v2164
        %v3660 = vadd.f32 %v3488, %v2163
        %v3661 = vadd.f32 %v3491, %v2164
        %v3662 = vadd.f32 %v3538, %v2165
        %v3663 = vadd.f32 %v3541, %v2166
        %v3664 = vadd.f32 %v3546, %v2165
        %v3665 = vadd.f32 %v3549, %v2166
        %v3666 = vadd.f32 %v3554, %v2165
        %v3667 = vadd.f32 %v3557, %v2166
        %v3668 = vadd.f32 %v3604, %v2167
        %v3669 = vadd.f32 %v3607, %v2168
        %v3670 = vadd.f32 %v3612, %v2167
        %v3671 = vadd.f32 %v3615, %v2168
        %v3672 = vadd.f32 %v3620, %v2167
        %v3673 = vadd.f32 %v3623, %v2168
        %v3675 = vlaneseq
        %v3676 = vshrl.u32 %v3675, 7
        %v3677 = vsub.s32 0, %v3676
        %v3678 = vrot.slane %v2169, %v3677
        %v3680 = vmul.f32 %v3626, %v3678
        %v3681 = vmul.f32 %v3627, %v3678
        %v3682 = vmul.f32 %v3628, %v3678
        %v3683 = vmul.f32 %v3629, %v3678
        %v3684 = vmul.f32 %v3630, %v3678
        %v3685 = vmul.f32 %v3631, %v3678
        %v3686 = vmul.f32 %v3632, %v3678
        %v3687 = vmul.f32 %v3633, %v3678
        %v3688 = vmul.f32 %v3634, %v3678
        %v3689 = vmul.f32 %v3635, %v3678
        %v3690 = vmul.f32 %v3636, %v3678
        %v3691 = vmul.f32 %v3637, %v3678
        %v3692 = vmul.f32 %v3638, %v3678
        %v3693 = vmul.f32 %v3639, %v3678
        %v3694 = vmul.f32 %v3640, %v3678
        %v3695 = vmul.f32 %v3641, %v3678
        %v3696 = vmul.f32 %v3642, %v3678
        %v3697 = vmul.f32 %v3643, %v3678
        %v3698 = vmul.f32 %v3644, %v3678
        %v3699 = vmul.f32 %v3645, %v3678
        %v3700 = vmul.f32 %v3646, %v3678
        %v3701 = vmul.f32 %v3647, %v3678
        %v3702 = vmul.f32 %v3648, %v3678
        %v3703 = vmul.f32 %v3649, %v3678
        %v3704 = vmul.f32 %v3650, %v3678
        %v3705 = vmul.f32 %v3651, %v3678
        %v3706 = vmul.f32 %v3652, %v3678
        %v3707 = vmul.f32 %v3653, %v3678
        %v3708 = vmul.f32 %v3654, %v3678
        %v3709 = vmul.f32 %v3655, %v3678
        %v3710 = vmul.f32 %v3656, %v3678
        %v3711 = vmul.f32 %v3657, %v3678
        %v3712 = vmul.f32 %v3658, %v3678
        %v3713 = vmul.f32 %v3659, %v3678
        %v3714 = vmul.f32 %v3660, %v3678
        %v3715 = vmul.f32 %v3661, %v3678
        %v3716 = vmul.f32 %v3662, %v3678
        %v3717 = vmul.f32 %v3663, %v3678
        %v3718 = vmul.f32 %v3664, %v3678
        %v3719 = vmul.f32 %v3665, %v3678
        %v3720 = vmul.f32 %v3666, %v3678
        %v3721 = vmul.f32 %v3667, %v3678
        %v3722 = vmul.f32 %v3668, %v3678
        %v3723 = vmul.f32 %v3669, %v3678
        %v3724 = vmul.f32 %v3670, %v3678
        %v3725 = vmul.f32 %v3671, %v3678
        %v3726 = vmul.f32 %v3672, %v3678
        %v3727 = vmul.f32 %v3673, %v3678
        %v3729 = vlaneseq
        %v3730 = vshrl.u32 %v3729, 7
        %v3731 = vsub.s32 0, %v3730
        %v3732 = vrot.slane %v2170, %v3731
        %v3734 = vadd.f32 %v3680, %v3732
        %v3735 = vadd.f32 %v3681, %v3732
        %v3736 = vadd.f32 %v3682, %v3732
        %v3737 = vadd.f32 %v3683, %v3732
        %v3738 = vadd.f32 %v3684, %v3732
        %v3739 = vadd.f32 %v3685, %v3732
        %v3740 = vadd.f32 %v3686, %v3732
        %v3741 = vadd.f32 %v3687, %v3732
        %v3742 = vadd.f32 %v3688, %v3732
        %v3743 = vadd.f32 %v3689, %v3732
        %v3744 = vadd.f32 %v3690, %v3732
        %v3745 = vadd.f32 %v3691, %v3732
        %v3746 = vadd.f32 %v3692, %v3732
        %v3747 = vadd.f32 %v3693, %v3732
        %v3748 = vadd.f32 %v3694, %v3732
        %v3749 = vadd.f32 %v3695, %v3732
        %v3750 = vadd.f32 %v3696, %v3732
        %v3751 = vadd.f32 %v3697, %v3732
        %v3752 = vadd.f32 %v3698, %v3732
        %v3753 = vadd.f32 %v3699, %v3732
        %v3754 = vadd.f32 %v3700, %v3732
        %v3755 = vadd.f32 %v3701, %v3732
        %v3756 = vadd.f32 %v3702, %v3732
        %v3757 = vadd.f32 %v3703, %v3732
        %v3758 = vadd.f32 %v3704, %v3732
        %v3759 = vadd.f32 %v3705, %v3732
        %v3760 = vadd.f32 %v3706, %v3732
        %v3761 = vadd.f32 %v3707, %v3732
        %v3762 = vadd.f32 %v3708, %v3732
        %v3763 = vadd.f32 %v3709, %v3732
        %v3764 = vadd.f32 %v3710, %v3732
        %v3765 = vadd.f32 %v3711, %v3732
        %v3766 = vadd.f32 %v3712, %v3732
        %v3767 = vadd.f32 %v3713, %v3732
        %v3768 = vadd.f32 %v3714, %v3732
        %v3769 = vadd.f32 %v3715, %v3732
        %v3770 = vadd.f32 %v3716, %v3732
        %v3771 = vadd.f32 %v3717, %v3732
        %v3772 = vadd.f32 %v3718, %v3732
        %v3773 = vadd.f32 %v3719, %v3732
        %v3774 = vadd.f32 %v3720, %v3732
        %v3775 = vadd.f32 %v3721, %v3732
        %v3776 = vadd.f32 %v3722, %v3732
        %v3777 = vadd.f32 %v3723, %v3732
        %v3778 = vadd.f32 %v3724, %v3732
        %v3779 = vadd.f32 %v3725, %v3732
        %v3780 = vadd.f32 %v3726, %v3732
        %v3781 = vadd.f32 %v3727, %v3732
        %v3782 = vmax.f32 %v3734, 0.0
        %v3783 = vmax.f32 %v3735, 0.0
        %v3784 = vmax.f32 %v3736, 0.0
        %v3785 = vmax.f32 %v3737, 0.0
        %v3786 = vmax.f32 %v3738, 0.0
        %v3787 = vmax.f32 %v3739, 0.0
        %v3788 = vmax.f32 %v3740, 0.0
        %v3789 = vmax.f32 %v3741, 0.0
        %v3790 = vmax.f32 %v3742, 0.0
        %v3791 = vmax.f32 %v3743, 0.0
        %v3792 = vmax.f32 %v3744, 0.0
        %v3793 = vmax.f32 %v3745, 0.0
        %v3794 = vmax.f32 %v3746, 0.0
        %v3795 = vmax.f32 %v3747, 0.0
        %v3796 = vmax.f32 %v3748, 0.0
        %v3797 = vmax.f32 %v3749, 0.0
        %v3798 = vmax.f32 %v3750, 0.0
        %v3799 = vmax.f32 %v3751, 0.0
        %v3800 = vmax.f32 %v3752, 0.0
        %v3801 = vmax.f32 %v3753, 0.0
        %v3802 = vmax.f32 %v3754, 0.0
        %v3803 = vmax.f32 %v3755, 0.0
        %v3804 = vmax.f32 %v3756, 0.0
        %v3805 = vmax.f32 %v3757, 0.0
        %v3806 = vmax.f32 %v3758, 0.0
        %v3807 = vmax.f32 %v3759, 0.0
        %v3808 = vmax.f32 %v3760, 0.0
        %v3809 = vmax.f32 %v3761, 0.0
        %v3810 = vmax.f32 %v3762, 0.0
        %v3811 = vmax.f32 %v3763, 0.0
        %v3812 = vmax.f32 %v3764, 0.0
        %v3813 = vmax.f32 %v3765, 0.0
        %v3814 = vmax.f32 %v3766, 0.0
        %v3815 = vmax.f32 %v3767, 0.0
        %v3816 = vmax.f32 %v3768, 0.0
        %v3817 = vmax.f32 %v3769, 0.0
        %v3818 = vmax.f32 %v3770, 0.0
        %v3819 = vmax.f32 %v3771, 0.0
        %v3820 = vmax.f32 %v3772, 0.0
        %v3821 = vmax.f32 %v3773, 0.0
        %v3822 = vmax.f32 %v3774, 0.0
        %v3823 = vmax.f32 %v3775, 0.0
        %v3824 = vmax.f32 %v3776, 0.0
        %v3825 = vmax.f32 %v3777, 0.0
        %v3826 = vmax.f32 %v3778, 0.0
        %v3827 = vmax.f32 %v3779, 0.0
        %v3828 = vmax.f32 %v3780, 0.0
        %v3829 = vmax.f32 %v3781, 0.0
        %v3830 = vpack.c.bf16 %v3783, %v3782
        %v3831 = vpack.c.bf16 %v3785, %v3784
        %v3832 = vpack.c.bf16 %v3787, %v3786
        %v3833 = vpack.c.bf16 %v3789, %v3788
        %v3834 = vpack.c.bf16 %v3791, %v3790
        %v3835 = vpack.c.bf16 %v3793, %v3792
        %v3836 = vpack.c.bf16 %v3795, %v3794
        %v3837 = vpack.c.bf16 %v3797, %v3796
        %v3838 = vpack.c.bf16 %v3799, %v3798
        %v3839 = vpack.c.bf16 %v3801, %v3800
        %v3840 = vpack.c.bf16 %v3803, %v3802
        %v3841 = vpack.c.bf16 %v3805, %v3804
        %v3842 = vpack.c.bf16 %v3807, %v3806
        %v3843 = vpack.c.bf16 %v3809, %v3808
        %v3844 = vpack.c.bf16 %v3811, %v3810
        %v3845 = vpack.c.bf16 %v3813, %v3812
        %v3846 = vpack.c.bf16 %v3815, %v3814
        %v3847 = vpack.c.bf16 %v3817, %v3816
        %v3848 = vpack.c.bf16 %v3819, %v3818
        %v3849 = vpack.c.bf16 %v3821, %v3820
        %v3850 = vpack.c.bf16 %v3823, %v3822
        %v3851 = vpack.c.bf16 %v3825, %v3824
        %v3852 = vpack.c.bf16 %v3827, %v3826
        %v3853 = vpack.c.bf16 %v3829, %v3828
        %vm3854 = vcmask 64512
        %v3856 = vsel %vm3854, %v3830, 0
        %v3859 = vsel %vm3854, %v3831, 0
        %v3862 = vsel %vm3854, %v3832, 0
        %v3865 = vsel %vm3854, %v3833, 0
        %v3868 = vsel %vm3854, %v3834, 0
        %v3871 = vsel %vm3854, %v3835, 0
        %v3874 = vsel %vm3854, %v3836, 0
        %v3877 = vsel %vm3854, %v3837, 0
        %v3880 = vsel %vm3854, %v3838, 0
        %v3883 = vsel %vm3854, %v3839, 0
        %v3886 = vsel %vm3854, %v3840, 0
        %v3889 = vsel %vm3854, %v3841, 0
        %v3892 = vsel %vm3854, %v3842, 0
        %v3895 = vsel %vm3854, %v3843, 0
        %v3898 = vsel %vm3854, %v3844, 0
        %v3901 = vsel %vm3854, %v3845, 0
        %v3904 = vsel %vm3854, %v3846, 0
        %v3907 = vsel %vm3854, %v3847, 0
        %v3910 = vsel %vm3854, %v3848, 0
        %v3913 = vsel %vm3854, %v3849, 0
        %v3916 = vsel %vm3854, %v3850, 0
        %v3919 = vsel %vm3854, %v3851, 0
        %v3922 = vsel %vm3854, %v3852, 0
        %v3925 = vsel %vm3854, %v3853, 0
        %vm3927 = vcmask 1043456
        %v3929 = vsel %vm3927, %v2175, 0
        %3931 = vmatprep.subr.bf16.mxu0 0
        %3932 = vmatpush1.bf16.msra.mxu0 %v3929
        %3933 = vmatprep.subr.bf16.mxu0 0
        %3934 = vmatpush1.bf16.msra.mxu0 0
        %3935 = vmatprep.subr.bf16.mxu0 0
        %3936 = vmatpush1.bf16.msra.mxu0 0
        %3937 = vmatprep.subr.bf16.mxu0 0
        %3938 = vmatpush1.bf16.msra.mxu0 0
        %3939 = vmatprep.subr.bf16.mxu0 0
        %3940 = vmatpush1.bf16.msra.mxu0 0
        %3941 = vmatprep.subr.bf16.mxu0 0
        %3942 = vmatpush1.bf16.msra.mxu0 0
        %3943 = vmatprep.subr.bf16.mxu0 0
        %3944 = vmatpush1.bf16.msra.mxu0 0
        %3945 = vmatprep.subr.bf16.mxu0 0
        %3946 = vmatpush1.bf16.msra.mxu0 0
        %3947 = vmatprep.subr.bf16.mxu0 0
        %3948 = vmatpush1.bf16.msra.mxu0 0
        %3949 = vmatprep.subr.bf16.mxu0 0
        %3950 = vmatpush1.bf16.msra.mxu0 0
        %3951 = vmatprep.subr.bf16.mxu0 0
        %3952 = vmatpush1.bf16.msra.mxu0 0
        %3953 = vmatprep.subr.bf16.mxu0 0
        %3954 = vmatpush1.bf16.msra.mxu0 0
        %3955 = vmatprep.subr.bf16.mxu0 0
        %3956 = vmatpush1.bf16.msra.mxu0 0
        %3957 = vmatprep.subr.bf16.mxu0 0
        %3958 = vmatpush1.bf16.msra.mxu0 0
        %3959 = vmatprep.subr.bf16.mxu0 0
        %3960 = vmatpush1.bf16.msra.mxu0 0
        %3961 = vmatprep.subr.bf16.mxu0 0
        %3962 = vmatpush1.bf16.msra.mxu0 0
        %3963 = vmatprep.mubr.bf16.mxu0 0
        %3964 = vmatmul.mubr.bf16.gmra.mrb[0].mxu0 %v3856
        %v3965 = vpop.f32.mrb[0].mxu0
        %v3966 = vadd.f32 0.0, %v3965
        %v3967 = vpop.f32.mrb[0].mxu0
        %v3968 = vpop.f32.mrb[0].mxu0
        %v3969 = vadd.f32 0.0, %v3968
        %v3970 = vpop.f32.mrb[0].mxu0
        %3971 = vmatprep.mubr.bf16.mxu0 0
        %3972 = vmatmul.mubr.bf16.gmra.mrb[0].mxu0 %v3859
        %v3973 = vpop.f32.mrb[0].mxu0
        %v3974 = vadd.f32 0.0, %v3973
        %v3975 = vpop.f32.mrb[0].mxu0
        %v3976 = vpop.f32.mrb[0].mxu0
        %v3977 = vadd.f32 0.0, %v3976
        %v3978 = vpop.f32.mrb[0].mxu0
        %3979 = vmatprep.mubr.bf16.mxu0 0
        %3980 = vmatmul.mubr.bf16.gmra.mrb[0].mxu0 %v3862
        %v3981 = vpop.f32.mrb[0].mxu0
        %v3982 = vadd.f32 0.0, %v3981
        %v3983 = vpop.f32.mrb[0].mxu0
        %v3984 = vpop.f32.mrb[0].mxu0
        %v3985 = vadd.f32 0.0, %v3984
        %v3986 = vpop.f32.mrb[0].mxu0
        %3987 = vmatprep.mubr.bf16.mxu0 0
        %3988 = vmatmul.mubr.bf16.gmra.mrb[0].mxu0 %v3865
        %v3989 = vpop.f32.mrb[0].mxu0
        %v3990 = vadd.f32 0.0, %v3989
        %v3991 = vpop.f32.mrb[0].mxu0
        %v3992 = vpop.f32.mrb[0].mxu0
        %v3993 = vadd.f32 0.0, %v3992
        %v3994 = vpop.f32.mrb[0].mxu0
        %3995 = vmatprep.mubr.bf16.mxu0 0
        %3996 = vmatmul.mubr.bf16.gmra.mrb[0].mxu0 %v3868
        %v3997 = vpop.f32.mrb[0].mxu0
        %v3998 = vadd.f32 0.0, %v3997
        %v3999 = vpop.f32.mrb[0].mxu0
        %v4000 = vpop.f32.mrb[0].mxu0
        %v4001 = vadd.f32 0.0, %v4000
        %v4002 = vpop.f32.mrb[0].mxu0
        %4003 = vmatprep.mubr.bf16.mxu0 0
        %4004 = vmatmul.mubr.bf16.gmra.mrb[0].mxu0 %v3871
        %v4005 = vpop.f32.mrb[0].mxu0
        %v4006 = vadd.f32 0.0, %v4005
        %v4007 = vpop.f32.mrb[0].mxu0
        %v4008 = vpop.f32.mrb[0].mxu0
        %v4009 = vadd.f32 0.0, %v4008
        %v4010 = vpop.f32.mrb[0].mxu0
        %4011 = vmatprep.mubr.bf16.mxu0 0
        %4012 = vmatmul.mubr.bf16.gmra.mrb[0].mxu0 %v3874
        %v4013 = vpop.f32.mrb[0].mxu0
        %v4014 = vadd.f32 0.0, %v4013
        %v4015 = vpop.f32.mrb[0].mxu0
        %v4016 = vpop.f32.mrb[0].mxu0
        %v4017 = vadd.f32 0.0, %v4016
        %v4018 = vpop.f32.mrb[0].mxu0
        %4019 = vmatprep.mubr.bf16.mxu0 0
        %4020 = vmatmul.mubr.bf16.gmra.mrb[0].mxu0 %v3877
        %v4021 = vpop.f32.mrb[0].mxu0
        %v4022 = vadd.f32 0.0, %v4021
        %v4023 = vpop.f32.mrb[0].mxu0
        %v4024 = vpop.f32.mrb[0].mxu0
        %v4025 = vadd.f32 0.0, %v4024
        %v4026 = vpop.f32.mrb[0].mxu0
        %4027 = vmatprep.mubr.bf16.mxu0 0
        %4028 = vmatmul.mubr.bf16.gmra.mrb[0].mxu0 %v3880
        %v4029 = vpop.f32.mrb[0].mxu0
        %v4030 = vadd.f32 0.0, %v4029
        %v4031 = vpop.f32.mrb[0].mxu0
        %v4032 = vpop.f32.mrb[0].mxu0
        %v4033 = vadd.f32 0.0, %v4032
        %v4034 = vpop.f32.mrb[0].mxu0
        %4035 = vmatprep.mubr.bf16.mxu0 0
        %4036 = vmatmul.mubr.bf16.gmra.mrb[0].mxu0 %v3883
        %v4037 = vpop.f32.mrb[0].mxu0
        %v4038 = vadd.f32 0.0, %v4037
        %v4039 = vpop.f32.mrb[0].mxu0
        %v4040 = vpop.f32.mrb[0].mxu0
        %v4041 = vadd.f32 0.0, %v4040
        %v4042 = vpop.f32.mrb[0].mxu0
        %4043 = vmatprep.mubr.bf16.mxu0 0
        %4044 = vmatmul.mubr.bf16.gmra.mrb[0].mxu0 %v3886
        %v4045 = vpop.f32.mrb[0].mxu0
        %v4046 = vadd.f32 0.0, %v4045
        %v4047 = vpop.f32.mrb[0].mxu0
        %v4048 = vpop.f32.mrb[0].mxu0
        %v4049 = vadd.f32 0.0, %v4048
        %v4050 = vpop.f32.mrb[0].mxu0
        %4051 = vmatprep.mubr.bf16.mxu0 0
        %4052 = vmatmul.mubr.bf16.gmra.mrb[0].mxu0 %v3889
        %v4053 = vpop.f32.mrb[0].mxu0
        %v4054 = vadd.f32 0.0, %v4053
        %v4055 = vpop.f32.mrb[0].mxu0
        %v4056 = vpop.f32.mrb[0].mxu0
        %v4057 = vadd.f32 0.0, %v4056
        %v4058 = vpop.f32.mrb[0].mxu0
        %4059 = vmatprep.mubr.bf16.mxu0 0
        %4060 = vmatmul.mubr.bf16.gmra.mrb[0].mxu0 %v3892
        %v4061 = vpop.f32.mrb[0].mxu0
        %v4062 = vadd.f32 0.0, %v4061
        %v4063 = vpop.f32.mrb[0].mxu0
        %v4064 = vpop.f32.mrb[0].mxu0
        %v4065 = vadd.f32 0.0, %v4064
        %v4066 = vpop.f32.mrb[0].mxu0
        %4067 = vmatprep.mubr.bf16.mxu0 0
        %4068 = vmatmul.mubr.bf16.gmra.mrb[0].mxu0 %v3895
        %v4069 = vpop.f32.mrb[0].mxu0
        %v4070 = vadd.f32 0.0, %v4069
        %v4071 = vpop.f32.mrb[0].mxu0
        %v4072 = vpop.f32.mrb[0].mxu0
        %v4073 = vadd.f32 0.0, %v4072
        %v4074 = vpop.f32.mrb[0].mxu0
        %4075 = vmatprep.mubr.bf16.mxu0 0
        %4076 = vmatmul.mubr.bf16.gmra.mrb[0].mxu0 %v3898
        %v4077 = vpop.f32.mrb[0].mxu0
        %v4078 = vadd.f32 0.0, %v4077
        %v4079 = vpop.f32.mrb[0].mxu0
        %v4080 = vpop.f32.mrb[0].mxu0
        %v4081 = vadd.f32 0.0, %v4080
        %v4082 = vpop.f32.mrb[0].mxu0
        %4083 = vmatprep.mubr.bf16.mxu0 0
        %4084 = vmatmul.mubr.bf16.gmra.mrb[0].mxu0 %v3901
        %v4085 = vpop.f32.mrb[0].mxu0
        %v4086 = vadd.f32 0.0, %v4085
        %v4087 = vpop.f32.mrb[0].mxu0
        %v4088 = vpop.f32.mrb[0].mxu0
        %v4089 = vadd.f32 0.0, %v4088
        %v4090 = vpop.f32.mrb[0].mxu0
        %4091 = vmatprep.mubr.bf16.mxu0 0
        %4092 = vmatmul.mubr.bf16.gmra.mrb[0].mxu0 %v3904
        %v4093 = vpop.f32.mrb[0].mxu0
        %v4094 = vadd.f32 0.0, %v4093
        %v4095 = vpop.f32.mrb[0].mxu0
        %v4096 = vpop.f32.mrb[0].mxu0
        %v4097 = vadd.f32 0.0, %v4096
        %v4098 = vpop.f32.mrb[0].mxu0
        %4099 = vmatprep.mubr.bf16.mxu0 0
        %4100 = vmatmul.mubr.bf16.gmra.mrb[0].mxu0 %v3907
        %v4101 = vpop.f32.mrb[0].mxu0
        %v4102 = vadd.f32 0.0, %v4101
        %v4103 = vpop.f32.mrb[0].mxu0
        %v4104 = vpop.f32.mrb[0].mxu0
        %v4105 = vadd.f32 0.0, %v4104
        %v4106 = vpop.f32.mrb[0].mxu0
        %4107 = vmatprep.mubr.bf16.mxu0 0
        %4108 = vmatmul.mubr.bf16.gmra.mrb[0].mxu0 %v3910
        %v4109 = vpop.f32.mrb[0].mxu0
        %v4110 = vadd.f32 0.0, %v4109
        %v4111 = vpop.f32.mrb[0].mxu0
        %v4112 = vpop.f32.mrb[0].mxu0
        %v4113 = vadd.f32 0.0, %v4112
        %v4114 = vpop.f32.mrb[0].mxu0
        %4115 = vmatprep.mubr.bf16.mxu0 0
        %4116 = vmatmul.mubr.bf16.gmra.mrb[0].mxu0 %v3913
        %v4117 = vpop.f32.mrb[0].mxu0
        %v4118 = vadd.f32 0.0, %v4117
        %v4119 = vpop.f32.mrb[0].mxu0
        %v4120 = vpop.f32.mrb[0].mxu0
        %v4121 = vadd.f32 0.0, %v4120
        %v4122 = vpop.f32.mrb[0].mxu0
        %4123 = vmatprep.mubr.bf16.mxu0 0
        %4124 = vmatmul.mubr.bf16.gmra.mrb[0].mxu0 %v3916
        %v4125 = vpop.f32.mrb[0].mxu0
        %v4126 = vadd.f32 0.0, %v4125
        %v4127 = vpop.f32.mrb[0].mxu0
        %v4128 = vpop.f32.mrb[0].mxu0
        %v4129 = vadd.f32 0.0, %v4128
        %v4130 = vpop.f32.mrb[0].mxu0
        %4131 = vmatprep.mubr.bf16.mxu0 0
        %4132 = vmatmul.mubr.bf16.gmra.mrb[0].mxu0 %v3919
        %v4133 = vpop.f32.mrb[0].mxu0
        %v4134 = vadd.f32 0.0, %v4133
        %v4135 = vpop.f32.mrb[0].mxu0
        %v4136 = vpop.f32.mrb[0].mxu0
        %v4137 = vadd.f32 0.0, %v4136
        %v4138 = vpop.f32.mrb[0].mxu0
        %4139 = vmatprep.mubr.bf16.mxu0 0
        %4140 = vmatmul.mubr.bf16.gmra.mrb[0].mxu0 %v3922
        %v4141 = vpop.f32.mrb[0].mxu0
        %v4142 = vadd.f32 0.0, %v4141
        %v4143 = vpop.f32.mrb[0].mxu0
        %v4144 = vpop.f32.mrb[0].mxu0
        %v4145 = vadd.f32 0.0, %v4144
        %v4146 = vpop.f32.mrb[0].mxu0
        %4147 = vmatprep.mubr.bf16.mxu0 0
        %4148 = vmatmul.mubr.bf16.gmra.mrb[0].mxu0 %v3925
        %v4149 = vpop.f32.mrb[0].mxu0
        %v4150 = vadd.f32 0.0, %v4149
        %v4151 = vpop.f32.mrb[0].mxu0
        %v4152 = vpop.f32.mrb[0].mxu0
        %v4153 = vadd.f32 0.0, %v4152
        %v4154 = vpop.f32.mrb[0].mxu0
        %4155 = vdwg.mxu0
        %v4157 = vlaneseq
        %v4158 = vshrl.u32 %v4157, 7
        %v4159 = vsub.s32 0, %v4158
        %v4160 = vrot.slane %v2171, %v4159
        %v4162 = vmul.f32 %v3966, %v4160
        %v4163 = vmul.f32 %v3969, %v4160
        %v4164 = vmul.f32 %v3974, %v4160
        %v4165 = vmul.f32 %v3977, %v4160
        %v4166 = vmul.f32 %v3982, %v4160
        %v4167 = vmul.f32 %v3985, %v4160
        %v4168 = vmul.f32 %v3990, %v4160
        %v4169 = vmul.f32 %v3993, %v4160
        %v4170 = vmul.f32 %v3998, %v4160
        %v4171 = vmul.f32 %v4001, %v4160
        %v4172 = vmul.f32 %v4006, %v4160
        %v4173 = vmul.f32 %v4009, %v4160
        %v4174 = vmul.f32 %v4014, %v4160
        %v4175 = vmul.f32 %v4017, %v4160
        %v4176 = vmul.f32 %v4022, %v4160
        %v4177 = vmul.f32 %v4025, %v4160
        %v4178 = vmul.f32 %v4030, %v4160
        %v4179 = vmul.f32 %v4033, %v4160
        %v4180 = vmul.f32 %v4038, %v4160
        %v4181 = vmul.f32 %v4041, %v4160
        %v4182 = vmul.f32 %v4046, %v4160
        %v4183 = vmul.f32 %v4049, %v4160
        %v4184 = vmul.f32 %v4054, %v4160
        %v4185 = vmul.f32 %v4057, %v4160
        %v4186 = vmul.f32 %v4062, %v4160
        %v4187 = vmul.f32 %v4065, %v4160
        %v4188 = vmul.f32 %v4070, %v4160
        %v4189 = vmul.f32 %v4073, %v4160
        %v4190 = vmul.f32 %v4078, %v4160
        %v4191 = vmul.f32 %v4081, %v4160
        %v4192 = vmul.f32 %v4086, %v4160
        %v4193 = vmul.f32 %v4089, %v4160
        %v4194 = vmul.f32 %v4094, %v4160
        %v4195 = vmul.f32 %v4097, %v4160
        %v4196 = vmul.f32 %v4102, %v4160
        %v4197 = vmul.f32 %v4105, %v4160
        %v4198 = vmul.f32 %v4110, %v4160
        %v4199 = vmul.f32 %v4113, %v4160
        %v4200 = vmul.f32 %v4118, %v4160
        %v4201 = vmul.f32 %v4121, %v4160
        %v4202 = vmul.f32 %v4126, %v4160
        %v4203 = vmul.f32 %v4129, %v4160
        %v4204 = vmul.f32 %v4134, %v4160
        %v4205 = vmul.f32 %v4137, %v4160
        %v4206 = vmul.f32 %v4142, %v4160
        %v4207 = vmul.f32 %v4145, %v4160
        %v4208 = vmul.f32 %v4150, %v4160
        %v4209 = vmul.f32 %v4153, %v4160
        %v4211 = vlaneseq
        %v4212 = vshrl.u32 %v4211, 7
        %v4213 = vsub.s32 0, %v4212
        %v4214 = vrot.slane %v2172, %v4213
        %v4216 = vadd.f32 %v4162, %v4214
        %v4217 = vadd.f32 %v4163, %v4214
        %v4218 = vadd.f32 %v4164, %v4214
        %v4219 = vadd.f32 %v4165, %v4214
        %v4220 = vadd.f32 %v4166, %v4214
        %v4221 = vadd.f32 %v4167, %v4214
        %v4222 = vadd.f32 %v4168, %v4214
        %v4223 = vadd.f32 %v4169, %v4214
        %v4224 = vadd.f32 %v4170, %v4214
        %v4225 = vadd.f32 %v4171, %v4214
        %v4226 = vadd.f32 %v4172, %v4214
        %v4227 = vadd.f32 %v4173, %v4214
        %v4228 = vadd.f32 %v4174, %v4214
        %v4229 = vadd.f32 %v4175, %v4214
        %v4230 = vadd.f32 %v4176, %v4214
        %v4231 = vadd.f32 %v4177, %v4214
        %v4232 = vadd.f32 %v4178, %v4214
        %v4233 = vadd.f32 %v4179, %v4214
        %v4234 = vadd.f32 %v4180, %v4214
        %v4235 = vadd.f32 %v4181, %v4214
        %v4236 = vadd.f32 %v4182, %v4214
        %v4237 = vadd.f32 %v4183, %v4214
        %v4238 = vadd.f32 %v4184, %v4214
        %v4239 = vadd.f32 %v4185, %v4214
        %v4240 = vadd.f32 %v4186, %v4214
        %v4241 = vadd.f32 %v4187, %v4214
        %v4242 = vadd.f32 %v4188, %v4214
        %v4243 = vadd.f32 %v4189, %v4214
        %v4244 = vadd.f32 %v4190, %v4214
        %v4245 = vadd.f32 %v4191, %v4214
        %v4246 = vadd.f32 %v4192, %v4214
        %v4247 = vadd.f32 %v4193, %v4214
        %v4248 = vadd.f32 %v4194, %v4214
        %v4249 = vadd.f32 %v4195, %v4214
        %v4250 = vadd.f32 %v4196, %v4214
        %v4251 = vadd.f32 %v4197, %v4214
        %v4252 = vadd.f32 %v4198, %v4214
        %v4253 = vadd.f32 %v4199, %v4214
        %v4254 = vadd.f32 %v4200, %v4214
        %v4255 = vadd.f32 %v4201, %v4214
        %v4256 = vadd.f32 %v4202, %v4214
        %v4257 = vadd.f32 %v4203, %v4214
        %v4258 = vadd.f32 %v4204, %v4214
        %v4259 = vadd.f32 %v4205, %v4214
        %v4260 = vadd.f32 %v4206, %v4214
        %v4261 = vadd.f32 %v4207, %v4214
        %v4262 = vadd.f32 %v4208, %v4214
        %v4263 = vadd.f32 %v4209, %v4214
        %v4264 = vmax.f32 %v4216, 0.0
        %v4265 = vmax.f32 %v4217, 0.0
        %v4266 = vmax.f32 %v4218, 0.0
        %v4267 = vmax.f32 %v4219, 0.0
        %v4268 = vmax.f32 %v4220, 0.0
        %v4269 = vmax.f32 %v4221, 0.0
        %v4270 = vmax.f32 %v4222, 0.0
        %v4271 = vmax.f32 %v4223, 0.0
        %v4272 = vmax.f32 %v4224, 0.0
        %v4273 = vmax.f32 %v4225, 0.0
        %v4274 = vmax.f32 %v4226, 0.0
        %v4275 = vmax.f32 %v4227, 0.0
        %v4276 = vmax.f32 %v4228, 0.0
        %v4277 = vmax.f32 %v4229, 0.0
        %v4278 = vmax.f32 %v4230, 0.0
        %v4279 = vmax.f32 %v4231, 0.0
        %v4280 = vmax.f32 %v4232, 0.0
        %v4281 = vmax.f32 %v4233, 0.0
        %v4282 = vmax.f32 %v4234, 0.0
        %v4283 = vmax.f32 %v4235, 0.0
        %v4284 = vmax.f32 %v4236, 0.0
        %v4285 = vmax.f32 %v4237, 0.0
        %v4286 = vmax.f32 %v4238, 0.0
        %v4287 = vmax.f32 %v4239, 0.0
        %v4288 = vmax.f32 %v4240, 0.0
        %v4289 = vmax.f32 %v4241, 0.0
        %v4290 = vmax.f32 %v4242, 0.0
        %v4291 = vmax.f32 %v4243, 0.0
        %v4292 = vmax.f32 %v4244, 0.0
        %v4293 = vmax.f32 %v4245, 0.0
        %v4294 = vmax.f32 %v4246, 0.0
        %v4295 = vmax.f32 %v4247, 0.0
        %v4296 = vmax.f32 %v4248, 0.0
        %v4297 = vmax.f32 %v4249, 0.0
        %v4298 = vmax.f32 %v4250, 0.0
        %v4299 = vmax.f32 %v4251, 0.0
        %v4300 = vmax.f32 %v4252, 0.0
        %v4301 = vmax.f32 %v4253, 0.0
        %v4302 = vmax.f32 %v4254, 0.0
        %v4303 = vmax.f32 %v4255, 0.0
        %v4304 = vmax.f32 %v4256, 0.0
        %v4305 = vmax.f32 %v4257, 0.0
        %v4306 = vmax.f32 %v4258, 0.0
        %v4307 = vmax.f32 %v4259, 0.0
        %v4308 = vmax.f32 %v4260, 0.0
        %v4309 = vmax.f32 %v4261, 0.0
        %v4310 = vmax.f32 %v4262, 0.0
        %v4311 = vmax.f32 %v4263, 0.0
        %v4312 = vpack.c.bf16 %v4265, %v4264
        %v4313 = vpack.c.bf16 %v4267, %v4266
        %v4314 = vpack.c.bf16 %v4269, %v4268
        %v4315 = vpack.c.bf16 %v4271, %v4270
        %v4316 = vpack.c.bf16 %v4273, %v4272
        %v4317 = vpack.c.bf16 %v4275, %v4274
        %v4318 = vpack.c.bf16 %v4277, %v4276
        %v4319 = vpack.c.bf16 %v4279, %v4278
        %v4320 = vpack.c.bf16 %v4281, %v4280
        %v4321 = vpack.c.bf16 %v4283, %v4282
        %v4322 = vpack.c.bf16 %v4285, %v4284
        %v4323 = vpack.c.bf16 %v4287, %v4286
        %v4324 = vpack.c.bf16 %v4289, %v4288
        %v4325 = vpack.c.bf16 %v4291, %v4290
        %v4326 = vpack.c.bf16 %v4293, %v4292
        %v4327 = vpack.c.bf16 %v4295, %v4294
        %v4328 = vpack.c.bf16 %v4297, %v4296
        %v4329 = vpack.c.bf16 %v4299, %v4298
        %v4330 = vpack.c.bf16 %v4301, %v4300
        %v4331 = vpack.c.bf16 %v4303, %v4302
        %v4332 = vpack.c.bf16 %v4305, %v4304
        %v4333 = vpack.c.bf16 %v4307, %v4306
        %v4334 = vpack.c.bf16 %v4309, %v4308
        %v4335 = vpack.c.bf16 %v4311, %v4310
        %v4337 = vsel %vm3854, %v4312, 0
        %v4340 = vsel %vm3854, %v4313, 0
        %v4343 = vsel %vm3854, %v4314, 0
        %v4346 = vsel %vm3854, %v4315, 0
        %v4349 = vsel %vm3854, %v4316, 0
        %v4352 = vsel %vm3854, %v4317, 0
        %v4355 = vsel %vm3854, %v4318, 0
        %v4358 = vsel %vm3854, %v4319, 0
        %v4361 = vsel %vm3854, %v4320, 0
        %v4364 = vsel %vm3854, %v4321, 0
        %v4367 = vsel %vm3854, %v4322, 0
        %v4370 = vsel %vm3854, %v4323, 0
        %v4373 = vsel %vm3854, %v4324, 0
        %v4376 = vsel %vm3854, %v4325, 0
        %v4379 = vsel %vm3854, %v4326, 0
        %v4382 = vsel %vm3854, %v4327, 0
        %v4385 = vsel %vm3854, %v4328, 0
        %v4388 = vsel %vm3854, %v4329, 0
        %v4391 = vsel %vm3854, %v4330, 0
        %v4394 = vsel %vm3854, %v4331, 0
        %v4397 = vsel %vm3854, %v4332, 0
        %v4400 = vsel %vm3854, %v4333, 0
        %v4403 = vsel %vm3854, %v4334, 0
        %v4406 = vsel %vm3854, %v4335, 0
        %v4409 = vsel %vm3927, %v2176, 0
        %4411 = vmatprep.subr.bf16.mxu0 0
        %4412 = vmatpush1.bf16.msra.mxu0 %v4409
        %4413 = vmatprep.subr.bf16.mxu0 0
        %4414 = vmatpush1.bf16.msra.mxu0 0
        %4415 = vmatprep.subr.bf16.mxu0 0
        %4416 = vmatpush1.bf16.msra.mxu0 0
        %4417 = vmatprep.subr.bf16.mxu0 0
        %4418 = vmatpush1.bf16.msra.mxu0 0
        %4419 = vmatprep.subr.bf16.mxu0 0
        %4420 = vmatpush1.bf16.msra.mxu0 0
        %4421 = vmatprep.subr.bf16.mxu0 0
        %4422 = vmatpush1.bf16.msra.mxu0 0
        %4423 = vmatprep.subr.bf16.mxu0 0
        %4424 = vmatpush1.bf16.msra.mxu0 0
        %4425 = vmatprep.subr.bf16.mxu0 0
        %4426 = vmatpush1.bf16.msra.mxu0 0
        %4427 = vmatprep.subr.bf16.mxu0 0
        %4428 = vmatpush1.bf16.msra.mxu0 0
        %4429 = vmatprep.subr.bf16.mxu0 0
        %4430 = vmatpush1.bf16.msra.mxu0 0
        %4431 = vmatprep.subr.bf16.mxu0 0
        %4432 = vmatpush1.bf16.msra.mxu0 0
        %4433 = vmatprep.subr.bf16.mxu0 0
        %4434 = vmatpush1.bf16.msra.mxu0 0
        %4435 = vmatprep.subr.bf16.mxu0 0
        %4436 = vmatpush1.bf16.msra.mxu0 0
        %4437 = vmatprep.subr.bf16.mxu0 0
        %4438 = vmatpush1.bf16.msra.mxu0 0
        %4439 = vmatprep.subr.bf16.mxu0 0
        %4440 = vmatpush1.bf16.msra.mxu0 0
        %4441 = vmatprep.subr.bf16.mxu0 0
        %4442 = vmatpush1.bf16.msra.mxu0 0
        %4443 = vmatprep.mubr.bf16.mxu0 0
        %4444 = vmatmul.mubr.bf16.gmra.mrb[0].mxu0 %v4337
        %v4445 = vpop.f32.mrb[0].mxu0
        %v4446 = vadd.f32 0.0, %v4445
        %v4447 = vpop.f32.mrb[0].mxu0
        %v4448 = vpop.f32.mrb[0].mxu0
        %v4449 = vadd.f32 0.0, %v4448
        %v4450 = vpop.f32.mrb[0].mxu0
        %4451 = vmatprep.mubr.bf16.mxu0 0
        %4452 = vmatmul.mubr.bf16.gmra.mrb[0].mxu0 %v4340
        %v4453 = vpop.f32.mrb[0].mxu0
        %v4454 = vadd.f32 0.0, %v4453
        %v4455 = vpop.f32.mrb[0].mxu0
        %v4456 = vpop.f32.mrb[0].mxu0
        %v4457 = vadd.f32 0.0, %v4456
        %v4458 = vpop.f32.mrb[0].mxu0
        %4459 = vmatprep.mubr.bf16.mxu0 0
        %4460 = vmatmul.mubr.bf16.gmra.mrb[0].mxu0 %v4343
        %v4461 = vpop.f32.mrb[0].mxu0
        %v4462 = vadd.f32 0.0, %v4461
        %v4463 = vpop.f32.mrb[0].mxu0
        %v4464 = vpop.f32.mrb[0].mxu0
        %v4465 = vadd.f32 0.0, %v4464
        %v4466 = vpop.f32.mrb[0].mxu0
        %4467 = vmatprep.mubr.bf16.mxu0 0
        %4468 = vmatmul.mubr.bf16.gmra.mrb[0].mxu0 %v4346
        %v4469 = vpop.f32.mrb[0].mxu0
        %v4470 = vadd.f32 0.0, %v4469
        %v4471 = vpop.f32.mrb[0].mxu0
        %v4472 = vpop.f32.mrb[0].mxu0
        %v4473 = vadd.f32 0.0, %v4472
        %v4474 = vpop.f32.mrb[0].mxu0
        %4475 = vmatprep.mubr.bf16.mxu0 0
        %4476 = vmatmul.mubr.bf16.gmra.mrb[0].mxu0 %v4349
        %v4477 = vpop.f32.mrb[0].mxu0
        %v4478 = vadd.f32 0.0, %v4477
        %v4479 = vpop.f32.mrb[0].mxu0
        %v4480 = vpop.f32.mrb[0].mxu0
        %v4481 = vadd.f32 0.0, %v4480
        %v4482 = vpop.f32.mrb[0].mxu0
        %4483 = vmatprep.mubr.bf16.mxu0 0
        %4484 = vmatmul.mubr.bf16.gmra.mrb[0].mxu0 %v4352
        %v4485 = vpop.f32.mrb[0].mxu0
        %v4486 = vadd.f32 0.0, %v4485
        %v4487 = vpop.f32.mrb[0].mxu0
        %v4488 = vpop.f32.mrb[0].mxu0
        %v4489 = vadd.f32 0.0, %v4488
        %v4490 = vpop.f32.mrb[0].mxu0
        %4491 = vmatprep.mubr.bf16.mxu0 0
        %4492 = vmatmul.mubr.bf16.gmra.mrb[0].mxu0 %v4355
        %v4493 = vpop.f32.mrb[0].mxu0
        %v4494 = vadd.f32 0.0, %v4493
        %v4495 = vpop.f32.mrb[0].mxu0
        %v4496 = vpop.f32.mrb[0].mxu0
        %v4497 = vadd.f32 0.0, %v4496
        %v4498 = vpop.f32.mrb[0].mxu0
        %4499 = vmatprep.mubr.bf16.mxu0 0
        %4500 = vmatmul.mubr.bf16.gmra.mrb[0].mxu0 %v4358
        %v4501 = vpop.f32.mrb[0].mxu0
        %v4502 = vadd.f32 0.0, %v4501
        %v4503 = vpop.f32.mrb[0].mxu0
        %v4504 = vpop.f32.mrb[0].mxu0
        %v4505 = vadd.f32 0.0, %v4504
        %v4506 = vpop.f32.mrb[0].mxu0
        %4507 = vmatprep.mubr.bf16.mxu0 0
        %4508 = vmatmul.mubr.bf16.gmra.mrb[0].mxu0 %v4361
        %v4509 = vpop.f32.mrb[0].mxu0
        %v4510 = vadd.f32 0.0, %v4509
        %v4511 = vpop.f32.mrb[0].mxu0
        %v4512 = vpop.f32.mrb[0].mxu0
        %v4513 = vadd.f32 0.0, %v4512
        %v4514 = vpop.f32.mrb[0].mxu0
        %4515 = vmatprep.mubr.bf16.mxu0 0
        %4516 = vmatmul.mubr.bf16.gmra.mrb[0].mxu0 %v4364
        %v4517 = vpop.f32.mrb[0].mxu0
        %v4518 = vadd.f32 0.0, %v4517
        %v4519 = vpop.f32.mrb[0].mxu0
        %v4520 = vpop.f32.mrb[0].mxu0
        %v4521 = vadd.f32 0.0, %v4520
        %v4522 = vpop.f32.mrb[0].mxu0
        %4523 = vmatprep.mubr.bf16.mxu0 0
        %4524 = vmatmul.mubr.bf16.gmra.mrb[0].mxu0 %v4367
        %v4525 = vpop.f32.mrb[0].mxu0
        %v4526 = vadd.f32 0.0, %v4525
        %v4527 = vpop.f32.mrb[0].mxu0
        %v4528 = vpop.f32.mrb[0].mxu0
        %v4529 = vadd.f32 0.0, %v4528
        %v4530 = vpop.f32.mrb[0].mxu0
        %4531 = vmatprep.mubr.bf16.mxu0 0
        %4532 = vmatmul.mubr.bf16.gmra.mrb[0].mxu0 %v4370
        %v4533 = vpop.f32.mrb[0].mxu0
        %v4534 = vadd.f32 0.0, %v4533
        %v4535 = vpop.f32.mrb[0].mxu0
        %v4536 = vpop.f32.mrb[0].mxu0
        %v4537 = vadd.f32 0.0, %v4536
        %v4538 = vpop.f32.mrb[0].mxu0
        %4539 = vmatprep.mubr.bf16.mxu0 0
        %4540 = vmatmul.mubr.bf16.gmra.mrb[0].mxu0 %v4373
        %v4541 = vpop.f32.mrb[0].mxu0
        %v4542 = vadd.f32 0.0, %v4541
        %v4543 = vpop.f32.mrb[0].mxu0
        %v4544 = vpop.f32.mrb[0].mxu0
        %v4545 = vadd.f32 0.0, %v4544
        %v4546 = vpop.f32.mrb[0].mxu0
        %4547 = vmatprep.mubr.bf16.mxu0 0
        %4548 = vmatmul.mubr.bf16.gmra.mrb[0].mxu0 %v4376
        %v4549 = vpop.f32.mrb[0].mxu0
        %v4550 = vadd.f32 0.0, %v4549
        %v4551 = vpop.f32.mrb[0].mxu0
        %v4552 = vpop.f32.mrb[0].mxu0
        %v4553 = vadd.f32 0.0, %v4552
        %v4554 = vpop.f32.mrb[0].mxu0
        %4555 = vmatprep.mubr.bf16.mxu0 0
        %4556 = vmatmul.mubr.bf16.gmra.mrb[0].mxu0 %v4379
        %v4557 = vpop.f32.mrb[0].mxu0
        %v4558 = vadd.f32 0.0, %v4557
        %v4559 = vpop.f32.mrb[0].mxu0
        %v4560 = vpop.f32.mrb[0].mxu0
        %v4561 = vadd.f32 0.0, %v4560
        %v4562 = vpop.f32.mrb[0].mxu0
        %4563 = vmatprep.mubr.bf16.mxu0 0
        %4564 = vmatmul.mubr.bf16.gmra.mrb[0].mxu0 %v4382
        %v4565 = vpop.f32.mrb[0].mxu0
        %v4566 = vadd.f32 0.0, %v4565
        %v4567 = vpop.f32.mrb[0].mxu0
        %v4568 = vpop.f32.mrb[0].mxu0
        %v4569 = vadd.f32 0.0, %v4568
        %v4570 = vpop.f32.mrb[0].mxu0
        %4571 = vmatprep.mubr.bf16.mxu0 0
        %4572 = vmatmul.mubr.bf16.gmra.mrb[0].mxu0 %v4385
        %v4573 = vpop.f32.mrb[0].mxu0
        %v4574 = vadd.f32 0.0, %v4573
        %v4575 = vpop.f32.mrb[0].mxu0
        %v4576 = vpop.f32.mrb[0].mxu0
        %v4577 = vadd.f32 0.0, %v4576
        %v4578 = vpop.f32.mrb[0].mxu0
        %4579 = vmatprep.mubr.bf16.mxu0 0
        %4580 = vmatmul.mubr.bf16.gmra.mrb[0].mxu0 %v4388
        %v4581 = vpop.f32.mrb[0].mxu0
        %v4582 = vadd.f32 0.0, %v4581
        %v4583 = vpop.f32.mrb[0].mxu0
        %v4584 = vpop.f32.mrb[0].mxu0
        %v4585 = vadd.f32 0.0, %v4584
        %v4586 = vpop.f32.mrb[0].mxu0
        %4587 = vmatprep.mubr.bf16.mxu0 0
        %4588 = vmatmul.mubr.bf16.gmra.mrb[0].mxu0 %v4391
        %v4589 = vpop.f32.mrb[0].mxu0
        %v4590 = vadd.f32 0.0, %v4589
        %v4591 = vpop.f32.mrb[0].mxu0
        %v4592 = vpop.f32.mrb[0].mxu0
        %v4593 = vadd.f32 0.0, %v4592
        %v4594 = vpop.f32.mrb[0].mxu0
        %4595 = vmatprep.mubr.bf16.mxu0 0
        %4596 = vmatmul.mubr.bf16.gmra.mrb[0].mxu0 %v4394
        %v4597 = vpop.f32.mrb[0].mxu0
        %v4598 = vadd.f32 0.0, %v4597
        %v4599 = vpop.f32.mrb[0].mxu0
        %v4600 = vpop.f32.mrb[0].mxu0
        %v4601 = vadd.f32 0.0, %v4600
        %v4602 = vpop.f32.mrb[0].mxu0
        %4603 = vmatprep.mubr.bf16.mxu0 0
        %4604 = vmatmul.mubr.bf16.gmra.mrb[0].mxu0 %v4397
        %v4605 = vpop.f32.mrb[0].mxu0
        %v4606 = vadd.f32 0.0, %v4605
        %v4607 = vpop.f32.mrb[0].mxu0
        %v4608 = vpop.f32.mrb[0].mxu0
        %v4609 = vadd.f32 0.0, %v4608
        %v4610 = vpop.f32.mrb[0].mxu0
        %4611 = vmatprep.mubr.bf16.mxu0 0
        %4612 = vmatmul.mubr.bf16.gmra.mrb[0].mxu0 %v4400
        %v4613 = vpop.f32.mrb[0].mxu0
        %v4614 = vadd.f32 0.0, %v4613
        %v4615 = vpop.f32.mrb[0].mxu0
        %v4616 = vpop.f32.mrb[0].mxu0
        %v4617 = vadd.f32 0.0, %v4616
        %v4618 = vpop.f32.mrb[0].mxu0
        %4619 = vmatprep.mubr.bf16.mxu0 0
        %4620 = vmatmul.mubr.bf16.gmra.mrb[0].mxu0 %v4403
        %v4621 = vpop.f32.mrb[0].mxu0
        %v4622 = vadd.f32 0.0, %v4621
        %v4623 = vpop.f32.mrb[0].mxu0
        %v4624 = vpop.f32.mrb[0].mxu0
        %v4625 = vadd.f32 0.0, %v4624
        %v4626 = vpop.f32.mrb[0].mxu0
        %4627 = vmatprep.mubr.bf16.mxu0 0
        %4628 = vmatmul.mubr.bf16.gmra.mrb[0].mxu0 %v4406
        %v4629 = vpop.f32.mrb[0].mxu0
        %v4630 = vadd.f32 0.0, %v4629
        %v4631 = vpop.f32.mrb[0].mxu0
        %v4632 = vpop.f32.mrb[0].mxu0
        %v4633 = vadd.f32 0.0, %v4632
        %v4634 = vpop.f32.mrb[0].mxu0
        %4635 = vdwg.mxu0
        %v4637 = vlaneseq
        %v4638 = vshrl.u32 %v4637, 7
        %v4639 = vsub.s32 0, %v4638
        %v4640 = vrot.slane %v2173, %v4639
        %v4642 = vmul.f32 %v4446, %v4640
        %v4643 = vmul.f32 %v4449, %v4640
        %v4644 = vmul.f32 %v4454, %v4640
        %v4645 = vmul.f32 %v4457, %v4640
        %v4646 = vmul.f32 %v4462, %v4640
        %v4647 = vmul.f32 %v4465, %v4640
        %v4648 = vmul.f32 %v4470, %v4640
        %v4649 = vmul.f32 %v4473, %v4640
        %v4650 = vmul.f32 %v4478, %v4640
        %v4651 = vmul.f32 %v4481, %v4640
        %v4652 = vmul.f32 %v4486, %v4640
        %v4653 = vmul.f32 %v4489, %v4640
        %v4654 = vmul.f32 %v4494, %v4640
        %v4655 = vmul.f32 %v4497, %v4640
        %v4656 = vmul.f32 %v4502, %v4640
        %v4657 = vmul.f32 %v4505, %v4640
        %v4658 = vmul.f32 %v4510, %v4640
        %v4659 = vmul.f32 %v4513, %v4640
        %v4660 = vmul.f32 %v4518, %v4640
        %v4661 = vmul.f32 %v4521, %v4640
        %v4662 = vmul.f32 %v4526, %v4640
        %v4663 = vmul.f32 %v4529, %v4640
        %v4664 = vmul.f32 %v4534, %v4640
        %v4665 = vmul.f32 %v4537, %v4640
        %v4666 = vmul.f32 %v4542, %v4640
        %v4667 = vmul.f32 %v4545, %v4640
        %v4668 = vmul.f32 %v4550, %v4640
        %v4669 = vmul.f32 %v4553, %v4640
        %v4670 = vmul.f32 %v4558, %v4640
        %v4671 = vmul.f32 %v4561, %v4640
        %v4672 = vmul.f32 %v4566, %v4640
        %v4673 = vmul.f32 %v4569, %v4640
        %v4674 = vmul.f32 %v4574, %v4640
        %v4675 = vmul.f32 %v4577, %v4640
        %v4676 = vmul.f32 %v4582, %v4640
        %v4677 = vmul.f32 %v4585, %v4640
        %v4678 = vmul.f32 %v4590, %v4640
        %v4679 = vmul.f32 %v4593, %v4640
        %v4680 = vmul.f32 %v4598, %v4640
        %v4681 = vmul.f32 %v4601, %v4640
        %v4682 = vmul.f32 %v4606, %v4640
        %v4683 = vmul.f32 %v4609, %v4640
        %v4684 = vmul.f32 %v4614, %v4640
        %v4685 = vmul.f32 %v4617, %v4640
        %v4686 = vmul.f32 %v4622, %v4640
        %v4687 = vmul.f32 %v4625, %v4640
        %v4688 = vmul.f32 %v4630, %v4640
        %v4689 = vmul.f32 %v4633, %v4640
        %v4691 = vlaneseq
        %v4692 = vshrl.u32 %v4691, 7
        %v4693 = vsub.s32 0, %v4692
        %v4694 = vrot.slane %v2174, %v4693
        %v4696 = vadd.f32 %v4642, %v4694
        %v4697 = vadd.f32 %v4643, %v4694
        %v4698 = vadd.f32 %v4644, %v4694
        %v4699 = vadd.f32 %v4645, %v4694
        %v4700 = vadd.f32 %v4646, %v4694
        %v4701 = vadd.f32 %v4647, %v4694
        %v4702 = vadd.f32 %v4648, %v4694
        %v4703 = vadd.f32 %v4649, %v4694
        %v4704 = vadd.f32 %v4650, %v4694
        %v4705 = vadd.f32 %v4651, %v4694
        %v4706 = vadd.f32 %v4652, %v4694
        %v4707 = vadd.f32 %v4653, %v4694
        %v4708 = vadd.f32 %v4654, %v4694
        %v4709 = vadd.f32 %v4655, %v4694
        %v4710 = vadd.f32 %v4656, %v4694
        %v4711 = vadd.f32 %v4657, %v4694
        %v4712 = vadd.f32 %v4658, %v4694
        %v4713 = vadd.f32 %v4659, %v4694
        %v4714 = vadd.f32 %v4660, %v4694
        %v4715 = vadd.f32 %v4661, %v4694
        %v4716 = vadd.f32 %v4662, %v4694
        %v4717 = vadd.f32 %v4663, %v4694
        %v4718 = vadd.f32 %v4664, %v4694
        %v4719 = vadd.f32 %v4665, %v4694
        %v4720 = vadd.f32 %v4666, %v4694
        %v4721 = vadd.f32 %v4667, %v4694
        %v4722 = vadd.f32 %v4668, %v4694
        %v4723 = vadd.f32 %v4669, %v4694
        %v4724 = vadd.f32 %v4670, %v4694
        %v4725 = vadd.f32 %v4671, %v4694
        %v4726 = vadd.f32 %v4672, %v4694
        %v4727 = vadd.f32 %v4673, %v4694
        %v4728 = vadd.f32 %v4674, %v4694
        %v4729 = vadd.f32 %v4675, %v4694
        %v4730 = vadd.f32 %v4676, %v4694
        %v4731 = vadd.f32 %v4677, %v4694
        %v4732 = vadd.f32 %v4678, %v4694
        %v4733 = vadd.f32 %v4679, %v4694
        %v4734 = vadd.f32 %v4680, %v4694
        %v4735 = vadd.f32 %v4681, %v4694
        %v4736 = vadd.f32 %v4682, %v4694
        %v4737 = vadd.f32 %v4683, %v4694
        %v4738 = vadd.f32 %v4684, %v4694
        %v4739 = vadd.f32 %v4685, %v4694
        %v4740 = vadd.f32 %v4686, %v4694
        %v4741 = vadd.f32 %v4687, %v4694
        %v4742 = vadd.f32 %v4688, %v4694
        %v4743 = vadd.f32 %v4689, %v4694
        %v4744 = vmax.f32 %v4696, 0.0
        %v4745 = vmax.f32 %v4697, 0.0
        %v4746 = vmax.f32 %v4698, 0.0
        %v4747 = vmax.f32 %v4699, 0.0
        %v4748 = vmax.f32 %v4700, 0.0
        %v4749 = vmax.f32 %v4701, 0.0
        %v4750 = vmax.f32 %v4702, 0.0
        %v4751 = vmax.f32 %v4703, 0.0
        %v4752 = vmax.f32 %v4704, 0.0
        %v4753 = vmax.f32 %v4705, 0.0
        %v4754 = vmax.f32 %v4706, 0.0
        %v4755 = vmax.f32 %v4707, 0.0
        %v4756 = vmax.f32 %v4708, 0.0
        %v4757 = vmax.f32 %v4709, 0.0
        %v4758 = vmax.f32 %v4710, 0.0
        %v4759 = vmax.f32 %v4711, 0.0
        %v4760 = vmax.f32 %v4712, 0.0
        %v4761 = vmax.f32 %v4713, 0.0
        %v4762 = vmax.f32 %v4714, 0.0
        %v4763 = vmax.f32 %v4715, 0.0
        %v4764 = vmax.f32 %v4716, 0.0
        %v4765 = vmax.f32 %v4717, 0.0
        %v4766 = vmax.f32 %v4718, 0.0
        %v4767 = vmax.f32 %v4719, 0.0
        %v4768 = vmax.f32 %v4720, 0.0
        %v4769 = vmax.f32 %v4721, 0.0
        %v4770 = vmax.f32 %v4722, 0.0
        %v4771 = vmax.f32 %v4723, 0.0
        %v4772 = vmax.f32 %v4724, 0.0
        %v4773 = vmax.f32 %v4725, 0.0
        %v4774 = vmax.f32 %v4726, 0.0
        %v4775 = vmax.f32 %v4727, 0.0
        %v4776 = vmax.f32 %v4728, 0.0
        %v4777 = vmax.f32 %v4729, 0.0
        %v4778 = vmax.f32 %v4730, 0.0
        %v4779 = vmax.f32 %v4731, 0.0
        %v4780 = vmax.f32 %v4732, 0.0
        %v4781 = vmax.f32 %v4733, 0.0
        %v4782 = vmax.f32 %v4734, 0.0
        %v4783 = vmax.f32 %v4735, 0.0
        %v4784 = vmax.f32 %v4736, 0.0
        %v4785 = vmax.f32 %v4737, 0.0
        %v4786 = vmax.f32 %v4738, 0.0
        %v4787 = vmax.f32 %v4739, 0.0
        %v4788 = vmax.f32 %v4740, 0.0
        %v4789 = vmax.f32 %v4741, 0.0
        %v4790 = vmax.f32 %v4742, 0.0
        %v4791 = vmax.f32 %v4743, 0.0
        %v4792 = vsel %vm3854, %v4744, -inf
        %v4793 = vsel %vm3854, %v4746, -inf
        %v4794 = vmax.f32 %v4792, %v4793
        %v4795 = vsel %vm3854, %v4748, -inf
        %v4796 = vmax.f32 %v4794, %v4795
        %v4797 = vsel %vm3854, %v4745, -inf
        %v4798 = vsel %vm3854, %v4747, -inf
        %v4799 = vmax.f32 %v4797, %v4798
        %v4800 = vsel %vm3854, %v4749, -inf
        %v4801 = vmax.f32 %v4799, %v4800
        %v4802 = vsel %vm3854, %v4750, -inf
        %v4803 = vsel %vm3854, %v4752, -inf
        %v4804 = vmax.f32 %v4802, %v4803
        %v4805 = vsel %vm3854, %v4754, -inf
        %v4806 = vmax.f32 %v4804, %v4805
        %v4807 = vsel %vm3854, %v4751, -inf
        %v4808 = vsel %vm3854, %v4753, -inf
        %v4809 = vmax.f32 %v4807, %v4808
        %v4810 = vsel %vm3854, %v4755, -inf
        %v4811 = vmax.f32 %v4809, %v4810
        %v4812 = vsel %vm3854, %v4756, -inf
        %v4813 = vsel %vm3854, %v4758, -inf
        %v4814 = vmax.f32 %v4812, %v4813
        %v4815 = vsel %vm3854, %v4760, -inf
        %v4816 = vmax.f32 %v4814, %v4815
        %v4817 = vsel %vm3854, %v4757, -inf
        %v4818 = vsel %vm3854, %v4759, -inf
        %v4819 = vmax.f32 %v4817, %v4818
        %v4820 = vsel %vm3854, %v4761, -inf
        %v4821 = vmax.f32 %v4819, %v4820
        %v4822 = vsel %vm3854, %v4762, -inf
        %v4823 = vsel %vm3854, %v4764, -inf
        %v4824 = vmax.f32 %v4822, %v4823
        %v4825 = vsel %vm3854, %v4766, -inf
        %v4826 = vmax.f32 %v4824, %v4825
        %v4827 = vsel %vm3854, %v4763, -inf
        %v4828 = vsel %vm3854, %v4765, -inf
        %v4829 = vmax.f32 %v4827, %v4828
        %v4830 = vsel %vm3854, %v4767, -inf
        %v4831 = vmax.f32 %v4829, %v4830
        %v4832 = vsel %vm3854, %v4768, -inf
        %v4833 = vsel %vm3854, %v4770, -inf
        %v4834 = vmax.f32 %v4832, %v4833
        %v4835 = vsel %vm3854, %v4772, -inf
        %v4836 = vmax.f32 %v4834, %v4835
        %v4837 = vsel %vm3854, %v4769, -inf
        %v4838 = vsel %vm3854, %v4771, -inf
        %v4839 = vmax.f32 %v4837, %v4838
        %v4840 = vsel %vm3854, %v4773, -inf
        %v4841 = vmax.f32 %v4839, %v4840
        %v4842 = vsel %vm3854, %v4774, -inf
        %v4843 = vsel %vm3854, %v4776, -inf
        %v4844 = vmax.f32 %v4842, %v4843
        %v4845 = vsel %vm3854, %v4778, -inf
        %v4846 = vmax.f32 %v4844, %v4845
        %v4847 = vsel %vm3854, %v4775, -inf
        %v4848 = vsel %vm3854, %v4777, -inf
        %v4849 = vmax.f32 %v4847, %v4848
        %v4850 = vsel %vm3854, %v4779, -inf
        %v4851 = vmax.f32 %v4849, %v4850
        %v4852 = vsel %vm3854, %v4780, -inf
        %v4853 = vsel %vm3854, %v4782, -inf
        %v4854 = vmax.f32 %v4852, %v4853
        %v4855 = vsel %vm3854, %v4784, -inf
        %v4856 = vmax.f32 %v4854, %v4855
        %v4857 = vsel %vm3854, %v4781, -inf
        %v4858 = vsel %vm3854, %v4783, -inf
        %v4859 = vmax.f32 %v4857, %v4858
        %v4860 = vsel %vm3854, %v4785, -inf
        %v4861 = vmax.f32 %v4859, %v4860
        %v4862 = vsel %vm3854, %v4786, -inf
        %v4863 = vsel %vm3854, %v4788, -inf
        %v4864 = vmax.f32 %v4862, %v4863
        %v4865 = vsel %vm3854, %v4790, -inf
        %v4866 = vmax.f32 %v4864, %v4865
        %v4867 = vsel %vm3854, %v4787, -inf
        %v4868 = vsel %vm3854, %v4789, -inf
        %v4869 = vmax.f32 %v4867, %v4868
        %v4870 = vsel %vm3854, %v4791, -inf
        %v4871 = vmax.f32 %v4869, %v4870
        %v4872 = vld [vmem:[#allocation25] sm:$0x3]
        %v4874 = vsel %vm1927, %v4872, 0
        %4876 = vmatprep.subr.bf16.mxu0 0
        %4877 = vmatpush1.bf16.msra.mxu0 %v4874
        %4878 = vmatprep.subr.bf16.mxu0 0
        %4879 = vmatpush1.bf16.msra.mxu0 0
        %4880 = vmatprep.subr.bf16.mxu0 0
        %4881 = vmatpush1.bf16.msra.mxu0 0
        %4882 = vmatprep.subr.bf16.mxu0 0
        %4883 = vmatpush1.bf16.msra.mxu0 0
        %4884 = vmatprep.subr.bf16.mxu0 0
        %4885 = vmatpush1.bf16.msra.mxu0 0
        %4886 = vmatprep.subr.bf16.mxu0 0
        %4887 = vmatpush1.bf16.msra.mxu0 0
        %4888 = vmatprep.subr.bf16.mxu0 0
        %4889 = vmatpush1.bf16.msra.mxu0 0
        %4890 = vmatprep.subr.bf16.mxu0 0
        %4891 = vmatpush1.bf16.msra.mxu0 0
        %4892 = vmatprep.subr.bf16.mxu0 0
        %4893 = vmatpush1.bf16.msra.mxu0 0
        %4894 = vmatprep.subr.bf16.mxu0 0
        %4895 = vmatpush1.bf16.msra.mxu0 0
        %4896 = vmatprep.subr.bf16.mxu0 0
        %4897 = vmatpush1.bf16.msra.mxu0 0
        %4898 = vmatprep.subr.bf16.mxu0 0
        %4899 = vmatpush1.bf16.msra.mxu0 0
        %4900 = vmatprep.subr.bf16.mxu0 0
        %4901 = vmatpush1.bf16.msra.mxu0 0
        %4902 = vmatprep.subr.bf16.mxu0 0
        %4903 = vmatpush1.bf16.msra.mxu0 0
        %4904 = vmatprep.subr.bf16.mxu0 0
        %4905 = vmatpush1.bf16.msra.mxu0 0
        %4906 = vmatprep.subr.bf16.mxu0 0
        %4907 = vmatpush1.bf16.msra.mxu0 0
        %4908 = vmatprep.mubr.bf16.mxu0 0
        %4909 = vmatmul.mubr.bf16.gmra.mrb[0].mxu0 %v1904
        %v4910 = vpop.f32.mrb[0].mxu0
        %v4911 = vadd.f32 0.0, %v4910
        %v4912 = vpop.f32.mrb[0].mxu0
        %v4913 = vpop.f32.mrb[0].mxu0
        %v4914 = vadd.f32 0.0, %v4913
        %v4915 = vpop.f32.mrb[0].mxu0
        %4916 = vmatprep.mubr.bf16.mxu0 0
        %4917 = vmatmul.mubr.bf16.gmra.mrb[0].mxu0 %v1907
        %v4918 = vpop.f32.mrb[0].mxu0
        %v4919 = vadd.f32 0.0, %v4918
        %v4920 = vpop.f32.mrb[0].mxu0
        %v4921 = vpop.f32.mrb[0].mxu0
        %v4922 = vadd.f32 0.0, %v4921
        %v4923 = vpop.f32.mrb[0].mxu0
        %4924 = vmatprep.mubr.bf16.mxu0 0
        %4925 = vmatmul.mubr.bf16.gmra.mrb[0].mxu0 %v1910
        %v4926 = vpop.f32.mrb[0].mxu0
        %v4927 = vadd.f32 0.0, %v4926
        %v4928 = vpop.f32.mrb[0].mxu0
        %v4929 = vpop.f32.mrb[0].mxu0
        %v4930 = vadd.f32 0.0, %v4929
        %v4931 = vpop.f32.mrb[0].mxu0
        %4932 = vmatprep.mubr.bf16.mxu0 0
        %4933 = vmatmul.mubr.bf16.gmra.mrb[0].mxu0 %v1913
        %v4934 = vpop.f32.mrb[0].mxu0
        %v4935 = vadd.f32 0.0, %v4934
        %v4936 = vpop.f32.mrb[0].mxu0
        %v4937 = vpop.f32.mrb[0].mxu0
        %v4938 = vadd.f32 0.0, %v4937
        %v4939 = vpop.f32.mrb[0].mxu0
        %4940 = vmatprep.mubr.bf16.mxu0 0
        %4941 = vmatmul.mubr.bf16.gmra.mrb[0].mxu0 %v1916
        %v4942 = vpop.f32.mrb[0].mxu0
        %v4943 = vadd.f32 0.0, %v4942
        %v4944 = vpop.f32.mrb[0].mxu0
        %v4945 = vpop.f32.mrb[0].mxu0
        %v4946 = vadd.f32 0.0, %v4945
        %v4947 = vpop.f32.mrb[0].mxu0
        %4948 = vmatprep.mubr.bf16.mxu0 0
        %4949 = vmatmul.mubr.bf16.gmra.mrb[0].mxu0 %v1919
        %v4950 = vpop.f32.mrb[0].mxu0
        %v4951 = vadd.f32 0.0, %v4950
        %v4952 = vpop.f32.mrb[0].mxu0
        %v4953 = vpop.f32.mrb[0].mxu0
        %v4954 = vadd.f32 0.0, %v4953
        %v4955 = vpop.f32.mrb[0].mxu0
        %4956 = vmatprep.mubr.bf16.mxu0 0
        %4957 = vmatmul.mubr.bf16.gmra.mrb[0].mxu0 %v1922
        %v4958 = vpop.f32.mrb[0].mxu0
        %v4959 = vadd.f32 0.0, %v4958
        %v4960 = vpop.f32.mrb[0].mxu0
        %v4961 = vpop.f32.mrb[0].mxu0
        %v4962 = vadd.f32 0.0, %v4961
        %v4963 = vpop.f32.mrb[0].mxu0
        %4964 = vmatprep.mubr.bf16.mxu0 0
        %4965 = vmatmul.mubr.bf16.gmra.mrb[0].mxu0 %v1925
        %v4966 = vpop.f32.mrb[0].mxu0
        %v4967 = vadd.f32 0.0, %v4966
        %v4968 = vpop.f32.mrb[0].mxu0
        %v4969 = vpop.f32.mrb[0].mxu0
        %v4970 = vadd.f32 0.0, %v4969
        %v4971 = vpop.f32.mrb[0].mxu0
        %4972 = vdwg.mxu0
        %v4973 = vld [vmem:[#allocation26] sm:$0x1]
        %v4975 = vlaneseq
        %v4976 = vshrl.u32 %v4975, 7
        %v4977 = vsub.s32 0, %v4976
        %v4978 = vrot.slane %v4973, %v4977
        %v4980 = vmul.f32 %v4911, %v4978
        %v4981 = vmul.f32 %v4914, %v4978
        %v4982 = vmul.f32 %v4919, %v4978
        %v4983 = vmul.f32 %v4922, %v4978
        %v4984 = vmul.f32 %v4927, %v4978
        %v4985 = vmul.f32 %v4930, %v4978
        %v4986 = vmul.f32 %v4935, %v4978
        %v4987 = vmul.f32 %v4938, %v4978
        %v4988 = vmul.f32 %v4943, %v4978
        %v4989 = vmul.f32 %v4946, %v4978
        %v4990 = vmul.f32 %v4951, %v4978
        %v4991 = vmul.f32 %v4954, %v4978
        %v4992 = vmul.f32 %v4959, %v4978
        %v4993 = vmul.f32 %v4962, %v4978
        %v4994 = vmul.f32 %v4967, %v4978
        %v4995 = vmul.f32 %v4970, %v4978
        %v4996 = vld [vmem:[#allocation28] sm:$0x1]
        %v4998 = vlaneseq
        %v4999 = vshrl.u32 %v4998, 7
        %v5000 = vsub.s32 0, %v4999
        %v5001 = vrot.slane %v4996, %v5000
        %v5003 = vadd.f32 %v4980, %v5001
        %v5004 = vadd.f32 %v4981, %v5001
        %v5005 = vadd.f32 %v4982, %v5001
        %v5006 = vadd.f32 %v4983, %v5001
        %v5007 = vadd.f32 %v4984, %v5001
        %v5008 = vadd.f32 %v4985, %v5001
        %v5009 = vadd.f32 %v4986, %v5001
        %v5010 = vadd.f32 %v4987, %v5001
        %v5011 = vadd.f32 %v4988, %v5001
        %v5012 = vadd.f32 %v4989, %v5001
        %v5013 = vadd.f32 %v4990, %v5001
        %v5014 = vadd.f32 %v4991, %v5001
        %v5015 = vadd.f32 %v4992, %v5001
        %v5016 = vadd.f32 %v4993, %v5001
        %v5017 = vadd.f32 %v4994, %v5001
        %v5018 = vadd.f32 %v4995, %v5001
        %v5019 = vadd.f32 %v4796, %v5003
        %v5020 = vadd.f32 %v4801, %v5004
        %v5021 = vadd.f32 %v4806, %v5005
        %v5022 = vadd.f32 %v4811, %v5006
        %v5023 = vadd.f32 %v4816, %v5007
        %v5024 = vadd.f32 %v4821, %v5008
        %v5025 = vadd.f32 %v4826, %v5009
        %v5026 = vadd.f32 %v4831, %v5010
        %v5027 = vadd.f32 %v4836, %v5011
        %v5028 = vadd.f32 %v4841, %v5012
        %v5029 = vadd.f32 %v4846, %v5013
        %v5030 = vadd.f32 %v4851, %v5014
        %v5031 = vadd.f32 %v4856, %v5015
        %v5032 = vadd.f32 %v4861, %v5016
        %v5033 = vadd.f32 %v4866, %v5017
        %v5034 = vadd.f32 %v4871, %v5018
        %v5035 = vmax.f32 %v5019, 0.0
        %v5036 = vmax.f32 %v5020, 0.0
        %v5037 = vmax.f32 %v5021, 0.0
        %v5038 = vmax.f32 %v5022, 0.0
        %v5039 = vmax.f32 %v5023, 0.0
        %v5040 = vmax.f32 %v5024, 0.0
        %v5041 = vmax.f32 %v5025, 0.0
        %v5042 = vmax.f32 %v5026, 0.0
        %v5043 = vmax.f32 %v5027, 0.0
        %v5044 = vmax.f32 %v5028, 0.0
        %v5045 = vmax.f32 %v5029, 0.0
        %v5046 = vmax.f32 %v5030, 0.0
        %v5047 = vmax.f32 %v5031, 0.0
        %v5048 = vmax.f32 %v5032, 0.0
        %v5049 = vmax.f32 %v5033, 0.0
        %v5050 = vmax.f32 %v5034, 0.0
        %v5051 = vcombine.low %v5035, %v5039
        %v5052 = vcombine.high %v5035, %v5039
        %v5054 = vunpack.c.l.s4 1983009808
        %v5055 = vunpack.c.0.s8 %v5054
        %v5056 = vlaneseq
        %v5057 = vshrl.u32 %v5056, 7
        %v5058 = vsub.s32 %v5055, %v5057
        %v5059 = vrot.slane %v5051, %v5058
        %v5061 = vunpack.c.l.s4 1983009808
        %v5062 = vunpack.c.0.s8 %v5061
        %v5063 = vlaneseq
        %v5064 = vshrl.u32 %v5063, 7
        %v5065 = vsub.s32 %v5062, %v5064
        %v5066 = vrot.slane %v5052, %v5065
        %v5067 = vcombine.low %v5037, %v5041
        %v5068 = vcombine.high %v5037, %v5041
        %v5070 = vunpack.c.l.s4 1983009808
        %v5071 = vunpack.c.0.s8 %v5070
        %v5072 = vlaneseq
        %v5073 = vshrl.u32 %v5072, 7
        %v5074 = vsub.s32 %v5071, %v5073
        %v5075 = vrot.slane %v5067, %v5074
        %v5077 = vunpack.c.l.s4 1983009808
        %v5078 = vunpack.c.0.s8 %v5077
        %v5079 = vlaneseq
        %v5080 = vshrl.u32 %v5079, 7
        %v5081 = vsub.s32 %v5078, %v5080
        %v5082 = vrot.slane %v5068, %v5081
        %v5083 = vcombine.low %v5043, %v5047
        %v5084 = vcombine.high %v5043, %v5047
        %v5086 = vunpack.c.l.s4 1983009808
        %v5087 = vunpack.c.0.s8 %v5086
        %v5088 = vlaneseq
        %v5089 = vshrl.u32 %v5088, 7
        %v5090 = vsub.s32 %v5087, %v5089
        %v5091 = vrot.slane %v5083, %v5090
        %v5093 = vunpack.c.l.s4 1983009808
        %v5094 = vunpack.c.0.s8 %v5093
        %v5095 = vlaneseq
        %v5096 = vshrl.u32 %v5095, 7
        %v5097 = vsub.s32 %v5094, %v5096
        %v5098 = vrot.slane %v5084, %v5097
        %v5099 = vcombine.low %v5045, %v5049
        %v5100 = vcombine.high %v5045, %v5049
        %v5102 = vunpack.c.l.s4 1983009808
        %v5103 = vunpack.c.0.s8 %v5102
        %v5104 = vlaneseq
        %v5105 = vshrl.u32 %v5104, 7
        %v5106 = vsub.s32 %v5103, %v5105
        %v5107 = vrot.slane %v5099, %v5106
        %v5109 = vunpack.c.l.s4 1983009808
        %v5110 = vunpack.c.0.s8 %v5109
        %v5111 = vlaneseq
        %v5112 = vshrl.u32 %v5111, 7
        %v5113 = vsub.s32 %v5110, %v5112
        %v5114 = vrot.slane %v5100, %v5113
        %v5115 = vcombine.low %v5059, %v5075
        %v5116 = vcombine.high %v5059, %v5075
        %v5118 = vunpack.c.l.s4 1934713408
        %v5119 = vunpack.c.0.s8 %v5118
        %v5120 = vlaneseq
        %v5121 = vshrl.u32 %v5120, 7
        %v5122 = vsub.s32 %v5119, %v5121
        %v5123 = vrot.slane %v5115, %v5122
        %v5125 = vunpack.c.l.s4 1934713408
        %v5126 = vunpack.c.0.s8 %v5125
        %v5127 = vlaneseq
        %v5128 = vshrl.u32 %v5127, 7
        %v5129 = vsub.s32 %v5126, %v5128
        %v5130 = vrot.slane %v5116, %v5129
        %v5131 = vcombine.low %v5066, %v5082
        %v5132 = vcombine.high %v5066, %v5082
        %v5134 = vunpack.c.l.s4 1934713408
        %v5135 = vunpack.c.0.s8 %v5134
        %v5136 = vlaneseq
        %v5137 = vshrl.u32 %v5136, 7
        %v5138 = vsub.s32 %v5135, %v5137
        %v5139 = vrot.slane %v5131, %v5138
        %v5141 = vunpack.c.l.s4 1934713408
        %v5142 = vunpack.c.0.s8 %v5141
        %v5143 = vlaneseq
        %v5144 = vshrl.u32 %v5143, 7
        %v5145 = vsub.s32 %v5142, %v5144
        %v5146 = vrot.slane %v5132, %v5145
        %v5147 = vcombine.low %v5091, %v5107
        %v5148 = vcombine.high %v5091, %v5107
        %v5150 = vunpack.c.l.s4 1934713408
        %v5151 = vunpack.c.0.s8 %v5150
        %v5152 = vlaneseq
        %v5153 = vshrl.u32 %v5152, 7
        %v5154 = vsub.s32 %v5151, %v5153
        %v5155 = vrot.slane %v5147, %v5154
        %v5157 = vunpack.c.l.s4 1934713408
        %v5158 = vunpack.c.0.s8 %v5157
        %v5159 = vlaneseq
        %v5160 = vshrl.u32 %v5159, 7
        %v5161 = vsub.s32 %v5158, %v5160
        %v5162 = vrot.slane %v5148, %v5161
        %v5163 = vcombine.low %v5098, %v5114
        %v5164 = vcombine.high %v5098, %v5114
        %v5166 = vunpack.c.l.s4 1934713408
        %v5167 = vunpack.c.0.s8 %v5166
        %v5168 = vlaneseq
        %v5169 = vshrl.u32 %v5168, 7
        %v5170 = vsub.s32 %v5167, %v5169
        %v5171 = vrot.slane %v5163, %v5170
        %v5173 = vunpack.c.l.s4 1934713408
        %v5174 = vunpack.c.0.s8 %v5173
        %v5175 = vlaneseq
        %v5176 = vshrl.u32 %v5175, 7
        %v5177 = vsub.s32 %v5174, %v5176
        %v5178 = vrot.slane %v5164, %v5177
        %v5179 = vcombine.low %v5123, %v5155
        %v5180 = vcombine.high %v5123, %v5155
        %v5181 = vcombine.low %v5130, %v5162
        %v5182 = vcombine.high %v5130, %v5162
        %v5183 = vcombine.low %v5139, %v5171
        %v5184 = vcombine.high %v5139, %v5171
        %v5185 = vcombine.low %v5146, %v5178
        %v5186 = vcombine.high %v5146, %v5178
        %v5187 = vcombine.low %v5036, %v5040
        %v5188 = vcombine.high %v5036, %v5040
        %v5190 = vunpack.c.l.s4 1983009808
        %v5191 = vunpack.c.0.s8 %v5190
        %v5192 = vlaneseq
        %v5193 = vshrl.u32 %v5192, 7
        %v5194 = vsub.s32 %v5191, %v5193
        %v5195 = vrot.slane %v5187, %v5194
        %v5197 = vunpack.c.l.s4 1983009808
        %v5198 = vunpack.c.0.s8 %v5197
        %v5199 = vlaneseq
        %v5200 = vshrl.u32 %v5199, 7
        %v5201 = vsub.s32 %v5198, %v5200
        %v5202 = vrot.slane %v5188, %v5201
        %v5203 = vcombine.low %v5038, %v5042
        %v5204 = vcombine.high %v5038, %v5042
        %v5206 = vunpack.c.l.s4 1983009808
        %v5207 = vunpack.c.0.s8 %v5206
        %v5208 = vlaneseq
        %v5209 = vshrl.u32 %v5208, 7
        %v5210 = vsub.s32 %v5207, %v5209
        %v5211 = vrot.slane %v5203, %v5210
        %v5213 = vunpack.c.l.s4 1983009808
        %v5214 = vunpack.c.0.s8 %v5213
        %v5215 = vlaneseq
        %v5216 = vshrl.u32 %v5215, 7
        %v5217 = vsub.s32 %v5214, %v5216
        %v5218 = vrot.slane %v5204, %v5217
        %v5219 = vcombine.low %v5044, %v5048
        %v5220 = vcombine.high %v5044, %v5048
        %v5222 = vunpack.c.l.s4 1983009808
        %v5223 = vunpack.c.0.s8 %v5222
        %v5224 = vlaneseq
        %v5225 = vshrl.u32 %v5224, 7
        %v5226 = vsub.s32 %v5223, %v5225
        %v5227 = vrot.slane %v5219, %v5226
        %v5229 = vunpack.c.l.s4 1983009808
        %v5230 = vunpack.c.0.s8 %v5229
        %v5231 = vlaneseq
        %v5232 = vshrl.u32 %v5231, 7
        %v5233 = vsub.s32 %v5230, %v5232
        %v5234 = vrot.slane %v5220, %v5233
        %v5235 = vcombine.low %v5046, %v5050
        %v5236 = vcombine.high %v5046, %v5050
        %v5238 = vunpack.c.l.s4 1983009808
        %v5239 = vunpack.c.0.s8 %v5238
        %v5240 = vlaneseq
        %v5241 = vshrl.u32 %v5240, 7
        %v5242 = vsub.s32 %v5239, %v5241
        %v5243 = vrot.slane %v5235, %v5242
        %v5245 = vunpack.c.l.s4 1983009808
        %v5246 = vunpack.c.0.s8 %v5245
        %v5247 = vlaneseq
        %v5248 = vshrl.u32 %v5247, 7
        %v5249 = vsub.s32 %v5246, %v5248
        %v5250 = vrot.slane %v5236, %v5249
        %v5251 = vcombine.low %v5195, %v5211
        %v5252 = vcombine.high %v5195, %v5211
        %v5254 = vunpack.c.l.s4 1934713408
        %v5255 = vunpack.c.0.s8 %v5254
        %v5256 = vlaneseq
        %v5257 = vshrl.u32 %v5256, 7
        %v5258 = vsub.s32 %v5255, %v5257
        %v5259 = vrot.slane %v5251, %v5258
        %v5261 = vunpack.c.l.s4 1934713408
        %v5262 = vunpack.c.0.s8 %v5261
        %v5263 = vlaneseq
        %v5264 = vshrl.u32 %v5263, 7
        %v5265 = vsub.s32 %v5262, %v5264
        %v5266 = vrot.slane %v5252, %v5265
        %v5267 = vcombine.low %v5202, %v5218
        %v5268 = vcombine.high %v5202, %v5218
        %v5270 = vunpack.c.l.s4 1934713408
        %v5271 = vunpack.c.0.s8 %v5270
        %v5272 = vlaneseq
        %v5273 = vshrl.u32 %v5272, 7
        %v5274 = vsub.s32 %v5271, %v5273
        %v5275 = vrot.slane %v5267, %v5274
        %v5277 = vunpack.c.l.s4 1934713408
        %v5278 = vunpack.c.0.s8 %v5277
        %v5279 = vlaneseq
        %v5280 = vshrl.u32 %v5279, 7
        %v5281 = vsub.s32 %v5278, %v5280
        %v5282 = vrot.slane %v5268, %v5281
        %v5283 = vcombine.low %v5227, %v5243
        %v5284 = vcombine.high %v5227, %v5243
        %v5286 = vunpack.c.l.s4 1934713408
        %v5287 = vunpack.c.0.s8 %v5286
        %v5288 = vlaneseq
        %v5289 = vshrl.u32 %v5288, 7
        %v5290 = vsub.s32 %v5287, %v5289
        %v5291 = vrot.slane %v5283, %v5290
        %v5293 = vunpack.c.l.s4 1934713408
        %v5294 = vunpack.c.0.s8 %v5293
        %v5295 = vlaneseq
        %v5296 = vshrl.u32 %v5295, 7
        %v5297 = vsub.s32 %v5294, %v5296
        %v5298 = vrot.slane %v5284, %v5297
        %v5299 = vcombine.low %v5234, %v5250
        %v5300 = vcombine.high %v5234, %v5250
        %v5302 = vunpack.c.l.s4 1934713408
        %v5303 = vunpack.c.0.s8 %v5302
        %v5304 = vlaneseq
        %v5305 = vshrl.u32 %v5304, 7
        %v5306 = vsub.s32 %v5303, %v5305
        %v5307 = vrot.slane %v5299, %v5306
        %v5309 = vunpack.c.l.s4 1934713408
        %v5310 = vunpack.c.0.s8 %v5309
        %v5311 = vlaneseq
        %v5312 = vshrl.u32 %v5311, 7
        %v5313 = vsub.s32 %v5310, %v5312
        %v5314 = vrot.slane %v5300, %v5313
        %v5315 = vcombine.low %v5259, %v5291
        %v5316 = vcombine.high %v5259, %v5291
        %v5317 = vcombine.low %v5266, %v5298
        %v5318 = vcombine.high %v5266, %v5298
        %v5319 = vcombine.low %v5275, %v5307
        %v5320 = vcombine.high %v5275, %v5307
        %v5321 = vcombine.low %v5282, %v5314
        %v5322 = vcombine.high %v5282, %v5314
        %5324 = vrot.lane.b32.xlu0 %v5180, 8
        %v5325 = vpop.permute.xlu0 %5324
        %5328 = vrot.lane.b32.xlu0 %v5181, 16
        %v5329 = vpop.permute.xlu0 %5328
        %5332 = vrot.lane.b32.xlu0 %v5182, 24
        %v5333 = vpop.permute.xlu0 %5332
        %5336 = vrot.lane.b32.xlu0 %v5183, 32
        %v5337 = vpop.permute.xlu0 %5336
        %5340 = vrot.lane.b32.xlu0 %v5184, 40
        %v5341 = vpop.permute.xlu0 %5340
        %5344 = vrot.lane.b32.xlu0 %v5185, 48
        %v5345 = vpop.permute.xlu0 %5344
        %5348 = vrot.lane.b32.xlu0 %v5186, 56
        %v5349 = vpop.permute.xlu0 %5348
        %5352 = vrot.lane.b32.xlu0 %v5315, 64
        %v5353 = vpop.permute.xlu0 %5352
        %5356 = vrot.lane.b32.xlu0 %v5316, 72
        %v5357 = vpop.permute.xlu0 %5356
        %5360 = vrot.lane.b32.xlu0 %v5317, 80
        %v5361 = vpop.permute.xlu0 %5360
        %5364 = vrot.lane.b32.xlu0 %v5318, 88
        %v5365 = vpop.permute.xlu0 %5364
        %5368 = vrot.lane.b32.xlu0 %v5319, 96
        %v5369 = vpop.permute.xlu0 %5368
        %5372 = vrot.lane.b32.xlu0 %v5320, 104
        %v5373 = vpop.permute.xlu0 %5372
        %5376 = vrot.lane.b32.xlu0 %v5321, 112
        %v5377 = vpop.permute.xlu0 %5376
        %5380 = vrot.lane.b32.xlu0 %v5322, 120
        %v5381 = vpop.permute.xlu0 %5380
        %v5383 = vsel %vm3854, %v5179, %v5325
        %v5384 = vsel %vm2177, %v5383, %v5329
        %vm5385 = vcmask 195584
        %v5386 = vsel %vm5385, %v5384, %v5333
        %vm5387 = vcmask 261120
        %v5388 = vsel %vm5387, %v5386, %v5337
        %vm5389 = vcmask 326656
        %v5390 = vsel %vm5389, %v5388, %v5341
        %vm5391 = vcmask 392192
        %v5392 = vsel %vm5391, %v5390, %v5345
        %vm5393 = vcmask 457728
        %v5394 = vsel %vm5393, %v5392, %v5349
        %vm5395 = vcmask 523264
        %v5396 = vsel %vm5395, %v5394, %v5353
        %vm5397 = vcmask 588800
        %v5398 = vsel %vm5397, %v5396, %v5357
        %vm5399 = vcmask 654336
        %v5400 = vsel %vm5399, %v5398, %v5361
        %vm5401 = vcmask 719872
        %v5402 = vsel %vm5401, %v5400, %v5365
        %vm5403 = vcmask 785408
        %v5404 = vsel %vm5403, %v5402, %v5369
        %vm5405 = vcmask 850944
        %v5406 = vsel %vm5405, %v5404, %v5373
        %vm5407 = vcmask 916480
        %v5408 = vsel %vm5407, %v5406, %v5377
        %vm5409 = vcmask 982016
        %v5410 = vsel %vm5409, %v5408, %v5381
        %5411 = vst [vmem:[%s795] sm:$0xff] %v5410
        %s5412 = sand.u32 %s419, 1
        %s5413 = scalar_lea.sflag [#allocation4], %s5412
        %s5414 = sand.u32 %s419, 1
        %s5415 = smul.addr %s5414, 8
        %s5416 = scalar_lea.vmem [#allocation29], %s5415
        // Predicated region
        $region157: #{tpu_custom_call.1} parent=87 // pred_check
          %p5417 = pneg %p429
        $region158: #{tpu_custom_call.1} parent=87 // pred_check_branch
          %5419 = sbr.rel (%p5417) target = $region160
        $region159: #{tpu_custom_call.1} parent=87 // pred_region
          %s5421 = ssub.s32 128, 128
          %5422 = vsyncadd %s5413, %s5421
          %s5423 = smul.addr %s44, 128
          %s5424 = scalar_lea.hbm %s17, %s5423
          %s5426 = sshll.u32 %s5416, 4
          %s5427 = int_to_ptr.vmem [resolvable:$true] %s5426
          %5429 = dma.vmem_to_hbm [thread:$0]  %s5427, 128, %s5424, %s5413
        $region160: #{tpu_custom_call.1} parent=87 // pred_fallthru
          _
      $region88: #{tpu_custom_call.1} parent=5 // pred_fallthru
        _
      %p5430 = scmp.le.s32.totalorder 2, %s39
      // Predicated region
      $region161: #{tpu_custom_call.1} parent=5 // pred_check
        %p5431 = pneg %p5430
      $region162: #{tpu_custom_call.1} parent=5 // pred_check_branch
        %5433 = sbr.rel (%p5431) target = $region164
      $region163: #{tpu_custom_call.1} parent=5 // pred_region
        %s5434 = ssub.s32 %s39, 2
        // Predicated region
        $region165: #{tpu_custom_call.1} parent=163 // pred_check
          %p5435 = pneg %p435
        $region166: #{tpu_custom_call.1} parent=163 // pred_check_branch
          %5437 = sbr.rel (%p5435) target = $region168
        $region167: #{tpu_custom_call.1} parent=163 // pred_region
          %s5438 = sand.u32 %s420, 1
          %s5439 = scalar_lea.sflag [#allocation4], %s5438
          %s5440 = sand.u32 %s420, 1
          %s5441 = smul.addr %s5440, 8
          %s5442 = scalar_lea.vmem [#allocation29], %s5441
          %5443 = dma.done %s5439, 128
        $region168: #{tpu_custom_call.1} parent=163 // pred_fallthru
          _
      $region164: #{tpu_custom_call.1} parent=5 // pred_fallthru
        _
    $region6: #{tpu_custom_call.1} parent=1 // loop_footer
      %s43 = sadd.s32 1, %s39
    $region7: #{tpu_custom_call.1} parent=1 // loop_footer_branch
      %38 = sbr.rel target = $region3
    $region8: #{tpu_custom_call.1} parent=1 // loop_exit
      _
    %5444 = vsyncpa [#allocation3], 1
    %s5445 = scalar_lea.sflag [#allocation3], 1
    %5446 = vsyncpa %s5445, 1
    %5447 = vsyncpa [#allocation6], 1
    %s5448 = scalar_lea.sflag [#allocation6], 1
    %5449 = vsyncpa %s5448, 1
    %5450 = vsyncpa [#allocation9], 1
    %5451 = vsyncpa [#allocation12], 1
    %5452 = vsyncpa [#allocation15], 1
    %5453 = vsyncpa [#allocation18], 1
    %5454 = vsyncpa [#allocation21], 1
    %5455 = vsyncpa [#allocation24], 1
    %5456 = vsyncpa [#allocation27], 1
    %5457 = vsyncpa [#allocation4], 1
    %s5458 = scalar_lea.sflag [#allocation4], 1
    %5459 = vsyncpa %s5458, 1

</llo_original>
